<compile_context>
chip_gen: v7x
topology: tpu7x:2x2x1
jax: 0.10.0
libtpu: 0.0.40
codegen_flags: <defaults>
</compile_context>

<pallas_src>
import jax
import jax.numpy as jnp
from jax.experimental import pallas as pl
from jax.experimental.pallas import tpu as pltpu


VGG_CFG = [64, "M", 128, "M", 256, "M", 512]   # 8x8 input -> 1x1x512 features
NUM_CLASSES = 10
IN_CHANNELS = 3
IN_SIZE = 8
DOUT_PAD = 128                                  # lane-dense classifier output
B_TILE = 128                                    # images per grid step (256 on v6e)


# ----------------------------------------------------------------------------
# In-kernel helpers (activations are in spatial-major (H, W, bt, C) layout)
# ----------------------------------------------------------------------------
def _maxpool2x2(y):
    """2x2/2 max-pool over the two leading (spatial) dims -- no sublane shuffles."""
    H, W, bt, C = y.shape
    y = jnp.max(y.reshape(H // 2, 2, W, bt, C), axis=1)
    return jnp.max(y.reshape(H // 2, W // 2, 2, bt, C), axis=2)


def _conv3x3_relu_taps(pad_ref, w_ref, b_ref, H, W, Cin, Cout, bt):
    """3x3 'same' conv as 9 accumulated MXU matmuls over the zero-padded
    (H+2, W+2, bt, Cin) scratch, + bias + ReLU (f32). Weight rows are the
    HWIO-flattened (9*Cin, Cout) layout, so each tap slice is sublane-aligned."""
    acc = jnp.zeros((H * W * bt, Cout), jnp.float32)
    for kh in range(3):                                   # static unroll, 9 taps
        for kw in range(3):
            k0 = (kh * 3 + kw) * Cin
            patch = pad_ref[kh:kh + H, kw:kw + W, :, :].reshape(H * W * bt, Cin)
            acc = acc + jnp.dot(patch, w_ref[k0:k0 + Cin, :],
                                preferred_element_type=jnp.float32)
    y = jnp.maximum(acc + b_ref[...], 0.0)
    return y.reshape(H, W, bt, Cout)


# ----------------------------------------------------------------------------
# Fused kernel: one grid step = one batch tile ("parallel" axis, shardable on v7x)
# ----------------------------------------------------------------------------
def _vgg_fused_kernel(xcol_ref,
                      w1_ref, b1_ref, w2_ref, b2_ref,
                      w3_ref, b3_ref, w4_ref, b4_ref,
                      fcw_ref, fcb_ref,
                      out_ref,
                      pad2_ref, pad3_ref):
    bt = out_ref.shape[0]

    # ---- layer 1: 3 -> 64 (im2col'd in wrapper), ReLU, pool 8x8 -> 4x4
    a1 = jnp.dot(xcol_ref[...].reshape(IN_SIZE * IN_SIZE * bt, 9 * IN_CHANNELS),
                 w1_ref[...], preferred_element_type=jnp.float32)
    y1 = jnp.maximum(a1 + b1_ref[...], 0.0).reshape(IN_SIZE, IN_SIZE, bt, 64)
    y1 = _maxpool2x2(y1)                                   # (4,4,bt,64) f32

    # ---- layer 2: 64 -> 128, ReLU, pool 4x4 -> 2x2
    # Per-step zero of the padded scratch (NOT hoisted under pl.when(pid==0):
    # that would add a cross-step scratch dependency, which is unsafe when the
    # batch axis is "parallel"-sharded across TensorCores; the dense fill below
    # is cheap in this layout and hides under the conv matmuls).
    pad2_ref[...] = jnp.zeros(pad2_ref.shape, pad2_ref.dtype)
    pad2_ref[1:5, 1:5, :, :] = y1.astype(jnp.bfloat16)
    y2 = _conv3x3_relu_taps(pad2_ref, w2_ref, b2_ref, 4, 4, 64, 128, bt)
    y2 = _maxpool2x2(y2)                                   # (2,2,bt,128) f32

    # ---- layer 3: 128 -> 256, ReLU, pool 2x2 -> 1x1
    pad3_ref[...] = jnp.zeros(pad3_ref.shape, pad3_ref.dtype)
    pad3_ref[1:3, 1:3, :, :] = y2.astype(jnp.bfloat16)
    y3 = _conv3x3_relu_taps(pad3_ref, w3_ref, b3_ref, 2, 2, 128, 256, bt)
    y3 = _maxpool2x2(y3)                                   # (1,1,bt,256) f32

    # ---- layer 4: 256 -> 512 on a 1x1 map: only the centre tap of the 3x3 kernel
    # sees real data (all other taps hit the zero pad), so it is a single matmul
    # against weight rows [4*256, 5*256).
    f3 = y3.reshape(bt, 256).astype(jnp.bfloat16)
    a4 = jnp.dot(f3, w4_ref[4 * 256:5 * 256, :], preferred_element_type=jnp.float32)
    y4 = jnp.maximum(a4 + b4_ref[...], 0.0)                # (bt,512) f32

    # ---- classifier: flatten (1x1x512) -> Linear(512, num_classes), lane-padded
    logits = jnp.dot(y4.astype(jnp.bfloat16), fcw_ref[...],
                     preferred_element_type=jnp.float32) + fcb_ref[...]
    out_ref[...] = logits                                  # (bt, DOUT_PAD) f32


# ----------------------------------------------------------------------------
# Parameters
# ----------------------------------------------------------------------------
def init_params(key, cfg=VGG_CFG, in_ch=IN_CHANNELS, num_classes=NUM_CLASSES):
    """Raw f32 parameters (conv HWIO, biases (1,Cout), fc (512,num_classes))."""
    params = {"convs": []}
    c = in_ch
    for v in cfg:
        if v == "M":
            continue
        key, kw_, kb_ = jax.random.split(key, 3)
        w = 0.05 * jax.random.normal(kw_, (3, 3, c, v), jnp.float32)  # HWIO
        b = 0.05 * jax.random.normal(kb_, (1, v), jnp.float32)
        params["convs"].append((w, b))
        c = v
    key, kw_, kb_ = jax.random.split(key, 3)
    params["fc_w"] = 0.05 * jax.random.normal(kw_, (512, num_classes), jnp.float32)
    params["fc_b"] = 0.05 * jax.random.normal(kb_, (1, num_classes), jnp.float32)
    return params


def prepare_kernel_params(params):
    """Kernel layout: conv weights flattened to (9*Cin, Cout) bf16, f32 biases,
    classifier weight/bias lane-padded to 128 columns (weight in bf16)."""
    kp = []
    for w, b in params["convs"]:
        kh, kw, cin, cout = w.shape
        kp.append(jnp.reshape(w, (kh * kw * cin, cout)).astype(jnp.bfloat16))
        kp.append(b.astype(jnp.float32))
    nc = params["fc_w"].shape[1]
    fcw = jnp.zeros((512, DOUT_PAD), jnp.float32).at[:, :nc].set(params["fc_w"])
    fcb = jnp.zeros((1, DOUT_PAD), jnp.float32).at[:, :nc].set(params["fc_b"])
    kp.append(fcw.astype(jnp.bfloat16))
    kp.append(fcb)
    return tuple(kp)


# ----------------------------------------------------------------------------
# Forward
# ----------------------------------------------------------------------------
@jax.jit
def vgg_forward(kparams, x_nchw):
    B = x_nchw.shape[0]
    bt = min(B_TILE, B)                        # batch tile per grid step
    n_tiles = -(-B // bt)
    Bp = n_tiles * bt

    # NCHW -> NHWC, bf16 (halves input DMA), pad batch to a multiple of the tile.
    x = jnp.transpose(x_nchw, (0, 2, 3, 1)).astype(jnp.bfloat16)
    if Bp != B:
        x = jnp.pad(x, ((0, Bp - B), (0, 0), (0, 0), (0, 0)))

    # Layer-1 im2col (layout plumbing only): (Bp,8,8,3) -> (64, Bp, 27) in
    # spatial-major / batch-sublane / (tap*channel)-lane order, so the kernel's
    # first conv is a single aligned MXU matmul with no in-kernel staging stores.
    xp = jnp.pad(x, ((0, 0), (1, 1), (1, 1), (0, 0)))
    taps = [xp[:, kh:kh + IN_SIZE, kw:kw + IN_SIZE, :]
            for kh in range(3) for kw in range(3)]
    x_col = jnp.concatenate(taps, axis=-1)                          # (Bp,8,8,27)
    x_col = jnp.transpose(x_col, (1, 2, 0, 3)).reshape(
        IN_SIZE * IN_SIZE, Bp, 9 * IN_CHANNELS)

    def _resident(a):          # whole array resident in VMEM, constant index map
        nd = a.ndim
        return pl.BlockSpec(a.shape, lambda b, _nd=nd: (0,) * _nd)

    in_specs = [pl.BlockSpec((IN_SIZE * IN_SIZE, bt, 9 * IN_CHANNELS),
                             lambda b: (0, b, 0))]
    in_specs += [_resident(a) for a in kparams]

    scratch_shapes = [
        pltpu.VMEM((6, 6, bt, 64), jnp.bfloat16),    # zero-padded layer-2 input
        pltpu.VMEM((4, 4, bt, 128), jnp.bfloat16),   # zero-padded layer-3 input
    ]

    flops = 2 * Bp * (64 * 27 * 64            # layer 1
                      + 16 * 9 * 64 * 128     # layer 2
                      + 4 * 9 * 128 * 256     # layer 3
                      + 256 * 512             # layer 4 (centre tap only)
                      + 512 * NUM_CLASSES)    # classifier
    bytes_accessed = int(x_col.size * x_col.dtype.itemsize
                         + sum(a.size * a.dtype.itemsize for a in kparams)
                         + Bp * DOUT_PAD * 4)

    out = pl.pallas_call(
        _vgg_fused_kernel,
        out_shape=jax.ShapeDtypeStruct((Bp, DOUT_PAD), jnp.float32),
        grid_spec=pltpu.PrefetchScalarGridSpec(
            num_scalar_prefetch=0,
            grid=(n_tiles,),
            in_specs=in_specs,
            out_specs=pl.BlockSpec((bt, DOUT_PAD), lambda b: (b, 0)),
            scratch_shapes=scratch_shapes),
        compiler_params=pltpu.CompilerParams(
            dimension_semantics=("parallel",),           # batch tiles shard on v7x
            vmem_limit_bytes=48 * 1024 * 1024),          # < 64 MiB (v7x physical)
        cost_estimate=pl.CostEstimate(flops=flops, transcendentals=0,
                                      bytes_accessed=bytes_accessed),
    )(x_col, *kparams)

    return out[:B, :NUM_CLASSES]


# ----------------------------------------------------------------------------
# Pure-JAX reference (same bf16-operand / f32-accumulate quantization points)
# ----------------------------------------------------------------------------
def vgg_forward_ref(params, x_nchw, cfg=VGG_CFG):
    x = x_nchw.astype(jnp.float32)
    ci = 0
    for v in cfg:
        if v == "M":
            x = -jax.lax.reduce_window(-x, jnp.inf, jax.lax.min,
                                       (1, 1, 2, 2), (1, 1, 2, 2), "VALID")
        else:
            w, b = params["convs"][ci]
            w_oihw = jnp.transpose(w, (3, 2, 0, 1)).astype(jnp.bfloat16)
            x = jax.lax.conv_general_dilated(
                x.astype(jnp.bfloat16), w_oihw, window_strides=(1, 1),
                padding=((1, 1), (1, 1)),
                dimension_numbers=("NCHW", "OIHW", "NCHW"),
                preferred_element_type=jnp.float32)
            x = jnp.maximum(x + b[0][None, :, None, None], 0.0)
            ci += 1
    x = x.reshape(x.shape[0], -1)
    return (jnp.dot(x.astype(jnp.bfloat16),
                    params["fc_w"].astype(jnp.bfloat16),
                    preferred_element_type=jnp.float32) + params["fc_b"])


if __name__ == "__main__":
    key = jax.random.PRNGKey(0)
    kx, kp = jax.random.split(key)
    x = jax.random.normal(kx, (2, IN_CHANNELS, IN_SIZE, IN_SIZE), jnp.float32)  # NCHW
    params = init_params(kp)
    kparams = prepare_kernel_params(params)

    out = jax.block_until_ready(vgg_forward(kparams, x))
    assert out.shape == (2, NUM_CLASSES), out.shape

    ref = jax.block_until_ready(vgg_forward_ref(params, x))
    assert jnp.allclose(out, ref, atol=2e-2, rtol=2e-2), (out, ref)

    print("KERNEL_OK")
</pallas_src>

<mosaic_0001>
module attributes {stable_mosaic.version = 11 : i64} {
  func.func @_vgg_fused_kernel(%arg0: i32, %arg1: memref<64x2x27xbf16, #tpu.memory_space<vmem>>, %arg2: memref<27x64xbf16, #tpu.memory_space<vmem>>, %arg3: memref<1x64xf32, #tpu.memory_space<vmem>>, %arg4: memref<576x128xbf16, #tpu.memory_space<vmem>>, %arg5: memref<1x128xf32, #tpu.memory_space<vmem>>, %arg6: memref<1152x256xbf16, #tpu.memory_space<vmem>>, %arg7: memref<1x256xf32, #tpu.memory_space<vmem>>, %arg8: memref<2304x512xbf16, #tpu.memory_space<vmem>>, %arg9: memref<1x512xf32, #tpu.memory_space<vmem>>, %arg10: memref<512x128xbf16, #tpu.memory_space<vmem>>, %arg11: memref<1x128xf32, #tpu.memory_space<vmem>>, %arg12: memref<2x128xf32, #tpu.memory_space<vmem>>, %arg13: memref<6x6x2x64xbf16, #tpu.memory_space<vmem>>, %arg14: memref<4x4x2x128xbf16, #tpu.memory_space<vmem>>) attributes {dimension_semantics = [#tpu.dimension_semantics<parallel>], iteration_bounds = array<i64: 1>, scalar_prefetch = 0 : i64, scratch_operands = 2 : i64, tpu.core_type = #tpu.core_type<tc>, window_params = [{transform_indices = @transform_0, window_bounds = array<i64: 64, 2, 27>}, {pipeline_mode = #tpu.pipeline_mode<synchronous>, transform_indices = @transform_1, window_bounds = array<i64: 27, 64>}, {pipeline_mode = #tpu.pipeline_mode<synchronous>, transform_indices = @transform_2, window_bounds = array<i64: 1, 64>}, {pipeline_mode = #tpu.pipeline_mode<synchronous>, transform_indices = @transform_3, window_bounds = array<i64: 576, 128>}, {pipeline_mode = #tpu.pipeline_mode<synchronous>, transform_indices = @transform_4, window_bounds = array<i64: 1, 128>}, {pipeline_mode = #tpu.pipeline_mode<synchronous>, transform_indices = @transform_5, window_bounds = array<i64: 1152, 256>}, {pipeline_mode = #tpu.pipeline_mode<synchronous>, transform_indices = @transform_6, window_bounds = array<i64: 1, 256>}, {pipeline_mode = #tpu.pipeline_mode<synchronous>, transform_indices = @transform_7, window_bounds = array<i64: 2304, 512>}, {pipeline_mode = #tpu.pipeline_mode<synchronous>, transform_indices = @transform_8, window_bounds = array<i64: 1, 512>}, {pipeline_mode = #tpu.pipeline_mode<synchronous>, transform_indices = @transform_9, window_bounds = array<i64: 512, 128>}, {pipeline_mode = #tpu.pipeline_mode<synchronous>, transform_indices = @transform_10, window_bounds = array<i64: 1, 128>}, {transform_indices = @transform_11, window_bounds = array<i64: 2, 128>}]} {
    %c0 = arith.constant 0 : index
    %c0_0 = arith.constant 0 : index
    %c0_1 = arith.constant 0 : index
    %0 = vector.load %arg1[%c0, %c0_0, %c0_1] : memref<64x2x27xbf16, #tpu.memory_space<vmem>>, vector<64x2x27xbf16>
    %1 = vector.shape_cast %0 : vector<64x2x27xbf16> to vector<128x27xbf16>
    %c0_2 = arith.constant 0 : index
    %c0_3 = arith.constant 0 : index
    %2 = vector.load %arg2[%c0_2, %c0_3] : memref<27x64xbf16, #tpu.memory_space<vmem>>, vector<27x64xbf16>
    %cst = arith.constant dense<0.000000e+00> : vector<128x64xf32>
    %3 = tpu.matmul %1, %2, %cst {dimension_numbers = #tpu.dot_dimension_numbers<[1], [0], [0], [1], [0, 0, 1, 1], [], []>} : vector<128x27xbf16>, vector<27x64xbf16>, vector<128x64xf32> -> vector<128x64xf32>
    %c0_4 = arith.constant 0 : index
    %c0_5 = arith.constant 0 : index
    %4 = vector.load %arg3[%c0_4, %c0_5] : memref<1x64xf32, #tpu.memory_space<vmem>>, vector<1x64xf32>
    %5 = vector.broadcast %4 : vector<1x64xf32> to vector<128x64xf32>
    %6 = arith.addf %3, %5 : vector<128x64xf32>
    %cst_6 = arith.constant 0.000000e+00 : f32
    %7 = vector.broadcast %cst_6 : f32 to vector<128x64xf32>
    %8 = arith.maximumf %6, %7 : vector<128x64xf32>
    %9 = vector.shape_cast %8 : vector<128x64xf32> to vector<8x8x2x64xf32>
    %10 = vector.shape_cast %9 : vector<8x8x2x64xf32> to vector<4x2x8x2x64xf32>
    %cst_7 = arith.constant dense<0xFF800000> : vector<4x8x2x64xf32>
    %11 = vector.multi_reduction <maximumf>, %10, %cst_7 [1] : vector<4x2x8x2x64xf32> to vector<4x8x2x64xf32>
    %12 = vector.shape_cast %11 : vector<4x8x2x64xf32> to vector<4x4x2x2x64xf32>
    %cst_8 = arith.constant dense<0xFF800000> : vector<4x4x2x64xf32>
    %13 = vector.multi_reduction <maximumf>, %12, %cst_8 [2] : vector<4x4x2x2x64xf32> to vector<4x4x2x64xf32>
    %cst_9 = arith.constant 0.000000e+00 : bf16
    %14 = vector.broadcast %cst_9 : bf16 to vector<6x6x2x64xbf16>
    %c0_10 = arith.constant 0 : index
    %c0_11 = arith.constant 0 : index
    %c0_12 = arith.constant 0 : index
    %c0_13 = arith.constant 0 : index
    %15 = vector.load %arg13[%c0_10, %c0_11, %c0_12, %c0_13] : memref<6x6x2x64xbf16, #tpu.memory_space<vmem>>, vector<6x6x2x64xbf16>
    tpu.vector_store %arg13[%c0_10, %c0_11, %c0_12, %c0_13], %14 {strides = array<i32>} : memref<6x6x2x64xbf16, #tpu.memory_space<vmem>>, vector<6x6x2x64xbf16>,
    %16 = arith.truncf %13 : vector<4x4x2x64xf32> to vector<4x4x2x64xbf16>
    %c1 = arith.constant 1 : index
    %c1_14 = arith.constant 1 : index
    %c0_15 = arith.constant 0 : index
    %c0_16 = arith.constant 0 : index
    %17 = vector.load %arg13[%c1, %c1_14, %c0_15, %c0_16] : memref<6x6x2x64xbf16, #tpu.memory_space<vmem>>, vector<4x4x2x64xbf16>
    tpu.vector_store %arg13[%c1, %c1_14, %c0_15, %c0_16], %16 {strides = array<i32>} : memref<6x6x2x64xbf16, #tpu.memory_space<vmem>>, vector<4x4x2x64xbf16>,
    %cst_17 = arith.constant 0.000000e+00 : f32
    %18 = vector.broadcast %cst_17 : f32 to vector<32x128xf32>
    %c0_18 = arith.constant 0 : index
    %c0_19 = arith.constant 0 : index
    %c0_20 = arith.constant 0 : index
    %c0_21 = arith.constant 0 : index
    %19 = vector.load %arg13[%c0_18, %c0_19, %c0_20, %c0_21] : memref<6x6x2x64xbf16, #tpu.memory_space<vmem>>, vector<4x4x2x64xbf16>
    %20 = vector.shape_cast %19 : vector<4x4x2x64xbf16> to vector<32x64xbf16>
    %c0_22 = arith.constant 0 : index
    %c0_23 = arith.constant 0 : index
    %21 = vector.load %arg4[%c0_22, %c0_23] : memref<576x128xbf16, #tpu.memory_space<vmem>>, vector<64x128xbf16>
    %cst_24 = arith.constant dense<0.000000e+00> : vector<32x128xf32>
    %22 = tpu.matmul %20, %21, %cst_24 {dimension_numbers = #tpu.dot_dimension_numbers<[1], [0], [0], [1], [0, 0, 1, 1], [], []>} : vector<32x64xbf16>, vector<64x128xbf16>, vector<32x128xf32> -> vector<32x128xf32>
    %23 = arith.addf %18, %22 : vector<32x128xf32>
    %c0_25 = arith.constant 0 : index
    %c1_26 = arith.constant 1 : index
    %c0_27 = arith.constant 0 : index
    %c0_28 = arith.constant 0 : index
    %24 = vector.load %arg13[%c0_25, %c1_26, %c0_27, %c0_28] : memref<6x6x2x64xbf16, #tpu.memory_space<vmem>>, vector<4x4x2x64xbf16>
    %25 = vector.shape_cast %24 : vector<4x4x2x64xbf16> to vector<32x64xbf16>
    %c64 = arith.constant 64 : index
    %c0_29 = arith.constant 0 : index
    %26 = vector.load %arg4[%c64, %c0_29] : memref<576x128xbf16, #tpu.memory_space<vmem>>, vector<64x128xbf16>
    %cst_30 = arith.constant dense<0.000000e+00> : vector<32x128xf32>
    %27 = tpu.matmul %25, %26, %cst_30 {dimension_numbers = #tpu.dot_dimension_numbers<[1], [0], [0], [1], [0, 0, 1, 1], [], []>} : vector<32x64xbf16>, vector<64x128xbf16>, vector<32x128xf32> -> vector<32x128xf32>
    %28 = arith.addf %23, %27 : vector<32x128xf32>
    %c0_31 = arith.constant 0 : index
    %c2 = arith.constant 2 : index
    %c0_32 = arith.constant 0 : index
    %c0_33 = arith.constant 0 : index
    %29 = vector.load %arg13[%c0_31, %c2, %c0_32, %c0_33] : memref<6x6x2x64xbf16, #tpu.memory_space<vmem>>, vector<4x4x2x64xbf16>
    %30 = vector.shape_cast %29 : vector<4x4x2x64xbf16> to vector<32x64xbf16>
    %c128 = arith.constant 128 : index
    %c0_34 = arith.constant 0 : index
    %31 = vector.load %arg4[%c128, %c0_34] : memref<576x128xbf16, #tpu.memory_space<vmem>>, vector<64x128xbf16>
    %cst_35 = arith.constant dense<0.000000e+00> : vector<32x128xf32>
    %32 = tpu.matmul %30, %31, %cst_35 {dimension_numbers = #tpu.dot_dimension_numbers<[1], [0], [0], [1], [0, 0, 1, 1], [], []>} : vector<32x64xbf16>, vector<64x128xbf16>, vector<32x128xf32> -> vector<32x128xf32>
    %33 = arith.addf %28, %32 : vector<32x128xf32>
    %c1_36 = arith.constant 1 : index
    %c0_37 = arith.constant 0 : index
    %c0_38 = arith.constant 0 : index
    %c0_39 = arith.constant 0 : index
    %34 = vector.load %arg13[%c1_36, %c0_37, %c0_38, %c0_39] : memref<6x6x2x64xbf16, #tpu.memory_space<vmem>>, vector<4x4x2x64xbf16>
    %35 = vector.shape_cast %34 : vector<4x4x2x64xbf16> to vector<32x64xbf16>
    %c192 = arith.constant 192 : index
    %c0_40 = arith.constant 0 : index
    %36 = vector.load %arg4[%c192, %c0_40] : memref<576x128xbf16, #tpu.memory_space<vmem>>, vector<64x128xbf16>
    %cst_41 = arith.constant dense<0.000000e+00> : vector<32x128xf32>
    %37 = tpu.matmul %35, %36, %cst_41 {dimension_numbers = #tpu.dot_dimension_numbers<[1], [0], [0], [1], [0, 0, 1, 1], [], []>} : vector<32x64xbf16>, vector<64x128xbf16>, vector<32x128xf32> -> vector<32x128xf32>
    %38 = arith.addf %33, %37 : vector<32x128xf32>
    %c1_42 = arith.constant 1 : index
    %c1_43 = arith.constant 1 : index
    %c0_44 = arith.constant 0 : index
    %c0_45 = arith.constant 0 : index
    %39 = vector.load %arg13[%c1_42, %c1_43, %c0_44, %c0_45] : memref<6x6x2x64xbf16, #tpu.memory_space<vmem>>, vector<4x4x2x64xbf16>
    %40 = vector.shape_cast %39 : vector<4x4x2x64xbf16> to vector<32x64xbf16>
    %c256 = arith.constant 256 : index
    %c0_46 = arith.constant 0 : index
    %41 = vector.load %arg4[%c256, %c0_46] : memref<576x128xbf16, #tpu.memory_space<vmem>>, vector<64x128xbf16>
    %cst_47 = arith.constant dense<0.000000e+00> : vector<32x128xf32>
    %42 = tpu.matmul %40, %41, %cst_47 {dimension_numbers = #tpu.dot_dimension_numbers<[1], [0], [0], [1], [0, 0, 1, 1], [], []>} : vector<32x64xbf16>, vector<64x128xbf16>, vector<32x128xf32> -> vector<32x128xf32>
    %43 = arith.addf %38, %42 : vector<32x128xf32>
    %c1_48 = arith.constant 1 : index
    %c2_49 = arith.constant 2 : index
    %c0_50 = arith.constant 0 : index
    %c0_51 = arith.constant 0 : index
    %44 = vector.load %arg13[%c1_48, %c2_49, %c0_50, %c0_51] : memref<6x6x2x64xbf16, #tpu.memory_space<vmem>>, vector<4x4x2x64xbf16>
    %45 = vector.shape_cast %44 : vector<4x4x2x64xbf16> to vector<32x64xbf16>
    %c320 = arith.constant 320 : index
    %c0_52 = arith.constant 0 : index
    %46 = vector.load %arg4[%c320, %c0_52] : memref<576x128xbf16, #tpu.memory_space<vmem>>, vector<64x128xbf16>
    %cst_53 = arith.constant dense<0.000000e+00> : vector<32x128xf32>
    %47 = tpu.matmul %45, %46, %cst_53 {dimension_numbers = #tpu.dot_dimension_numbers<[1], [0], [0], [1], [0, 0, 1, 1], [], []>} : vector<32x64xbf16>, vector<64x128xbf16>, vector<32x128xf32> -> vector<32x128xf32>
    %48 = arith.addf %43, %47 : vector<32x128xf32>
    %c2_54 = arith.constant 2 : index
    %c0_55 = arith.constant 0 : index
    %c0_56 = arith.constant 0 : index
    %c0_57 = arith.constant 0 : index
    %49 = vector.load %arg13[%c2_54, %c0_55, %c0_56, %c0_57] : memref<6x6x2x64xbf16, #tpu.memory_space<vmem>>, vector<4x4x2x64xbf16>
    %50 = vector.shape_cast %49 : vector<4x4x2x64xbf16> to vector<32x64xbf16>
    %c384 = arith.constant 384 : index
    %c0_58 = arith.constant 0 : index
    %51 = vector.load %arg4[%c384, %c0_58] : memref<576x128xbf16, #tpu.memory_space<vmem>>, vector<64x128xbf16>
    %cst_59 = arith.constant dense<0.000000e+00> : vector<32x128xf32>
    %52 = tpu.matmul %50, %51, %cst_59 {dimension_numbers = #tpu.dot_dimension_numbers<[1], [0], [0], [1], [0, 0, 1, 1], [], []>} : vector<32x64xbf16>, vector<64x128xbf16>, vector<32x128xf32> -> vector<32x128xf32>
    %53 = arith.addf %48, %52 : vector<32x128xf32>
    %c2_60 = arith.constant 2 : index
    %c1_61 = arith.constant 1 : index
    %c0_62 = arith.constant 0 : index
    %c0_63 = arith.constant 0 : index
    %54 = vector.load %arg13[%c2_60, %c1_61, %c0_62, %c0_63] : memref<6x6x2x64xbf16, #tpu.memory_space<vmem>>, vector<4x4x2x64xbf16>
    %55 = vector.shape_cast %54 : vector<4x4x2x64xbf16> to vector<32x64xbf16>
    %c448 = arith.constant 448 : index
    %c0_64 = arith.constant 0 : index
    %56 = vector.load %arg4[%c448, %c0_64] : memref<576x128xbf16, #tpu.memory_space<vmem>>, vector<64x128xbf16>
    %cst_65 = arith.constant dense<0.000000e+00> : vector<32x128xf32>
    %57 = tpu.matmul %55, %56, %cst_65 {dimension_numbers = #tpu.dot_dimension_numbers<[1], [0], [0], [1], [0, 0, 1, 1], [], []>} : vector<32x64xbf16>, vector<64x128xbf16>, vector<32x128xf32> -> vector<32x128xf32>
    %58 = arith.addf %53, %57 : vector<32x128xf32>
    %c2_66 = arith.constant 2 : index
    %c2_67 = arith.constant 2 : index
    %c0_68 = arith.constant 0 : index
    %c0_69 = arith.constant 0 : index
    %59 = vector.load %arg13[%c2_66, %c2_67, %c0_68, %c0_69] : memref<6x6x2x64xbf16, #tpu.memory_space<vmem>>, vector<4x4x2x64xbf16>
    %60 = vector.shape_cast %59 : vector<4x4x2x64xbf16> to vector<32x64xbf16>
    %c512 = arith.constant 512 : index
    %c0_70 = arith.constant 0 : index
    %61 = vector.load %arg4[%c512, %c0_70] : memref<576x128xbf16, #tpu.memory_space<vmem>>, vector<64x128xbf16>
    %cst_71 = arith.constant dense<0.000000e+00> : vector<32x128xf32>
    %62 = tpu.matmul %60, %61, %cst_71 {dimension_numbers = #tpu.dot_dimension_numbers<[1], [0], [0], [1], [0, 0, 1, 1], [], []>} : vector<32x64xbf16>, vector<64x128xbf16>, vector<32x128xf32> -> vector<32x128xf32>
    %63 = arith.addf %58, %62 : vector<32x128xf32>
    %c0_72 = arith.constant 0 : index
    %c0_73 = arith.constant 0 : index
    %64 = vector.load %arg5[%c0_72, %c0_73] : memref<1x128xf32, #tpu.memory_space<vmem>>, vector<1x128xf32>
    %65 = vector.broadcast %64 : vector<1x128xf32> to vector<32x128xf32>
    %66 = arith.addf %63, %65 : vector<32x128xf32>
    %cst_74 = arith.constant 0.000000e+00 : f32
    %67 = vector.broadcast %cst_74 : f32 to vector<32x128xf32>
    %68 = arith.maximumf %66, %67 : vector<32x128xf32>
    %69 = vector.shape_cast %68 : vector<32x128xf32> to vector<4x4x2x128xf32>
    %70 = vector.shape_cast %69 : vector<4x4x2x128xf32> to vector<2x2x4x2x128xf32>
    %cst_75 = arith.constant dense<0xFF800000> : vector<2x4x2x128xf32>
    %71 = vector.multi_reduction <maximumf>, %70, %cst_75 [1] : vector<2x2x4x2x128xf32> to vector<2x4x2x128xf32>
    %72 = vector.shape_cast %71 : vector<2x4x2x128xf32> to vector<2x2x2x2x128xf32>
    %cst_76 = arith.constant dense<0xFF800000> : vector<2x2x2x128xf32>
    %73 = vector.multi_reduction <maximumf>, %72, %cst_76 [2] : vector<2x2x2x2x128xf32> to vector<2x2x2x128xf32>
    %cst_77 = arith.constant 0.000000e+00 : bf16
    %74 = vector.broadcast %cst_77 : bf16 to vector<4x4x2x128xbf16>
    %c0_78 = arith.constant 0 : index
    %c0_79 = arith.constant 0 : index
    %c0_80 = arith.constant 0 : index
    %c0_81 = arith.constant 0 : index
    %75 = vector.load %arg14[%c0_78, %c0_79, %c0_80, %c0_81] : memref<4x4x2x128xbf16, #tpu.memory_space<vmem>>, vector<4x4x2x128xbf16>
    tpu.vector_store %arg14[%c0_78, %c0_79, %c0_80, %c0_81], %74 {strides = array<i32>} : memref<4x4x2x128xbf16, #tpu.memory_space<vmem>>, vector<4x4x2x128xbf16>,
    %76 = arith.truncf %73 : vector<2x2x2x128xf32> to vector<2x2x2x128xbf16>
    %c1_82 = arith.constant 1 : index
    %c1_83 = arith.constant 1 : index
    %c0_84 = arith.constant 0 : index
    %c0_85 = arith.constant 0 : index
    %77 = vector.load %arg14[%c1_82, %c1_83, %c0_84, %c0_85] : memref<4x4x2x128xbf16, #tpu.memory_space<vmem>>, vector<2x2x2x128xbf16>
    tpu.vector_store %arg14[%c1_82, %c1_83, %c0_84, %c0_85], %76 {strides = array<i32>} : memref<4x4x2x128xbf16, #tpu.memory_space<vmem>>, vector<2x2x2x128xbf16>,
    %cst_86 = arith.constant 0.000000e+00 : f32
    %78 = vector.broadcast %cst_86 : f32 to vector<8x256xf32>
    %c0_87 = arith.constant 0 : index
    %c0_88 = arith.constant 0 : index
    %c0_89 = arith.constant 0 : index
    %c0_90 = arith.constant 0 : index
    %79 = vector.load %arg14[%c0_87, %c0_88, %c0_89, %c0_90] : memref<4x4x2x128xbf16, #tpu.memory_space<vmem>>, vector<2x2x2x128xbf16>
    %80 = vector.shape_cast %79 : vector<2x2x2x128xbf16> to vector<8x128xbf16>
    %c0_91 = arith.constant 0 : index
    %c0_92 = arith.constant 0 : index
    %81 = vector.load %arg6[%c0_91, %c0_92] : memref<1152x256xbf16, #tpu.memory_space<vmem>>, vector<128x256xbf16>
    %cst_93 = arith.constant dense<0.000000e+00> : vector<8x256xf32>
    %82 = tpu.matmul %80, %81, %cst_93 {dimension_numbers = #tpu.dot_dimension_numbers<[1], [0], [0], [1], [0, 0, 1, 1], [], []>} : vector<8x128xbf16>, vector<128x256xbf16>, vector<8x256xf32> -> vector<8x256xf32>
    %83 = arith.addf %78, %82 : vector<8x256xf32>
    %c0_94 = arith.constant 0 : index
    %c1_95 = arith.constant 1 : index
    %c0_96 = arith.constant 0 : index
    %c0_97 = arith.constant 0 : index
    %84 = vector.load %arg14[%c0_94, %c1_95, %c0_96, %c0_97] : memref<4x4x2x128xbf16, #tpu.memory_space<vmem>>, vector<2x2x2x128xbf16>
    %85 = vector.shape_cast %84 : vector<2x2x2x128xbf16> to vector<8x128xbf16>
    %c128_98 = arith.constant 128 : index
    %c0_99 = arith.constant 0 : index
    %86 = vector.load %arg6[%c128_98, %c0_99] : memref<1152x256xbf16, #tpu.memory_space<vmem>>, vector<128x256xbf16>
    %cst_100 = arith.constant dense<0.000000e+00> : vector<8x256xf32>
    %87 = tpu.matmul %85, %86, %cst_100 {dimension_numbers = #tpu.dot_dimension_numbers<[1], [0], [0], [1], [0, 0, 1, 1], [], []>} : vector<8x128xbf16>, vector<128x256xbf16>, vector<8x256xf32> -> vector<8x256xf32>
    %88 = arith.addf %83, %87 : vector<8x256xf32>
    %c0_101 = arith.constant 0 : index
    %c2_102 = arith.constant 2 : index
    %c0_103 = arith.constant 0 : index
    %c0_104 = arith.constant 0 : index
    %89 = vector.load %arg14[%c0_101, %c2_102, %c0_103, %c0_104] : memref<4x4x2x128xbf16, #tpu.memory_space<vmem>>, vector<2x2x2x128xbf16>
    %90 = vector.shape_cast %89 : vector<2x2x2x128xbf16> to vector<8x128xbf16>
    %c256_105 = arith.constant 256 : index
    %c0_106 = arith.constant 0 : index
    %91 = vector.load %arg6[%c256_105, %c0_106] : memref<1152x256xbf16, #tpu.memory_space<vmem>>, vector<128x256xbf16>
    %cst_107 = arith.constant dense<0.000000e+00> : vector<8x256xf32>
    %92 = tpu.matmul %90, %91, %cst_107 {dimension_numbers = #tpu.dot_dimension_numbers<[1], [0], [0], [1], [0, 0, 1, 1], [], []>} : vector<8x128xbf16>, vector<128x256xbf16>, vector<8x256xf32> -> vector<8x256xf32>
    %93 = arith.addf %88, %92 : vector<8x256xf32>
    %c1_108 = arith.constant 1 : index
    %c0_109 = arith.constant 0 : index
    %c0_110 = arith.constant 0 : index
    %c0_111 = arith.constant 0 : index
    %94 = vector.load %arg14[%c1_108, %c0_109, %c0_110, %c0_111] : memref<4x4x2x128xbf16, #tpu.memory_space<vmem>>, vector<2x2x2x128xbf16>
    %95 = vector.shape_cast %94 : vector<2x2x2x128xbf16> to vector<8x128xbf16>
    %c384_112 = arith.constant 384 : index
    %c0_113 = arith.constant 0 : index
    %96 = vector.load %arg6[%c384_112, %c0_113] : memref<1152x256xbf16, #tpu.memory_space<vmem>>, vector<128x256xbf16>
    %cst_114 = arith.constant dense<0.000000e+00> : vector<8x256xf32>
    %97 = tpu.matmul %95, %96, %cst_114 {dimension_numbers = #tpu.dot_dimension_numbers<[1], [0], [0], [1], [0, 0, 1, 1], [], []>} : vector<8x128xbf16>, vector<128x256xbf16>, vector<8x256xf32> -> vector<8x256xf32>
    %98 = arith.addf %93, %97 : vector<8x256xf32>
    %c1_115 = arith.constant 1 : index
    %c1_116 = arith.constant 1 : index
    %c0_117 = arith.constant 0 : index
    %c0_118 = arith.constant 0 : index
    %99 = vector.load %arg14[%c1_115, %c1_116, %c0_117, %c0_118] : memref<4x4x2x128xbf16, #tpu.memory_space<vmem>>, vector<2x2x2x128xbf16>
    %100 = vector.shape_cast %99 : vector<2x2x2x128xbf16> to vector<8x128xbf16>
    %c512_119 = arith.constant 512 : index
    %c0_120 = arith.constant 0 : index
    %101 = vector.load %arg6[%c512_119, %c0_120] : memref<1152x256xbf16, #tpu.memory_space<vmem>>, vector<128x256xbf16>
    %cst_121 = arith.constant dense<0.000000e+00> : vector<8x256xf32>
    %102 = tpu.matmul %100, %101, %cst_121 {dimension_numbers = #tpu.dot_dimension_numbers<[1], [0], [0], [1], [0, 0, 1, 1], [], []>} : vector<8x128xbf16>, vector<128x256xbf16>, vector<8x256xf32> -> vector<8x256xf32>
    %103 = arith.addf %98, %102 : vector<8x256xf32>
    %c1_122 = arith.constant 1 : index
    %c2_123 = arith.constant 2 : index
    %c0_124 = arith.constant 0 : index
    %c0_125 = arith.constant 0 : index
    %104 = vector.load %arg14[%c1_122, %c2_123, %c0_124, %c0_125] : memref<4x4x2x128xbf16, #tpu.memory_space<vmem>>, vector<2x2x2x128xbf16>
    %105 = vector.shape_cast %104 : vector<2x2x2x128xbf16> to vector<8x128xbf16>
    %c640 = arith.constant 640 : index
    %c0_126 = arith.constant 0 : index
    %106 = vector.load %arg6[%c640, %c0_126] : memref<1152x256xbf16, #tpu.memory_space<vmem>>, vector<128x256xbf16>
    %cst_127 = arith.constant dense<0.000000e+00> : vector<8x256xf32>
    %107 = tpu.matmul %105, %106, %cst_127 {dimension_numbers = #tpu.dot_dimension_numbers<[1], [0], [0], [1], [0, 0, 1, 1], [], []>} : vector<8x128xbf16>, vector<128x256xbf16>, vector<8x256xf32> -> vector<8x256xf32>
    %108 = arith.addf %103, %107 : vector<8x256xf32>
    %c2_128 = arith.constant 2 : index
    %c0_129 = arith.constant 0 : index
    %c0_130 = arith.constant 0 : index
    %c0_131 = arith.constant 0 : index
    %109 = vector.load %arg14[%c2_128, %c0_129, %c0_130, %c0_131] : memref<4x4x2x128xbf16, #tpu.memory_space<vmem>>, vector<2x2x2x128xbf16>
    %110 = vector.shape_cast %109 : vector<2x2x2x128xbf16> to vector<8x128xbf16>
    %c768 = arith.constant 768 : index
    %c0_132 = arith.constant 0 : index
    %111 = vector.load %arg6[%c768, %c0_132] : memref<1152x256xbf16, #tpu.memory_space<vmem>>, vector<128x256xbf16>
    %cst_133 = arith.constant dense<0.000000e+00> : vector<8x256xf32>
    %112 = tpu.matmul %110, %111, %cst_133 {dimension_numbers = #tpu.dot_dimension_numbers<[1], [0], [0], [1], [0, 0, 1, 1], [], []>} : vector<8x128xbf16>, vector<128x256xbf16>, vector<8x256xf32> -> vector<8x256xf32>
    %113 = arith.addf %108, %112 : vector<8x256xf32>
    %c2_134 = arith.constant 2 : index
    %c1_135 = arith.constant 1 : index
    %c0_136 = arith.constant 0 : index
    %c0_137 = arith.constant 0 : index
    %114 = vector.load %arg14[%c2_134, %c1_135, %c0_136, %c0_137] : memref<4x4x2x128xbf16, #tpu.memory_space<vmem>>, vector<2x2x2x128xbf16>
    %115 = vector.shape_cast %114 : vector<2x2x2x128xbf16> to vector<8x128xbf16>
    %c896 = arith.constant 896 : index
    %c0_138 = arith.constant 0 : index
    %116 = vector.load %arg6[%c896, %c0_138] : memref<1152x256xbf16, #tpu.memory_space<vmem>>, vector<128x256xbf16>
    %cst_139 = arith.constant dense<0.000000e+00> : vector<8x256xf32>
    %117 = tpu.matmul %115, %116, %cst_139 {dimension_numbers = #tpu.dot_dimension_numbers<[1], [0], [0], [1], [0, 0, 1, 1], [], []>} : vector<8x128xbf16>, vector<128x256xbf16>, vector<8x256xf32> -> vector<8x256xf32>
    %118 = arith.addf %113, %117 : vector<8x256xf32>
    %c2_140 = arith.constant 2 : index
    %c2_141 = arith.constant 2 : index
    %c0_142 = arith.constant 0 : index
    %c0_143 = arith.constant 0 : index
    %119 = vector.load %arg14[%c2_140, %c2_141, %c0_142, %c0_143] : memref<4x4x2x128xbf16, #tpu.memory_space<vmem>>, vector<2x2x2x128xbf16>
    %120 = vector.shape_cast %119 : vector<2x2x2x128xbf16> to vector<8x128xbf16>
    %c1024 = arith.constant 1024 : index
    %c0_144 = arith.constant 0 : index
    %121 = vector.load %arg6[%c1024, %c0_144] : memref<1152x256xbf16, #tpu.memory_space<vmem>>, vector<128x256xbf16>
    %cst_145 = arith.constant dense<0.000000e+00> : vector<8x256xf32>
    %122 = tpu.matmul %120, %121, %cst_145 {dimension_numbers = #tpu.dot_dimension_numbers<[1], [0], [0], [1], [0, 0, 1, 1], [], []>} : vector<8x128xbf16>, vector<128x256xbf16>, vector<8x256xf32> -> vector<8x256xf32>
    %123 = arith.addf %118, %122 : vector<8x256xf32>
    %c0_146 = arith.constant 0 : index
    %c0_147 = arith.constant 0 : index
    %124 = vector.load %arg7[%c0_146, %c0_147] : memref<1x256xf32, #tpu.memory_space<vmem>>, vector<1x256xf32>
    %125 = vector.broadcast %124 : vector<1x256xf32> to vector<8x256xf32>
    %126 = arith.addf %123, %125 : vector<8x256xf32>
    %cst_148 = arith.constant 0.000000e+00 : f32
    %127 = vector.broadcast %cst_148 : f32 to vector<8x256xf32>
    %128 = arith.maximumf %126, %127 : vector<8x256xf32>
    %129 = vector.shape_cast %128 : vector<8x256xf32> to vector<2x2x2x256xf32>
    %130 = vector.shape_cast %129 : vector<2x2x2x256xf32> to vector<1x2x2x2x256xf32>
    %cst_149 = arith.constant dense<0xFF800000> : vector<1x2x2x256xf32>
    %131 = vector.multi_reduction <maximumf>, %130, %cst_149 [1] : vector<1x2x2x2x256xf32> to vector<1x2x2x256xf32>
    %132 = vector.shape_cast %131 : vector<1x2x2x256xf32> to vector<1x1x2x2x256xf32>
    %cst_150 = arith.constant dense<0xFF800000> : vector<1x1x2x256xf32>
    %133 = vector.multi_reduction <maximumf>, %132, %cst_150 [2] : vector<1x1x2x2x256xf32> to vector<1x1x2x256xf32>
    %134 = vector.shape_cast %133 : vector<1x1x2x256xf32> to vector<2x256xf32>
    %135 = arith.truncf %134 : vector<2x256xf32> to vector<2x256xbf16>
    %c1024_151 = arith.constant 1024 : index
    %c0_152 = arith.constant 0 : index
    %136 = vector.load %arg8[%c1024_151, %c0_152] : memref<2304x512xbf16, #tpu.memory_space<vmem>>, vector<256x512xbf16>
    %cst_153 = arith.constant dense<0.000000e+00> : vector<2x512xf32>
    %137 = tpu.matmul %135, %136, %cst_153 {dimension_numbers = #tpu.dot_dimension_numbers<[1], [0], [0], [1], [0, 0, 1, 1], [], []>} : vector<2x256xbf16>, vector<256x512xbf16>, vector<2x512xf32> -> vector<2x512xf32>
    %c0_154 = arith.constant 0 : index
    %c0_155 = arith.constant 0 : index
    %138 = vector.load %arg9[%c0_154, %c0_155] : memref<1x512xf32, #tpu.memory_space<vmem>>, vector<1x512xf32>
    %139 = vector.broadcast %138 : vector<1x512xf32> to vector<2x512xf32>
    %140 = arith.addf %137, %139 : vector<2x512xf32>
    %cst_156 = arith.constant 0.000000e+00 : f32
    %141 = vector.broadcast %cst_156 : f32 to vector<2x512xf32>
    %142 = arith.maximumf %140, %141 : vector<2x512xf32>
    %143 = arith.truncf %142 : vector<2x512xf32> to vector<2x512xbf16>
    %c0_157 = arith.constant 0 : index
    %c0_158 = arith.constant 0 : index
    %144 = vector.load %arg10[%c0_157, %c0_158] : memref<512x128xbf16, #tpu.memory_space<vmem>>, vector<512x128xbf16>
    %cst_159 = arith.constant dense<0.000000e+00> : vector<2x128xf32>
    %145 = tpu.matmul %143, %144, %cst_159 {dimension_numbers = #tpu.dot_dimension_numbers<[1], [0], [0], [1], [0, 0, 1, 1], [], []>} : vector<2x512xbf16>, vector<512x128xbf16>, vector<2x128xf32> -> vector<2x128xf32>
    %c0_160 = arith.constant 0 : index
    %c0_161 = arith.constant 0 : index
    %146 = vector.load %arg11[%c0_160, %c0_161] : memref<1x128xf32, #tpu.memory_space<vmem>>, vector<1x128xf32>
    %147 = vector.broadcast %146 : vector<1x128xf32> to vector<2x128xf32>
    %148 = arith.addf %145, %147 : vector<2x128xf32>
    %c0_162 = arith.constant 0 : index
    %c0_163 = arith.constant 0 : index
    %149 = vector.load %arg12[%c0_162, %c0_163] : memref<2x128xf32, #tpu.memory_space<vmem>>, vector<2x128xf32>
    tpu.vector_store %arg12[%c0_162, %c0_163], %148 {strides = array<i32>} : memref<2x128xf32, #tpu.memory_space<vmem>>, vector<2x128xf32>,
    return
  }
  func.func @transform_0(%arg0: i32) -> (i32, i32, i32) {
    %c0_i32 = arith.constant 0 : i32
    %c0_i32_0 = arith.constant 0 : i32
    %c0_i32_1 = arith.constant 0 : i32
    return %c0_i32, %arg0, %c0_i32_0 : i32, i32, i32
  }
  func.func @transform_1(%arg0: i32) -> (i32, i32) {
    %c0_i32 = arith.constant 0 : i32
    %c0_i32_0 = arith.constant 0 : i32
    %c0_i32_1 = arith.constant 0 : i32
    return %c0_i32, %c0_i32_0 : i32, i32
  }
  func.func @transform_2(%arg0: i32) -> (i32, i32) {
    %c0_i32 = arith.constant 0 : i32
    %c0_i32_0 = arith.constant 0 : i32
    %c0_i32_1 = arith.constant 0 : i32
    return %c0_i32, %c0_i32_0 : i32, i32
  }
  func.func @transform_3(%arg0: i32) -> (i32, i32) {
    %c0_i32 = arith.constant 0 : i32
    %c0_i32_0 = arith.constant 0 : i32
    %c0_i32_1 = arith.constant 0 : i32
    return %c0_i32, %c0_i32_0 : i32, i32
  }
  func.func @transform_4(%arg0: i32) -> (i32, i32) {
    %c0_i32 = arith.constant 0 : i32
    %c0_i32_0 = arith.constant 0 : i32
    %c0_i32_1 = arith.constant 0 : i32
    return %c0_i32, %c0_i32_0 : i32, i32
  }
  func.func @transform_5(%arg0: i32) -> (i32, i32) {
    %c0_i32 = arith.constant 0 : i32
    %c0_i32_0 = arith.constant 0 : i32
    %c0_i32_1 = arith.constant 0 : i32
    return %c0_i32, %c0_i32_0 : i32, i32
  }
  func.func @transform_6(%arg0: i32) -> (i32, i32) {
    %c0_i32 = arith.constant 0 : i32
    %c0_i32_0 = arith.constant 0 : i32
    %c0_i32_1 = arith.constant 0 : i32
    return %c0_i32, %c0_i32_0 : i32, i32
  }
  func.func @transform_7(%arg0: i32) -> (i32, i32) {
    %c0_i32 = arith.constant 0 : i32
    %c0_i32_0 = arith.constant 0 : i32
    %c0_i32_1 = arith.constant 0 : i32
    return %c0_i32, %c0_i32_0 : i32, i32
  }
  func.func @transform_8(%arg0: i32) -> (i32, i32) {
    %c0_i32 = arith.constant 0 : i32
    %c0_i32_0 = arith.constant 0 : i32
    %c0_i32_1 = arith.constant 0 : i32
    return %c0_i32, %c0_i32_0 : i32, i32
  }
  func.func @transform_9(%arg0: i32) -> (i32, i32) {
    %c0_i32 = arith.constant 0 : i32
    %c0_i32_0 = arith.constant 0 : i32
    %c0_i32_1 = arith.constant 0 : i32
    return %c0_i32, %c0_i32_0 : i32, i32
  }
  func.func @transform_10(%arg0: i32) -> (i32, i32) {
    %c0_i32 = arith.constant 0 : i32
    %c0_i32_0 = arith.constant 0 : i32
    %c0_i32_1 = arith.constant 0 : i32
    return %c0_i32, %c0_i32_0 : i32, i32
  }
  func.func @transform_11(%arg0: i32) -> (i32, i32) {
    %c0_i32 = arith.constant 0 : i32
    %c0_i32_0 = arith.constant 0 : i32
    return %arg0, %c0_i32 : i32, i32
  }
}

</mosaic_0001>

<llo_original>
// kernel: vgg_forward.1
$region0: #{vgg_forward.1}
  #allocation0 [shape = 'u32[]', space=smem, size = 0x4, offset = 0x4, fixed_abs, tag = 'smem constant byte address 0x4 - core index']
  #allocation1 [shape = 'u32[144,128]{1,0:T(1,128)}', space=vmem, size = 0x12000, scoped, tag = 'internal scratch']
  #allocation2 [shape = 'bf16[6,6,2,64]{3,2,1,0:T(2,128)(2,1)}', space=vmem, size = 0x4800, scoped, tag = 'scratch operand']
  #allocation3 [shape = 'bf16[4,4,2,128]{3,2,1,0:T(2,128)(2,1)}', space=vmem, size = 0x2000, scoped, tag = 'scratch operand']
  %s0 = inlined_call_operand.vmem [shape: bf16[64,2,27], index: 0, kind: input, shape index: {}]
  %s1 = inlined_call_operand.hbm [shape: bf16[27,64], index: 1, kind: input, shape index: {}]
  %s2 = inlined_call_operand.hbm [shape: f32[1,64], index: 2, kind: input, shape index: {}]
  %s3 = inlined_call_operand.hbm [shape: bf16[576,128], index: 3, kind: input, shape index: {}]
  %s4 = inlined_call_operand.hbm [shape: f32[1,128], index: 4, kind: input, shape index: {}]
  %s5 = inlined_call_operand.hbm [shape: bf16[1152,256], index: 5, kind: input, shape index: {}]
  %s6 = inlined_call_operand.hbm [shape: f32[1,256], index: 6, kind: input, shape index: {}]
  %s7 = inlined_call_operand.hbm [shape: bf16[2304,512], index: 7, kind: input, shape index: {}]
  %s8 = inlined_call_operand.hbm [shape: f32[1,512], index: 8, kind: input, shape index: {}]
  %s9 = inlined_call_operand.hbm [shape: bf16[512,128], index: 9, kind: input, shape index: {}]
  %s10 = inlined_call_operand.hbm [shape: f32[1,128], index: 10, kind: input, shape index: {}]
  %s11 = inlined_call_operand.hbm [shape: f32[2,128], index: 11, kind: output, shape index: {}]
  %s12 = sld [smem:[#allocation0]]
  $region94: #{vgg_forward.1} parent=0
    _
  %s14 = ssub.s32 1, %s12
  %s15 = scalar_select 0, %s14, %s12
  $region1: #{vgg_forward.1} parent=0
    #allocation4 [shape = 'u8[8192]{0}', space=vmem, size = 0x2000, scoped, tag = 'input window, operand 1, single buffered']
    #allocation5 [shape = 's32[1]{0}', space=sflag, size = 0x4, scoped, tag = 'scoped memory for vgg_forward.1']
    #allocation6 [shape = 's32[1]{0}', space=sflag, size = 0x4, scoped, tag = 'scoped memory for vgg_forward.1']
    #allocation7 [shape = 'u8[512]{0}', space=vmem, size = 0x400, scoped, tag = 'input window, operand 2, single buffered']
    #allocation8 [shape = 's32[1]{0}', space=sflag, size = 0x4, scoped, tag = 'scoped memory for vgg_forward.1']
    #allocation9 [shape = 'u8[147456]{0}', space=vmem, size = 0x24000, scoped, tag = 'input window, operand 3, single buffered']
    #allocation10 [shape = 'u8[512]{0}', space=vmem, size = 0x400, scoped, tag = 'input window, operand 4, single buffered']
    #allocation11 [shape = 's32[1]{0}', space=sflag, size = 0x4, scoped, tag = 'scoped memory for vgg_forward.1']
    #allocation12 [shape = 'u8[589824]{0}', space=vmem, size = 0x90000, scoped, tag = 'input window, operand 5, single buffered']
    #allocation13 [shape = 'u8[1024]{0}', space=vmem, size = 0x400, scoped, tag = 'input window, operand 6, single buffered']
    #allocation14 [shape = 's32[1]{0}', space=sflag, size = 0x4, scoped, tag = 'scoped memory for vgg_forward.1']
    #allocation15 [shape = 'u8[2359296]{0}', space=vmem, size = 0x240000, scoped, tag = 'input window, operand 7, single buffered']
    #allocation16 [shape = 'u8[2048]{0}', space=vmem, size = 0x800, scoped, tag = 'input window, operand 8, single buffered']
    #allocation17 [shape = 's32[1]{0}', space=sflag, size = 0x4, scoped, tag = 'scoped memory for vgg_forward.1']
    #allocation18 [shape = 'u8[131072]{0}', space=vmem, size = 0x20000, scoped, tag = 'input window, operand 9, single buffered']
    #allocation19 [shape = 'u8[512]{0}', space=vmem, size = 0x400, scoped, tag = 'input window, operand 10, single buffered']
    #allocation20 [shape = 's32[1]{0}', space=sflag, size = 0x4, scoped, tag = 'scoped memory for vgg_forward.1']
    #allocation21 [shape = 'u8[1024]{0}', space=vmem, size = 0x400, scoped, tag = 'output window, operand 0, single buffered']
    %16 = vsyncpa [#allocation5], 0
    %17 = vsyncpa [#allocation8], 0
    %18 = vsyncpa [#allocation11], 0
    %19 = vsyncpa [#allocation14], 0
    %20 = vsyncpa [#allocation17], 0
    %21 = vsyncpa [#allocation20], 0
    %22 = vsyncpa [#allocation6], 0
    // Predicated region
    $region2: #{vgg_forward.1} parent=1 // pred_check
      _
    $region3: #{vgg_forward.1} parent=1 // pred_check_branch
      %24 = sbr.rel (0) target = $region5
    $region4: #{vgg_forward.1} parent=1 // pred_region
      _
    $region5: #{vgg_forward.1} parent=1 // pred_fallthru
      _
    // Predicated region
    $region6: #{vgg_forward.1} parent=1 // pred_check
      _
    $region7: #{vgg_forward.1} parent=1 // pred_check_branch
      %26 = sbr.rel (0) target = $region9
    $region8: #{vgg_forward.1} parent=1 // pred_region
      %s28 = ssub.s32 256, 256
      %29 = vsyncadd [#allocation5], %s28
      %s30 = sshll.u32 [#allocation4], 4
      %s31 = int_to_ptr.vmem [resolvable:$true] %s30
      %36 = dma.hbm_to_vmem [thread:$0]  %s1, 256, %s31, [#allocation5], 64, 64, 4
    $region9: #{vgg_forward.1} parent=1 // pred_fallthru
      _
    // Predicated region
    $region10: #{vgg_forward.1} parent=1 // pred_check
      _
    $region11: #{vgg_forward.1} parent=1 // pred_check_branch
      %38 = sbr.rel (0) target = $region13
    $region12: #{vgg_forward.1} parent=1 // pred_region
      %s40 = ssub.s32 16, 16
      %41 = vsyncadd [#allocation8], %s40
      %s43 = sshll.u32 [#allocation7], 4
      %s44 = int_to_ptr.vmem [resolvable:$true] %s43
      %46 = dma.hbm_to_vmem [thread:$0]  %s2, 16, %s44, [#allocation8]
    $region13: #{vgg_forward.1} parent=1 // pred_fallthru
      _
    // Predicated region
    $region14: #{vgg_forward.1} parent=1 // pred_check
      _
    $region15: #{vgg_forward.1} parent=1 // pred_check_branch
      %48 = sbr.rel (0) target = $region17
    $region16: #{vgg_forward.1} parent=1 // pred_region
      %s50 = ssub.s32 4608, 4608
      %51 = vsyncadd [#allocation8], %s50
      %s52 = sshll.u32 [#allocation9], 4
      %s53 = int_to_ptr.vmem [resolvable:$true] %s52
      %58 = dma.hbm_to_vmem [thread:$0]  %s3, 4608, %s53, [#allocation8], 64, 64, 4
    $region17: #{vgg_forward.1} parent=1 // pred_fallthru
      _
    // Predicated region
    $region18: #{vgg_forward.1} parent=1 // pred_check
      _
    $region19: #{vgg_forward.1} parent=1 // pred_check_branch
      %60 = sbr.rel (0) target = $region21
    $region20: #{vgg_forward.1} parent=1 // pred_region
      %s62 = ssub.s32 16, 16
      %63 = vsyncadd [#allocation11], %s62
      %s65 = sshll.u32 [#allocation10], 4
      %s66 = int_to_ptr.vmem [resolvable:$true] %s65
      %68 = dma.hbm_to_vmem [thread:$0]  %s4, 16, %s66, [#allocation11]
    $region21: #{vgg_forward.1} parent=1 // pred_fallthru
      _
    // Predicated region
    $region22: #{vgg_forward.1} parent=1 // pred_check
      _
    $region23: #{vgg_forward.1} parent=1 // pred_check_branch
      %70 = sbr.rel (0) target = $region25
    $region24: #{vgg_forward.1} parent=1 // pred_region
      %s72 = ssub.s32 18432, 18432
      %73 = vsyncadd [#allocation11], %s72
      %s74 = sshll.u32 [#allocation12], 4
      %s75 = int_to_ptr.vmem [resolvable:$true] %s74
      %80 = dma.hbm_to_vmem [thread:$0]  %s5, 18432, %s75, [#allocation11], 128, 128, 8
    $region25: #{vgg_forward.1} parent=1 // pred_fallthru
      _
    // Predicated region
    $region26: #{vgg_forward.1} parent=1 // pred_check
      _
    $region27: #{vgg_forward.1} parent=1 // pred_check_branch
      %82 = sbr.rel (0) target = $region29
    $region28: #{vgg_forward.1} parent=1 // pred_region
      %s84 = ssub.s32 32, 32
      %85 = vsyncadd [#allocation14], %s84
      %s87 = sshll.u32 [#allocation13], 4
      %s88 = int_to_ptr.vmem [resolvable:$true] %s87
      %90 = dma.hbm_to_vmem [thread:$0]  %s6, 32, %s88, [#allocation14]
    $region29: #{vgg_forward.1} parent=1 // pred_fallthru
      _
    // Predicated region
    $region30: #{vgg_forward.1} parent=1 // pred_check
      _
    $region31: #{vgg_forward.1} parent=1 // pred_check_branch
      %92 = sbr.rel (0) target = $region33
    $region32: #{vgg_forward.1} parent=1 // pred_region
      %s94 = ssub.s32 73728, 73728
      %95 = vsyncadd [#allocation14], %s94
      %s96 = sshll.u32 [#allocation15], 4
      %s97 = int_to_ptr.vmem [resolvable:$true] %s96
      %102 = dma.hbm_to_vmem [thread:$0]  %s7, 73728, %s97, [#allocation14], 256, 256, 16
    $region33: #{vgg_forward.1} parent=1 // pred_fallthru
      _
    // Predicated region
    $region34: #{vgg_forward.1} parent=1 // pred_check
      _
    $region35: #{vgg_forward.1} parent=1 // pred_check_branch
      %104 = sbr.rel (0) target = $region37
    $region36: #{vgg_forward.1} parent=1 // pred_region
      %s106 = ssub.s32 64, 64
      %107 = vsyncadd [#allocation17], %s106
      %s109 = sshll.u32 [#allocation16], 4
      %s110 = int_to_ptr.vmem [resolvable:$true] %s109
      %112 = dma.hbm_to_vmem [thread:$0]  %s8, 64, %s110, [#allocation17]
    $region37: #{vgg_forward.1} parent=1 // pred_fallthru
      _
    // Predicated region
    $region38: #{vgg_forward.1} parent=1 // pred_check
      _
    $region39: #{vgg_forward.1} parent=1 // pred_check_branch
      %114 = sbr.rel (0) target = $region41
    $region40: #{vgg_forward.1} parent=1 // pred_region
      %s116 = ssub.s32 4096, 4096
      %117 = vsyncadd [#allocation17], %s116
      %s118 = sshll.u32 [#allocation18], 4
      %s119 = int_to_ptr.vmem [resolvable:$true] %s118
      %124 = dma.hbm_to_vmem [thread:$0]  %s9, 4096, %s119, [#allocation17], 64, 64, 4
    $region41: #{vgg_forward.1} parent=1 // pred_fallthru
      _
    // Predicated region
    $region42: #{vgg_forward.1} parent=1 // pred_check
      _
    $region43: #{vgg_forward.1} parent=1 // pred_check_branch
      %126 = sbr.rel (0) target = $region45
    $region44: #{vgg_forward.1} parent=1 // pred_region
      %s128 = ssub.s32 16, 16
      %129 = vsyncadd [#allocation20], %s128
      %s131 = sshll.u32 [#allocation19], 4
      %s132 = int_to_ptr.vmem [resolvable:$true] %s131
      %134 = dma.hbm_to_vmem [thread:$0]  %s10, 16, %s132, [#allocation20]
    $region45: #{vgg_forward.1} parent=1 // pred_fallthru
      _
    // Predicated region
    $region46: #{vgg_forward.1} parent=1 // pred_check
      _
    $region47: #{vgg_forward.1} parent=1 // pred_check_branch
      %136 = sbr.rel (0) target = $region49
    $region48: #{vgg_forward.1} parent=1 // pred_region
      %137 = dma.done [#allocation5], 256
    $region49: #{vgg_forward.1} parent=1 // pred_fallthru
      _
    // Predicated region
    $region50: #{vgg_forward.1} parent=1 // pred_check
      _
    $region51: #{vgg_forward.1} parent=1 // pred_check_branch
      %139 = sbr.rel (0) target = $region53
    $region52: #{vgg_forward.1} parent=1 // pred_region
      %140 = dma.done [#allocation8], 16
    $region53: #{vgg_forward.1} parent=1 // pred_fallthru
      _
    // Predicated region
    $region54: #{vgg_forward.1} parent=1 // pred_check
      _
    $region55: #{vgg_forward.1} parent=1 // pred_check_branch
      %142 = sbr.rel (0) target = $region57
    $region56: #{vgg_forward.1} parent=1 // pred_region
      %143 = dma.done [#allocation8], 4608
    $region57: #{vgg_forward.1} parent=1 // pred_fallthru
      _
    // Predicated region
    $region58: #{vgg_forward.1} parent=1 // pred_check
      _
    $region59: #{vgg_forward.1} parent=1 // pred_check_branch
      %145 = sbr.rel (0) target = $region61
    $region60: #{vgg_forward.1} parent=1 // pred_region
      %146 = dma.done [#allocation11], 16
    $region61: #{vgg_forward.1} parent=1 // pred_fallthru
      _
    // Predicated region
    $region62: #{vgg_forward.1} parent=1 // pred_check
      _
    $region63: #{vgg_forward.1} parent=1 // pred_check_branch
      %148 = sbr.rel (0) target = $region65
    $region64: #{vgg_forward.1} parent=1 // pred_region
      %149 = dma.done [#allocation11], 18432
    $region65: #{vgg_forward.1} parent=1 // pred_fallthru
      _
    // Predicated region
    $region66: #{vgg_forward.1} parent=1 // pred_check
      _
    $region67: #{vgg_forward.1} parent=1 // pred_check_branch
      %151 = sbr.rel (0) target = $region69
    $region68: #{vgg_forward.1} parent=1 // pred_region
      %152 = dma.done [#allocation14], 32
    $region69: #{vgg_forward.1} parent=1 // pred_fallthru
      _
    // Predicated region
    $region70: #{vgg_forward.1} parent=1 // pred_check
      _
    $region71: #{vgg_forward.1} parent=1 // pred_check_branch
      %154 = sbr.rel (0) target = $region73
    $region72: #{vgg_forward.1} parent=1 // pred_region
      %155 = dma.done [#allocation14], 73728
    $region73: #{vgg_forward.1} parent=1 // pred_fallthru
      _
    // Predicated region
    $region74: #{vgg_forward.1} parent=1 // pred_check
      _
    $region75: #{vgg_forward.1} parent=1 // pred_check_branch
      %157 = sbr.rel (0) target = $region77
    $region76: #{vgg_forward.1} parent=1 // pred_region
      %158 = dma.done [#allocation17], 64
    $region77: #{vgg_forward.1} parent=1 // pred_fallthru
      _
    // Predicated region
    $region78: #{vgg_forward.1} parent=1 // pred_check
      _
    $region79: #{vgg_forward.1} parent=1 // pred_check_branch
      %160 = sbr.rel (0) target = $region81
    $region80: #{vgg_forward.1} parent=1 // pred_region
      %161 = dma.done [#allocation17], 4096
    $region81: #{vgg_forward.1} parent=1 // pred_fallthru
      _
    // Predicated region
    $region82: #{vgg_forward.1} parent=1 // pred_check
      _
    $region83: #{vgg_forward.1} parent=1 // pred_check_branch
      %163 = sbr.rel (0) target = $region85
    $region84: #{vgg_forward.1} parent=1 // pred_region
      %164 = dma.done [#allocation20], 16
    $region85: #{vgg_forward.1} parent=1 // pred_fallthru
      _
    %v166 = vld [vmem:[%s0] sm:$0x1]
    %v167 = vld [vmem:[%s0 + $0x1] sm:$0x1]
    %v168 = vld [vmem:[%s0 + $0x2] sm:$0x1]
    %v169 = vld [vmem:[%s0 + $0x3] sm:$0x1]
    %v170 = vld [vmem:[%s0 + $0x4] sm:$0x1]
    %v171 = vld [vmem:[%s0 + $0x5] sm:$0x1]
    %v172 = vld [vmem:[%s0 + $0x6] sm:$0x1]
    %v173 = vld [vmem:[%s0 + $0x7] sm:$0x1]
    %v174 = vld [vmem:[%s0 + $0x8] sm:$0x1]
    %v175 = vld [vmem:[%s0 + $0x9] sm:$0x1]
    %v176 = vld [vmem:[%s0 + $0xa] sm:$0x1]
    %v177 = vld [vmem:[%s0 + $0xb] sm:$0x1]
    %v178 = vld [vmem:[%s0 + $0xc] sm:$0x1]
    %v179 = vld [vmem:[%s0 + $0xd] sm:$0x1]
    %v180 = vld [vmem:[%s0 + $0xe] sm:$0x1]
    %v181 = vld [vmem:[%s0 + $0xf] sm:$0x1]
    %v182 = vld [vmem:[%s0 + $0x10] sm:$0x1]
    %v183 = vld [vmem:[%s0 + $0x11] sm:$0x1]
    %v184 = vld [vmem:[%s0 + $0x12] sm:$0x1]
    %v185 = vld [vmem:[%s0 + $0x13] sm:$0x1]
    %v186 = vld [vmem:[%s0 + $0x14] sm:$0x1]
    %v187 = vld [vmem:[%s0 + $0x15] sm:$0x1]
    %v188 = vld [vmem:[%s0 + $0x16] sm:$0x1]
    %v189 = vld [vmem:[%s0 + $0x17] sm:$0x1]
    %v190 = vld [vmem:[%s0 + $0x18] sm:$0x1]
    %v191 = vld [vmem:[%s0 + $0x19] sm:$0x1]
    %v192 = vld [vmem:[%s0 + $0x1a] sm:$0x1]
    %v193 = vld [vmem:[%s0 + $0x1b] sm:$0x1]
    %v194 = vld [vmem:[%s0 + $0x1c] sm:$0x1]
    %v195 = vld [vmem:[%s0 + $0x1d] sm:$0x1]
    %v196 = vld [vmem:[%s0 + $0x1e] sm:$0x1]
    %v197 = vld [vmem:[%s0 + $0x1f] sm:$0x1]
    %v198 = vld [vmem:[%s0 + $0x20] sm:$0x1]
    %v199 = vld [vmem:[%s0 + $0x21] sm:$0x1]
    %v200 = vld [vmem:[%s0 + $0x22] sm:$0x1]
    %v201 = vld [vmem:[%s0 + $0x23] sm:$0x1]
    %v202 = vld [vmem:[%s0 + $0x24] sm:$0x1]
    %v203 = vld [vmem:[%s0 + $0x25] sm:$0x1]
    %v204 = vld [vmem:[%s0 + $0x26] sm:$0x1]
    %v205 = vld [vmem:[%s0 + $0x27] sm:$0x1]
    %v206 = vld [vmem:[%s0 + $0x28] sm:$0x1]
    %v207 = vld [vmem:[%s0 + $0x29] sm:$0x1]
    %v208 = vld [vmem:[%s0 + $0x2a] sm:$0x1]
    %v209 = vld [vmem:[%s0 + $0x2b] sm:$0x1]
    %v210 = vld [vmem:[%s0 + $0x2c] sm:$0x1]
    %v211 = vld [vmem:[%s0 + $0x2d] sm:$0x1]
    %v212 = vld [vmem:[%s0 + $0x2e] sm:$0x1]
    %v213 = vld [vmem:[%s0 + $0x2f] sm:$0x1]
    %v214 = vld [vmem:[%s0 + $0x30] sm:$0x1]
    %v215 = vld [vmem:[%s0 + $0x31] sm:$0x1]
    %v216 = vld [vmem:[%s0 + $0x32] sm:$0x1]
    %v217 = vld [vmem:[%s0 + $0x33] sm:$0x1]
    %v218 = vld [vmem:[%s0 + $0x34] sm:$0x1]
    %v219 = vld [vmem:[%s0 + $0x35] sm:$0x1]
    %v220 = vld [vmem:[%s0 + $0x36] sm:$0x1]
    %v221 = vld [vmem:[%s0 + $0x37] sm:$0x1]
    %v222 = vld [vmem:[%s0 + $0x38] sm:$0x1]
    %v223 = vld [vmem:[%s0 + $0x39] sm:$0x1]
    %v224 = vld [vmem:[%s0 + $0x3a] sm:$0x1]
    %v225 = vld [vmem:[%s0 + $0x3b] sm:$0x1]
    %v226 = vld [vmem:[%s0 + $0x3c] sm:$0x1]
    %v227 = vld [vmem:[%s0 + $0x3d] sm:$0x1]
    %v228 = vld [vmem:[%s0 + $0x3e] sm:$0x1]
    %v229 = vld [vmem:[%s0 + $0x3f] sm:$0x1]
    %v230 = vld [vmem:[#allocation4] sm:$0xf]
    %v231 = vld [vmem:[#allocation4 + $0x4] sm:$0xf]
    %v232 = vld [vmem:[#allocation4 + $0x8] sm:$0xf]
    %v233 = vld [vmem:[#allocation4 + $0xc] sm:$0x3]
    %v234 = vld [vmem:[#allocation7] sm:$0x1]
    %v236 = vlaneseq
    %v237 = vshrl.u32 %v236, 7
    %v238 = vsub.s32 0, %v237
    %v239 = vrot.slane %v234, %v238
    %v305 = vcombine.low %v166, %v167
    %v306 = vcombine.low %v168, %v169
    %v307 = vcombine.low %v170, %v171
    %v308 = vcombine.low %v172, %v173
    %v310 = vunpack.c.l.s4 1966171168
    %v311 = vunpack.c.0.s8 %v310
    %v312 = vlaneseq
    %v313 = vshrl.u32 %v312, 7
    %v314 = vsub.s32 %v311, %v313
    %v315 = vrot.slane %v305, %v314
    %v317 = vunpack.c.l.s4 1966171168
    %v318 = vunpack.c.0.s8 %v317
    %v319 = vlaneseq
    %v320 = vshrl.u32 %v319, 7
    %v321 = vsub.s32 %v318, %v320
    %v322 = vrot.slane %v306, %v321
    %v324 = vunpack.c.l.s4 1966171168
    %v325 = vunpack.c.0.s8 %v324
    %v326 = vlaneseq
    %v327 = vshrl.u32 %v326, 7
    %v328 = vsub.s32 %v325, %v327
    %v329 = vrot.slane %v307, %v328
    %v331 = vunpack.c.l.s4 1966171168
    %v332 = vunpack.c.0.s8 %v331
    %v333 = vlaneseq
    %v334 = vshrl.u32 %v333, 7
    %v335 = vsub.s32 %v332, %v334
    %v336 = vrot.slane %v308, %v335
    %v337 = vcombine.low %v315, %v322
    %v338 = vcombine.low %v329, %v336
    %v340 = vunpack.c.l.s4 1966171168
    %v341 = vunpack.c.0.s8 %v340
    %v342 = vlaneseq
    %v343 = vshrl.u32 %v342, 7
    %v344 = vsub.s32 %v341, %v343
    %v345 = vrot.slane %v337, %v344
    %v347 = vunpack.c.l.s4 1966171168
    %v348 = vunpack.c.0.s8 %v347
    %v349 = vlaneseq
    %v350 = vshrl.u32 %v349, 7
    %v351 = vsub.s32 %v348, %v350
    %v352 = vrot.slane %v338, %v351
    %v353 = vcombine.low %v345, %v352
    %v354 = vcombine.low %v174, %v175
    %v355 = vcombine.low %v176, %v177
    %v356 = vcombine.low %v178, %v179
    %v357 = vcombine.low %v180, %v181
    %v359 = vunpack.c.l.s4 1966171168
    %v360 = vunpack.c.0.s8 %v359
    %v361 = vlaneseq
    %v362 = vshrl.u32 %v361, 7
    %v363 = vsub.s32 %v360, %v362
    %v364 = vrot.slane %v354, %v363
    %v366 = vunpack.c.l.s4 1966171168
    %v367 = vunpack.c.0.s8 %v366
    %v368 = vlaneseq
    %v369 = vshrl.u32 %v368, 7
    %v370 = vsub.s32 %v367, %v369
    %v371 = vrot.slane %v355, %v370
    %v373 = vunpack.c.l.s4 1966171168
    %v374 = vunpack.c.0.s8 %v373
    %v375 = vlaneseq
    %v376 = vshrl.u32 %v375, 7
    %v377 = vsub.s32 %v374, %v376
    %v378 = vrot.slane %v356, %v377
    %v380 = vunpack.c.l.s4 1966171168
    %v381 = vunpack.c.0.s8 %v380
    %v382 = vlaneseq
    %v383 = vshrl.u32 %v382, 7
    %v384 = vsub.s32 %v381, %v383
    %v385 = vrot.slane %v357, %v384
    %v386 = vcombine.low %v364, %v371
    %v387 = vcombine.low %v378, %v385
    %v389 = vunpack.c.l.s4 1966171168
    %v390 = vunpack.c.0.s8 %v389
    %v391 = vlaneseq
    %v392 = vshrl.u32 %v391, 7
    %v393 = vsub.s32 %v390, %v392
    %v394 = vrot.slane %v386, %v393
    %v396 = vunpack.c.l.s4 1966171168
    %v397 = vunpack.c.0.s8 %v396
    %v398 = vlaneseq
    %v399 = vshrl.u32 %v398, 7
    %v400 = vsub.s32 %v397, %v399
    %v401 = vrot.slane %v387, %v400
    %v402 = vcombine.low %v394, %v401
    %v403 = vcombine.low %v182, %v183
    %v404 = vcombine.low %v184, %v185
    %v405 = vcombine.low %v186, %v187
    %v406 = vcombine.low %v188, %v189
    %v408 = vunpack.c.l.s4 1966171168
    %v409 = vunpack.c.0.s8 %v408
    %v410 = vlaneseq
    %v411 = vshrl.u32 %v410, 7
    %v412 = vsub.s32 %v409, %v411
    %v413 = vrot.slane %v403, %v412
    %v415 = vunpack.c.l.s4 1966171168
    %v416 = vunpack.c.0.s8 %v415
    %v417 = vlaneseq
    %v418 = vshrl.u32 %v417, 7
    %v419 = vsub.s32 %v416, %v418
    %v420 = vrot.slane %v404, %v419
    %v422 = vunpack.c.l.s4 1966171168
    %v423 = vunpack.c.0.s8 %v422
    %v424 = vlaneseq
    %v425 = vshrl.u32 %v424, 7
    %v426 = vsub.s32 %v423, %v425
    %v427 = vrot.slane %v405, %v426
    %v429 = vunpack.c.l.s4 1966171168
    %v430 = vunpack.c.0.s8 %v429
    %v431 = vlaneseq
    %v432 = vshrl.u32 %v431, 7
    %v433 = vsub.s32 %v430, %v432
    %v434 = vrot.slane %v406, %v433
    %v435 = vcombine.low %v413, %v420
    %v436 = vcombine.low %v427, %v434
    %v438 = vunpack.c.l.s4 1966171168
    %v439 = vunpack.c.0.s8 %v438
    %v440 = vlaneseq
    %v441 = vshrl.u32 %v440, 7
    %v442 = vsub.s32 %v439, %v441
    %v443 = vrot.slane %v435, %v442
    %v445 = vunpack.c.l.s4 1966171168
    %v446 = vunpack.c.0.s8 %v445
    %v447 = vlaneseq
    %v448 = vshrl.u32 %v447, 7
    %v449 = vsub.s32 %v446, %v448
    %v450 = vrot.slane %v436, %v449
    %v451 = vcombine.low %v443, %v450
    %v452 = vcombine.low %v190, %v191
    %v453 = vcombine.low %v192, %v193
    %v454 = vcombine.low %v194, %v195
    %v455 = vcombine.low %v196, %v197
    %v457 = vunpack.c.l.s4 1966171168
    %v458 = vunpack.c.0.s8 %v457
    %v459 = vlaneseq
    %v460 = vshrl.u32 %v459, 7
    %v461 = vsub.s32 %v458, %v460
    %v462 = vrot.slane %v452, %v461
    %v464 = vunpack.c.l.s4 1966171168
    %v465 = vunpack.c.0.s8 %v464
    %v466 = vlaneseq
    %v467 = vshrl.u32 %v466, 7
    %v468 = vsub.s32 %v465, %v467
    %v469 = vrot.slane %v453, %v468
    %v471 = vunpack.c.l.s4 1966171168
    %v472 = vunpack.c.0.s8 %v471
    %v473 = vlaneseq
    %v474 = vshrl.u32 %v473, 7
    %v475 = vsub.s32 %v472, %v474
    %v476 = vrot.slane %v454, %v475
    %v478 = vunpack.c.l.s4 1966171168
    %v479 = vunpack.c.0.s8 %v478
    %v480 = vlaneseq
    %v481 = vshrl.u32 %v480, 7
    %v482 = vsub.s32 %v479, %v481
    %v483 = vrot.slane %v455, %v482
    %v484 = vcombine.low %v462, %v469
    %v485 = vcombine.low %v476, %v483
    %v487 = vunpack.c.l.s4 1966171168
    %v488 = vunpack.c.0.s8 %v487
    %v489 = vlaneseq
    %v490 = vshrl.u32 %v489, 7
    %v491 = vsub.s32 %v488, %v490
    %v492 = vrot.slane %v484, %v491
    %v494 = vunpack.c.l.s4 1966171168
    %v495 = vunpack.c.0.s8 %v494
    %v496 = vlaneseq
    %v497 = vshrl.u32 %v496, 7
    %v498 = vsub.s32 %v495, %v497
    %v499 = vrot.slane %v485, %v498
    %v500 = vcombine.low %v492, %v499
    %v501 = vcombine.low %v198, %v199
    %v502 = vcombine.low %v200, %v201
    %v503 = vcombine.low %v202, %v203
    %v504 = vcombine.low %v204, %v205
    %v506 = vunpack.c.l.s4 1966171168
    %v507 = vunpack.c.0.s8 %v506
    %v508 = vlaneseq
    %v509 = vshrl.u32 %v508, 7
    %v510 = vsub.s32 %v507, %v509
    %v511 = vrot.slane %v501, %v510
    %v513 = vunpack.c.l.s4 1966171168
    %v514 = vunpack.c.0.s8 %v513
    %v515 = vlaneseq
    %v516 = vshrl.u32 %v515, 7
    %v517 = vsub.s32 %v514, %v516
    %v518 = vrot.slane %v502, %v517
    %v520 = vunpack.c.l.s4 1966171168
    %v521 = vunpack.c.0.s8 %v520
    %v522 = vlaneseq
    %v523 = vshrl.u32 %v522, 7
    %v524 = vsub.s32 %v521, %v523
    %v525 = vrot.slane %v503, %v524
    %v527 = vunpack.c.l.s4 1966171168
    %v528 = vunpack.c.0.s8 %v527
    %v529 = vlaneseq
    %v530 = vshrl.u32 %v529, 7
    %v531 = vsub.s32 %v528, %v530
    %v532 = vrot.slane %v504, %v531
    %v533 = vcombine.low %v511, %v518
    %v534 = vcombine.low %v525, %v532
    %v536 = vunpack.c.l.s4 1966171168
    %v537 = vunpack.c.0.s8 %v536
    %v538 = vlaneseq
    %v539 = vshrl.u32 %v538, 7
    %v540 = vsub.s32 %v537, %v539
    %v541 = vrot.slane %v533, %v540
    %v543 = vunpack.c.l.s4 1966171168
    %v544 = vunpack.c.0.s8 %v543
    %v545 = vlaneseq
    %v546 = vshrl.u32 %v545, 7
    %v547 = vsub.s32 %v544, %v546
    %v548 = vrot.slane %v534, %v547
    %v549 = vcombine.low %v541, %v548
    %v550 = vcombine.low %v206, %v207
    %v551 = vcombine.low %v208, %v209
    %v552 = vcombine.low %v210, %v211
    %v553 = vcombine.low %v212, %v213
    %v555 = vunpack.c.l.s4 1966171168
    %v556 = vunpack.c.0.s8 %v555
    %v557 = vlaneseq
    %v558 = vshrl.u32 %v557, 7
    %v559 = vsub.s32 %v556, %v558
    %v560 = vrot.slane %v550, %v559
    %v562 = vunpack.c.l.s4 1966171168
    %v563 = vunpack.c.0.s8 %v562
    %v564 = vlaneseq
    %v565 = vshrl.u32 %v564, 7
    %v566 = vsub.s32 %v563, %v565
    %v567 = vrot.slane %v551, %v566
    %v569 = vunpack.c.l.s4 1966171168
    %v570 = vunpack.c.0.s8 %v569
    %v571 = vlaneseq
    %v572 = vshrl.u32 %v571, 7
    %v573 = vsub.s32 %v570, %v572
    %v574 = vrot.slane %v552, %v573
    %v576 = vunpack.c.l.s4 1966171168
    %v577 = vunpack.c.0.s8 %v576
    %v578 = vlaneseq
    %v579 = vshrl.u32 %v578, 7
    %v580 = vsub.s32 %v577, %v579
    %v581 = vrot.slane %v553, %v580
    %v582 = vcombine.low %v560, %v567
    %v583 = vcombine.low %v574, %v581
    %v585 = vunpack.c.l.s4 1966171168
    %v586 = vunpack.c.0.s8 %v585
    %v587 = vlaneseq
    %v588 = vshrl.u32 %v587, 7
    %v589 = vsub.s32 %v586, %v588
    %v590 = vrot.slane %v582, %v589
    %v592 = vunpack.c.l.s4 1966171168
    %v593 = vunpack.c.0.s8 %v592
    %v594 = vlaneseq
    %v595 = vshrl.u32 %v594, 7
    %v596 = vsub.s32 %v593, %v595
    %v597 = vrot.slane %v583, %v596
    %v598 = vcombine.low %v590, %v597
    %v599 = vcombine.low %v214, %v215
    %v600 = vcombine.low %v216, %v217
    %v601 = vcombine.low %v218, %v219
    %v602 = vcombine.low %v220, %v221
    %v604 = vunpack.c.l.s4 1966171168
    %v605 = vunpack.c.0.s8 %v604
    %v606 = vlaneseq
    %v607 = vshrl.u32 %v606, 7
    %v608 = vsub.s32 %v605, %v607
    %v609 = vrot.slane %v599, %v608
    %v611 = vunpack.c.l.s4 1966171168
    %v612 = vunpack.c.0.s8 %v611
    %v613 = vlaneseq
    %v614 = vshrl.u32 %v613, 7
    %v615 = vsub.s32 %v612, %v614
    %v616 = vrot.slane %v600, %v615
    %v618 = vunpack.c.l.s4 1966171168
    %v619 = vunpack.c.0.s8 %v618
    %v620 = vlaneseq
    %v621 = vshrl.u32 %v620, 7
    %v622 = vsub.s32 %v619, %v621
    %v623 = vrot.slane %v601, %v622
    %v625 = vunpack.c.l.s4 1966171168
    %v626 = vunpack.c.0.s8 %v625
    %v627 = vlaneseq
    %v628 = vshrl.u32 %v627, 7
    %v629 = vsub.s32 %v626, %v628
    %v630 = vrot.slane %v602, %v629
    %v631 = vcombine.low %v609, %v616
    %v632 = vcombine.low %v623, %v630
    %v634 = vunpack.c.l.s4 1966171168
    %v635 = vunpack.c.0.s8 %v634
    %v636 = vlaneseq
    %v637 = vshrl.u32 %v636, 7
    %v638 = vsub.s32 %v635, %v637
    %v639 = vrot.slane %v631, %v638
    %v641 = vunpack.c.l.s4 1966171168
    %v642 = vunpack.c.0.s8 %v641
    %v643 = vlaneseq
    %v644 = vshrl.u32 %v643, 7
    %v645 = vsub.s32 %v642, %v644
    %v646 = vrot.slane %v632, %v645
    %v647 = vcombine.low %v639, %v646
    %v648 = vcombine.low %v222, %v223
    %v649 = vcombine.low %v224, %v225
    %v650 = vcombine.low %v226, %v227
    %v651 = vcombine.low %v228, %v229
    %v653 = vunpack.c.l.s4 1966171168
    %v654 = vunpack.c.0.s8 %v653
    %v655 = vlaneseq
    %v656 = vshrl.u32 %v655, 7
    %v657 = vsub.s32 %v654, %v656
    %v658 = vrot.slane %v648, %v657
    %v660 = vunpack.c.l.s4 1966171168
    %v661 = vunpack.c.0.s8 %v660
    %v662 = vlaneseq
    %v663 = vshrl.u32 %v662, 7
    %v664 = vsub.s32 %v661, %v663
    %v665 = vrot.slane %v649, %v664
    %v667 = vunpack.c.l.s4 1966171168
    %v668 = vunpack.c.0.s8 %v667
    %v669 = vlaneseq
    %v670 = vshrl.u32 %v669, 7
    %v671 = vsub.s32 %v668, %v670
    %v672 = vrot.slane %v650, %v671
    %v674 = vunpack.c.l.s4 1966171168
    %v675 = vunpack.c.0.s8 %v674
    %v676 = vlaneseq
    %v677 = vshrl.u32 %v676, 7
    %v678 = vsub.s32 %v675, %v677
    %v679 = vrot.slane %v651, %v678
    %v680 = vcombine.low %v658, %v665
    %v681 = vcombine.low %v672, %v679
    %v683 = vunpack.c.l.s4 1966171168
    %v684 = vunpack.c.0.s8 %v683
    %v685 = vlaneseq
    %v686 = vshrl.u32 %v685, 7
    %v687 = vsub.s32 %v684, %v686
    %v688 = vrot.slane %v680, %v687
    %v690 = vunpack.c.l.s4 1966171168
    %v691 = vunpack.c.0.s8 %v690
    %v692 = vlaneseq
    %v693 = vshrl.u32 %v692, 7
    %v694 = vsub.s32 %v691, %v693
    %v695 = vrot.slane %v681, %v694
    %v696 = vcombine.low %v688, %v695
    %v701 = vunpack.c.l.b16 %v230
    %v702 = vunpack.c.l.b16 %v231
    %v703 = vunpack.c.l.b16 %v232
    %v704 = vunpack.c.l.b16 %v233
    %v705 = vpack.c.b16 %v702, %v701
    %v706 = vpack.c.b16 %v704, %v703
    %vm708 = vcmask 220160
    %v710 = vsel %vm708, %v353, 0
    %v713 = vsel %vm708, %v402, 0
    %v716 = vsel %vm708, %v451, 0
    %v719 = vsel %vm708, %v500, 0
    %v722 = vsel %vm708, %v549, 0
    %v725 = vsel %vm708, %v598, 0
    %v728 = vsel %vm708, %v647, 0
    %v731 = vsel %vm708, %v696, 0
    %vm733 = vcmask 1044480
    %vm734 = vcmask 1045504
    %v735 = vsel %vm733, 4294967295, 65535
    %v736 = vsel %vm734, %v735, 0
    %v738 = vand.u32 %v706, %v736
    %740 = vmatprep.subr.bf16.mxu0 0
    %741 = vmatpush1.bf16.msra.mxu0 %v705
    %742 = vmatprep.subr.bf16.mxu0 0
    %743 = vmatpush1.bf16.msra.mxu0 %v738
    %744 = vmatprep.subr.bf16.mxu0 0
    %745 = vmatpush1.bf16.msra.mxu0 0
    %746 = vmatprep.subr.bf16.mxu0 0
    %747 = vmatpush1.bf16.msra.mxu0 0
    %748 = vmatprep.subr.bf16.mxu0 0
    %749 = vmatpush1.bf16.msra.mxu0 0
    %750 = vmatprep.subr.bf16.mxu0 0
    %751 = vmatpush1.bf16.msra.mxu0 0
    %752 = vmatprep.subr.bf16.mxu0 0
    %753 = vmatpush1.bf16.msra.mxu0 0
    %754 = vmatprep.subr.bf16.mxu0 0
    %755 = vmatpush1.bf16.msra.mxu0 0
    %756 = vmatprep.subr.bf16.mxu0 0
    %757 = vmatpush1.bf16.msra.mxu0 0
    %758 = vmatprep.subr.bf16.mxu0 0
    %759 = vmatpush1.bf16.msra.mxu0 0
    %760 = vmatprep.subr.bf16.mxu0 0
    %761 = vmatpush1.bf16.msra.mxu0 0
    %762 = vmatprep.subr.bf16.mxu0 0
    %763 = vmatpush1.bf16.msra.mxu0 0
    %764 = vmatprep.subr.bf16.mxu0 0
    %765 = vmatpush1.bf16.msra.mxu0 0
    %766 = vmatprep.subr.bf16.mxu0 0
    %767 = vmatpush1.bf16.msra.mxu0 0
    %768 = vmatprep.subr.bf16.mxu0 0
    %769 = vmatpush1.bf16.msra.mxu0 0
    %770 = vmatprep.subr.bf16.mxu0 0
    %771 = vmatpush1.bf16.msra.mxu0 0
    %772 = vmatprep.mubr.bf16.mxu0 0
    %773 = vmatmul.mubr.bf16.gmra.mrb[0].mxu0 %v710
    %v774 = vpop.f32.mrb[0].mxu0
    %v775 = vadd.f32 %v239, %v774
    %v776 = vpop.f32.mrb[0].mxu0
    %v777 = vpop.f32.mrb[0].mxu0
    %v778 = vadd.f32 %v239, %v777
    %v779 = vpop.f32.mrb[0].mxu0
    %780 = vmatprep.mubr.bf16.mxu0 0
    %781 = vmatmul.mubr.bf16.gmra.mrb[0].mxu0 %v713
    %v782 = vpop.f32.mrb[0].mxu0
    %v783 = vadd.f32 %v239, %v782
    %v784 = vpop.f32.mrb[0].mxu0
    %v785 = vpop.f32.mrb[0].mxu0
    %v786 = vadd.f32 %v239, %v785
    %v787 = vpop.f32.mrb[0].mxu0
    %788 = vmatprep.mubr.bf16.mxu0 0
    %789 = vmatmul.mubr.bf16.gmra.mrb[0].mxu0 %v716
    %v790 = vpop.f32.mrb[0].mxu0
    %v791 = vadd.f32 %v239, %v790
    %v792 = vpop.f32.mrb[0].mxu0
    %v793 = vpop.f32.mrb[0].mxu0
    %v794 = vadd.f32 %v239, %v793
    %v795 = vpop.f32.mrb[0].mxu0
    %796 = vmatprep.mubr.bf16.mxu0 0
    %797 = vmatmul.mubr.bf16.gmra.mrb[0].mxu0 %v719
    %v798 = vpop.f32.mrb[0].mxu0
    %v799 = vadd.f32 %v239, %v798
    %v800 = vpop.f32.mrb[0].mxu0
    %v801 = vpop.f32.mrb[0].mxu0
    %v802 = vadd.f32 %v239, %v801
    %v803 = vpop.f32.mrb[0].mxu0
    %804 = vmatprep.mubr.bf16.mxu0 0
    %805 = vmatmul.mubr.bf16.gmra.mrb[0].mxu0 %v722
    %v806 = vpop.f32.mrb[0].mxu0
    %v807 = vadd.f32 %v239, %v806
    %v808 = vpop.f32.mrb[0].mxu0
    %v809 = vpop.f32.mrb[0].mxu0
    %v810 = vadd.f32 %v239, %v809
    %v811 = vpop.f32.mrb[0].mxu0
    %812 = vmatprep.mubr.bf16.mxu0 0
    %813 = vmatmul.mubr.bf16.gmra.mrb[0].mxu0 %v725
    %v814 = vpop.f32.mrb[0].mxu0
    %v815 = vadd.f32 %v239, %v814
    %v816 = vpop.f32.mrb[0].mxu0
    %v817 = vpop.f32.mrb[0].mxu0
    %v818 = vadd.f32 %v239, %v817
    %v819 = vpop.f32.mrb[0].mxu0
    %820 = vmatprep.mubr.bf16.mxu0 0
    %821 = vmatmul.mubr.bf16.gmra.mrb[0].mxu0 %v728
    %v822 = vpop.f32.mrb[0].mxu0
    %v823 = vadd.f32 %v239, %v822
    %v824 = vpop.f32.mrb[0].mxu0
    %v825 = vpop.f32.mrb[0].mxu0
    %v826 = vadd.f32 %v239, %v825
    %v827 = vpop.f32.mrb[0].mxu0
    %828 = vmatprep.mubr.bf16.mxu0 0
    %829 = vmatmul.mubr.bf16.gmra.mrb[0].mxu0 %v731
    %v830 = vpop.f32.mrb[0].mxu0
    %v831 = vadd.f32 %v239, %v830
    %v832 = vpop.f32.mrb[0].mxu0
    %v833 = vpop.f32.mrb[0].mxu0
    %v834 = vadd.f32 %v239, %v833
    %v835 = vpop.f32.mrb[0].mxu0
    %836 = vdwg.mxu0
    %v837 = vmax.f32 %v775, 0.0
    %v838 = vmax.f32 %v778, 0.0
    %v839 = vmax.f32 %v783, 0.0
    %v840 = vmax.f32 %v786, 0.0
    %v841 = vmax.f32 %v791, 0.0
    %v842 = vmax.f32 %v794, 0.0
    %v843 = vmax.f32 %v799, 0.0
    %v844 = vmax.f32 %v802, 0.0
    %v845 = vmax.f32 %v807, 0.0
    %v846 = vmax.f32 %v810, 0.0
    %v847 = vmax.f32 %v815, 0.0
    %v848 = vmax.f32 %v818, 0.0
    %v849 = vmax.f32 %v823, 0.0
    %v850 = vmax.f32 %v826, 0.0
    %v851 = vmax.f32 %v831, 0.0
    %v852 = vmax.f32 %v834, 0.0
    %v869 = vcombine.high %v837, %v837
    %v871 = vunpack.c.l.s4 1983009808
    %v872 = vunpack.c.0.s8 %v871
    %v873 = vlaneseq
    %v874 = vshrl.u32 %v873, 7
    %v875 = vsub.s32 %v872, %v874
    %v876 = vrot.slane %v837, %v875
    %v878 = vunpack.c.l.s4 1983009808
    %v879 = vunpack.c.0.s8 %v878
    %v880 = vlaneseq
    %v881 = vshrl.u32 %v880, 7
    %v882 = vsub.s32 %v879, %v881
    %v883 = vrot.slane %v869, %v882
    %v884 = vcombine.high %v876, %v876
    %v885 = vcombine.high %v883, %v883
    %v886 = vcombine.high %v838, %v838
    %v888 = vunpack.c.l.s4 1983009808
    %v889 = vunpack.c.0.s8 %v888
    %v890 = vlaneseq
    %v891 = vshrl.u32 %v890, 7
    %v892 = vsub.s32 %v889, %v891
    %v893 = vrot.slane %v838, %v892
    %v895 = vunpack.c.l.s4 1983009808
    %v896 = vunpack.c.0.s8 %v895
    %v897 = vlaneseq
    %v898 = vshrl.u32 %v897, 7
    %v899 = vsub.s32 %v896, %v898
    %v900 = vrot.slane %v886, %v899
    %v901 = vcombine.high %v893, %v893
    %v902 = vcombine.high %v900, %v900
    %v903 = vcombine.high %v839, %v839
    %v905 = vunpack.c.l.s4 1983009808
    %v906 = vunpack.c.0.s8 %v905
    %v907 = vlaneseq
    %v908 = vshrl.u32 %v907, 7
    %v909 = vsub.s32 %v906, %v908
    %v910 = vrot.slane %v839, %v909
    %v912 = vunpack.c.l.s4 1983009808
    %v913 = vunpack.c.0.s8 %v912
    %v914 = vlaneseq
    %v915 = vshrl.u32 %v914, 7
    %v916 = vsub.s32 %v913, %v915
    %v917 = vrot.slane %v903, %v916
    %v918 = vcombine.high %v910, %v910
    %v919 = vcombine.high %v917, %v917
    %v920 = vcombine.high %v840, %v840
    %v922 = vunpack.c.l.s4 1983009808
    %v923 = vunpack.c.0.s8 %v922
    %v924 = vlaneseq
    %v925 = vshrl.u32 %v924, 7
    %v926 = vsub.s32 %v923, %v925
    %v927 = vrot.slane %v840, %v926
    %v929 = vunpack.c.l.s4 1983009808
    %v930 = vunpack.c.0.s8 %v929
    %v931 = vlaneseq
    %v932 = vshrl.u32 %v931, 7
    %v933 = vsub.s32 %v930, %v932
    %v934 = vrot.slane %v920, %v933
    %v935 = vcombine.high %v927, %v927
    %v936 = vcombine.high %v934, %v934
    %v937 = vcombine.high %v841, %v841
    %v939 = vunpack.c.l.s4 1983009808
    %v940 = vunpack.c.0.s8 %v939
    %v941 = vlaneseq
    %v942 = vshrl.u32 %v941, 7
    %v943 = vsub.s32 %v940, %v942
    %v944 = vrot.slane %v841, %v943
    %v946 = vunpack.c.l.s4 1983009808
    %v947 = vunpack.c.0.s8 %v946
    %v948 = vlaneseq
    %v949 = vshrl.u32 %v948, 7
    %v950 = vsub.s32 %v947, %v949
    %v951 = vrot.slane %v937, %v950
    %v952 = vcombine.high %v944, %v944
    %v953 = vcombine.high %v951, %v951
    %v954 = vcombine.high %v842, %v842
    %v956 = vunpack.c.l.s4 1983009808
    %v957 = vunpack.c.0.s8 %v956
    %v958 = vlaneseq
    %v959 = vshrl.u32 %v958, 7
    %v960 = vsub.s32 %v957, %v959
    %v961 = vrot.slane %v842, %v960
    %v963 = vunpack.c.l.s4 1983009808
    %v964 = vunpack.c.0.s8 %v963
    %v965 = vlaneseq
    %v966 = vshrl.u32 %v965, 7
    %v967 = vsub.s32 %v964, %v966
    %v968 = vrot.slane %v954, %v967
    %v969 = vcombine.high %v961, %v961
    %v970 = vcombine.high %v968, %v968
    %v971 = vcombine.high %v843, %v843
    %v973 = vunpack.c.l.s4 1983009808
    %v974 = vunpack.c.0.s8 %v973
    %v975 = vlaneseq
    %v976 = vshrl.u32 %v975, 7
    %v977 = vsub.s32 %v974, %v976
    %v978 = vrot.slane %v843, %v977
    %v980 = vunpack.c.l.s4 1983009808
    %v981 = vunpack.c.0.s8 %v980
    %v982 = vlaneseq
    %v983 = vshrl.u32 %v982, 7
    %v984 = vsub.s32 %v981, %v983
    %v985 = vrot.slane %v971, %v984
    %v986 = vcombine.high %v978, %v978
    %v987 = vcombine.high %v985, %v985
    %v988 = vcombine.high %v844, %v844
    %v990 = vunpack.c.l.s4 1983009808
    %v991 = vunpack.c.0.s8 %v990
    %v992 = vlaneseq
    %v993 = vshrl.u32 %v992, 7
    %v994 = vsub.s32 %v991, %v993
    %v995 = vrot.slane %v844, %v994
    %v997 = vunpack.c.l.s4 1983009808
    %v998 = vunpack.c.0.s8 %v997
    %v999 = vlaneseq
    %v1000 = vshrl.u32 %v999, 7
    %v1001 = vsub.s32 %v998, %v1000
    %v1002 = vrot.slane %v988, %v1001
    %v1003 = vcombine.high %v995, %v995
    %v1004 = vcombine.high %v1002, %v1002
    %v1005 = vcombine.high %v845, %v845
    %v1007 = vunpack.c.l.s4 1983009808
    %v1008 = vunpack.c.0.s8 %v1007
    %v1009 = vlaneseq
    %v1010 = vshrl.u32 %v1009, 7
    %v1011 = vsub.s32 %v1008, %v1010
    %v1012 = vrot.slane %v845, %v1011
    %v1014 = vunpack.c.l.s4 1983009808
    %v1015 = vunpack.c.0.s8 %v1014
    %v1016 = vlaneseq
    %v1017 = vshrl.u32 %v1016, 7
    %v1018 = vsub.s32 %v1015, %v1017
    %v1019 = vrot.slane %v1005, %v1018
    %v1020 = vcombine.high %v1012, %v1012
    %v1021 = vcombine.high %v1019, %v1019
    %v1022 = vcombine.high %v846, %v846
    %v1024 = vunpack.c.l.s4 1983009808
    %v1025 = vunpack.c.0.s8 %v1024
    %v1026 = vlaneseq
    %v1027 = vshrl.u32 %v1026, 7
    %v1028 = vsub.s32 %v1025, %v1027
    %v1029 = vrot.slane %v846, %v1028
    %v1031 = vunpack.c.l.s4 1983009808
    %v1032 = vunpack.c.0.s8 %v1031
    %v1033 = vlaneseq
    %v1034 = vshrl.u32 %v1033, 7
    %v1035 = vsub.s32 %v1032, %v1034
    %v1036 = vrot.slane %v1022, %v1035
    %v1037 = vcombine.high %v1029, %v1029
    %v1038 = vcombine.high %v1036, %v1036
    %v1039 = vcombine.high %v847, %v847
    %v1041 = vunpack.c.l.s4 1983009808
    %v1042 = vunpack.c.0.s8 %v1041
    %v1043 = vlaneseq
    %v1044 = vshrl.u32 %v1043, 7
    %v1045 = vsub.s32 %v1042, %v1044
    %v1046 = vrot.slane %v847, %v1045
    %v1048 = vunpack.c.l.s4 1983009808
    %v1049 = vunpack.c.0.s8 %v1048
    %v1050 = vlaneseq
    %v1051 = vshrl.u32 %v1050, 7
    %v1052 = vsub.s32 %v1049, %v1051
    %v1053 = vrot.slane %v1039, %v1052
    %v1054 = vcombine.high %v1046, %v1046
    %v1055 = vcombine.high %v1053, %v1053
    %v1056 = vcombine.high %v848, %v848
    %v1058 = vunpack.c.l.s4 1983009808
    %v1059 = vunpack.c.0.s8 %v1058
    %v1060 = vlaneseq
    %v1061 = vshrl.u32 %v1060, 7
    %v1062 = vsub.s32 %v1059, %v1061
    %v1063 = vrot.slane %v848, %v1062
    %v1065 = vunpack.c.l.s4 1983009808
    %v1066 = vunpack.c.0.s8 %v1065
    %v1067 = vlaneseq
    %v1068 = vshrl.u32 %v1067, 7
    %v1069 = vsub.s32 %v1066, %v1068
    %v1070 = vrot.slane %v1056, %v1069
    %v1071 = vcombine.high %v1063, %v1063
    %v1072 = vcombine.high %v1070, %v1070
    %v1073 = vcombine.high %v849, %v849
    %v1075 = vunpack.c.l.s4 1983009808
    %v1076 = vunpack.c.0.s8 %v1075
    %v1077 = vlaneseq
    %v1078 = vshrl.u32 %v1077, 7
    %v1079 = vsub.s32 %v1076, %v1078
    %v1080 = vrot.slane %v849, %v1079
    %v1082 = vunpack.c.l.s4 1983009808
    %v1083 = vunpack.c.0.s8 %v1082
    %v1084 = vlaneseq
    %v1085 = vshrl.u32 %v1084, 7
    %v1086 = vsub.s32 %v1083, %v1085
    %v1087 = vrot.slane %v1073, %v1086
    %v1088 = vcombine.high %v1080, %v1080
    %v1089 = vcombine.high %v1087, %v1087
    %v1090 = vcombine.high %v850, %v850
    %v1092 = vunpack.c.l.s4 1983009808
    %v1093 = vunpack.c.0.s8 %v1092
    %v1094 = vlaneseq
    %v1095 = vshrl.u32 %v1094, 7
    %v1096 = vsub.s32 %v1093, %v1095
    %v1097 = vrot.slane %v850, %v1096
    %v1099 = vunpack.c.l.s4 1983009808
    %v1100 = vunpack.c.0.s8 %v1099
    %v1101 = vlaneseq
    %v1102 = vshrl.u32 %v1101, 7
    %v1103 = vsub.s32 %v1100, %v1102
    %v1104 = vrot.slane %v1090, %v1103
    %v1105 = vcombine.high %v1097, %v1097
    %v1106 = vcombine.high %v1104, %v1104
    %v1107 = vcombine.high %v851, %v851
    %v1109 = vunpack.c.l.s4 1983009808
    %v1110 = vunpack.c.0.s8 %v1109
    %v1111 = vlaneseq
    %v1112 = vshrl.u32 %v1111, 7
    %v1113 = vsub.s32 %v1110, %v1112
    %v1114 = vrot.slane %v851, %v1113
    %v1116 = vunpack.c.l.s4 1983009808
    %v1117 = vunpack.c.0.s8 %v1116
    %v1118 = vlaneseq
    %v1119 = vshrl.u32 %v1118, 7
    %v1120 = vsub.s32 %v1117, %v1119
    %v1121 = vrot.slane %v1107, %v1120
    %v1122 = vcombine.high %v1114, %v1114
    %v1123 = vcombine.high %v1121, %v1121
    %v1124 = vcombine.high %v852, %v852
    %v1126 = vunpack.c.l.s4 1983009808
    %v1127 = vunpack.c.0.s8 %v1126
    %v1128 = vlaneseq
    %v1129 = vshrl.u32 %v1128, 7
    %v1130 = vsub.s32 %v1127, %v1129
    %v1131 = vrot.slane %v852, %v1130
    %v1133 = vunpack.c.l.s4 1983009808
    %v1134 = vunpack.c.0.s8 %v1133
    %v1135 = vlaneseq
    %v1136 = vshrl.u32 %v1135, 7
    %v1137 = vsub.s32 %v1134, %v1136
    %v1138 = vrot.slane %v1124, %v1137
    %v1139 = vcombine.high %v1131, %v1131
    %v1140 = vcombine.high %v1138, %v1138
    %vm1205 = vcmask 517120
    %v1206 = vsel %vm1205, %v876, -inf
    %v1207 = vsel %vm1205, %v910, -inf
    %v1208 = vmax.f32 %v1206, %v1207
    %v1209 = vsel %vm1205, %v884, -inf
    %v1210 = vsel %vm1205, %v918, -inf
    %v1211 = vmax.f32 %v1209, %v1210
    %v1212 = vsel %vm1205, %v883, -inf
    %v1213 = vsel %vm1205, %v917, -inf
    %v1214 = vmax.f32 %v1212, %v1213
    %v1215 = vsel %vm1205, %v885, -inf
    %v1216 = vsel %vm1205, %v919, -inf
    %v1217 = vmax.f32 %v1215, %v1216
    %v1218 = vsel %vm1205, %v893, -inf
    %v1219 = vsel %vm1205, %v927, -inf
    %v1220 = vmax.f32 %v1218, %v1219
    %v1221 = vsel %vm1205, %v901, -inf
    %v1222 = vsel %vm1205, %v935, -inf
    %v1223 = vmax.f32 %v1221, %v1222
    %v1224 = vsel %vm1205, %v900, -inf
    %v1225 = vsel %vm1205, %v934, -inf
    %v1226 = vmax.f32 %v1224, %v1225
    %v1227 = vsel %vm1205, %v902, -inf
    %v1228 = vsel %vm1205, %v936, -inf
    %v1229 = vmax.f32 %v1227, %v1228
    %v1230 = vsel %vm1205, %v944, -inf
    %v1231 = vsel %vm1205, %v978, -inf
    %v1232 = vmax.f32 %v1230, %v1231
    %v1233 = vsel %vm1205, %v952, -inf
    %v1234 = vsel %vm1205, %v986, -inf
    %v1235 = vmax.f32 %v1233, %v1234
    %v1236 = vsel %vm1205, %v951, -inf
    %v1237 = vsel %vm1205, %v985, -inf
    %v1238 = vmax.f32 %v1236, %v1237
    %v1239 = vsel %vm1205, %v953, -inf
    %v1240 = vsel %vm1205, %v987, -inf
    %v1241 = vmax.f32 %v1239, %v1240
    %v1242 = vsel %vm1205, %v961, -inf
    %v1243 = vsel %vm1205, %v995, -inf
    %v1244 = vmax.f32 %v1242, %v1243
    %v1245 = vsel %vm1205, %v969, -inf
    %v1246 = vsel %vm1205, %v1003, -inf
    %v1247 = vmax.f32 %v1245, %v1246
    %v1248 = vsel %vm1205, %v968, -inf
    %v1249 = vsel %vm1205, %v1002, -inf
    %v1250 = vmax.f32 %v1248, %v1249
    %v1251 = vsel %vm1205, %v970, -inf
    %v1252 = vsel %vm1205, %v1004, -inf
    %v1253 = vmax.f32 %v1251, %v1252
    %v1254 = vsel %vm1205, %v1012, -inf
    %v1255 = vsel %vm1205, %v1046, -inf
    %v1256 = vmax.f32 %v1254, %v1255
    %v1257 = vsel %vm1205, %v1020, -inf
    %v1258 = vsel %vm1205, %v1054, -inf
    %v1259 = vmax.f32 %v1257, %v1258
    %v1260 = vsel %vm1205, %v1019, -inf
    %v1261 = vsel %vm1205, %v1053, -inf
    %v1262 = vmax.f32 %v1260, %v1261
    %v1263 = vsel %vm1205, %v1021, -inf
    %v1264 = vsel %vm1205, %v1055, -inf
    %v1265 = vmax.f32 %v1263, %v1264
    %v1266 = vsel %vm1205, %v1029, -inf
    %v1267 = vsel %vm1205, %v1063, -inf
    %v1268 = vmax.f32 %v1266, %v1267
    %v1269 = vsel %vm1205, %v1037, -inf
    %v1270 = vsel %vm1205, %v1071, -inf
    %v1271 = vmax.f32 %v1269, %v1270
    %v1272 = vsel %vm1205, %v1036, -inf
    %v1273 = vsel %vm1205, %v1070, -inf
    %v1274 = vmax.f32 %v1272, %v1273
    %v1275 = vsel %vm1205, %v1038, -inf
    %v1276 = vsel %vm1205, %v1072, -inf
    %v1277 = vmax.f32 %v1275, %v1276
    %v1278 = vsel %vm1205, %v1080, -inf
    %v1279 = vsel %vm1205, %v1114, -inf
    %v1280 = vmax.f32 %v1278, %v1279
    %v1281 = vsel %vm1205, %v1088, -inf
    %v1282 = vsel %vm1205, %v1122, -inf
    %v1283 = vmax.f32 %v1281, %v1282
    %v1284 = vsel %vm1205, %v1087, -inf
    %v1285 = vsel %vm1205, %v1121, -inf
    %v1286 = vmax.f32 %v1284, %v1285
    %v1287 = vsel %vm1205, %v1089, -inf
    %v1288 = vsel %vm1205, %v1123, -inf
    %v1289 = vmax.f32 %v1287, %v1288
    %v1290 = vsel %vm1205, %v1097, -inf
    %v1291 = vsel %vm1205, %v1131, -inf
    %v1292 = vmax.f32 %v1290, %v1291
    %v1293 = vsel %vm1205, %v1105, -inf
    %v1294 = vsel %vm1205, %v1139, -inf
    %v1295 = vmax.f32 %v1293, %v1294
    %v1296 = vsel %vm1205, %v1104, -inf
    %v1297 = vsel %vm1205, %v1138, -inf
    %v1298 = vmax.f32 %v1296, %v1297
    %v1299 = vsel %vm1205, %v1106, -inf
    %v1300 = vsel %vm1205, %v1140, -inf
    %v1301 = vmax.f32 %v1299, %v1300
    %v1302 = vsel %vm1205, %v1208, -inf
    %v1303 = vsel %vm1205, %v1211, -inf
    %v1304 = vmax.f32 %v1302, %v1303
    %v1305 = vsel %vm1205, %v1214, -inf
    %v1306 = vsel %vm1205, %v1217, -inf
    %v1307 = vmax.f32 %v1305, %v1306
    %v1308 = vsel %vm1205, %v1220, -inf
    %v1309 = vsel %vm1205, %v1223, -inf
    %v1310 = vmax.f32 %v1308, %v1309
    %v1311 = vsel %vm1205, %v1226, -inf
    %v1312 = vsel %vm1205, %v1229, -inf
    %v1313 = vmax.f32 %v1311, %v1312
    %v1314 = vsel %vm1205, %v1232, -inf
    %v1315 = vsel %vm1205, %v1235, -inf
    %v1316 = vmax.f32 %v1314, %v1315
    %v1317 = vsel %vm1205, %v1238, -inf
    %v1318 = vsel %vm1205, %v1241, -inf
    %v1319 = vmax.f32 %v1317, %v1318
    %v1320 = vsel %vm1205, %v1244, -inf
    %v1321 = vsel %vm1205, %v1247, -inf
    %v1322 = vmax.f32 %v1320, %v1321
    %v1323 = vsel %vm1205, %v1250, -inf
    %v1324 = vsel %vm1205, %v1253, -inf
    %v1325 = vmax.f32 %v1323, %v1324
    %v1326 = vsel %vm1205, %v1256, -inf
    %v1327 = vsel %vm1205, %v1259, -inf
    %v1328 = vmax.f32 %v1326, %v1327
    %v1329 = vsel %vm1205, %v1262, -inf
    %v1330 = vsel %vm1205, %v1265, -inf
    %v1331 = vmax.f32 %v1329, %v1330
    %v1332 = vsel %vm1205, %v1268, -inf
    %v1333 = vsel %vm1205, %v1271, -inf
    %v1334 = vmax.f32 %v1332, %v1333
    %v1335 = vsel %vm1205, %v1274, -inf
    %v1336 = vsel %vm1205, %v1277, -inf
    %v1337 = vmax.f32 %v1335, %v1336
    %v1338 = vsel %vm1205, %v1280, -inf
    %v1339 = vsel %vm1205, %v1283, -inf
    %v1340 = vmax.f32 %v1338, %v1339
    %v1341 = vsel %vm1205, %v1286, -inf
    %v1342 = vsel %vm1205, %v1289, -inf
    %v1343 = vmax.f32 %v1341, %v1342
    %v1344 = vsel %vm1205, %v1292, -inf
    %v1345 = vsel %vm1205, %v1295, -inf
    %v1346 = vmax.f32 %v1344, %v1345
    %v1347 = vsel %vm1205, %v1298, -inf
    %v1348 = vsel %vm1205, %v1301, -inf
    %v1349 = vmax.f32 %v1347, %v1348
    %vm1350 = vcmask 516096
    %1351 = vst.msk [vmem:[#allocation2] sm:$0x1] %vm1350, 0
    %1352 = vst.msk [vmem:[#allocation2 + $0x1] sm:$0x1] %vm1350, 0
    %1353 = vst.msk [vmem:[#allocation2 + $0x2] sm:$0x1] %vm1350, 0
    %1354 = vst.msk [vmem:[#allocation2 + $0x3] sm:$0x1] %vm1350, 0
    %1355 = vst.msk [vmem:[#allocation2 + $0x4] sm:$0x1] %vm1350, 0
    %1356 = vst.msk [vmem:[#allocation2 + $0x5] sm:$0x1] %vm1350, 0
    %1357 = vst.msk [vmem:[#allocation2 + $0x6] sm:$0x1] %vm1350, 0
    %1358 = vst.msk [vmem:[#allocation2 + $0x7] sm:$0x1] %vm1350, 0
    %1359 = vst.msk [vmem:[#allocation2 + $0x8] sm:$0x1] %vm1350, 0
    %1360 = vst.msk [vmem:[#allocation2 + $0x9] sm:$0x1] %vm1350, 0
    %1361 = vst.msk [vmem:[#allocation2 + $0xa] sm:$0x1] %vm1350, 0
    %1362 = vst.msk [vmem:[#allocation2 + $0xb] sm:$0x1] %vm1350, 0
    %1363 = vst.msk [vmem:[#allocation2 + $0xc] sm:$0x1] %vm1350, 0
    %1364 = vst.msk [vmem:[#allocation2 + $0xd] sm:$0x1] %vm1350, 0
    %1365 = vst.msk [vmem:[#allocation2 + $0xe] sm:$0x1] %vm1350, 0
    %1366 = vst.msk [vmem:[#allocation2 + $0xf] sm:$0x1] %vm1350, 0
    %1367 = vst.msk [vmem:[#allocation2 + $0x10] sm:$0x1] %vm1350, 0
    %1368 = vst.msk [vmem:[#allocation2 + $0x11] sm:$0x1] %vm1350, 0
    %1369 = vst.msk [vmem:[#allocation2 + $0x12] sm:$0x1] %vm1350, 0
    %1370 = vst.msk [vmem:[#allocation2 + $0x13] sm:$0x1] %vm1350, 0
    %1371 = vst.msk [vmem:[#allocation2 + $0x14] sm:$0x1] %vm1350, 0
    %1372 = vst.msk [vmem:[#allocation2 + $0x15] sm:$0x1] %vm1350, 0
    %1373 = vst.msk [vmem:[#allocation2 + $0x16] sm:$0x1] %vm1350, 0
    %1374 = vst.msk [vmem:[#allocation2 + $0x17] sm:$0x1] %vm1350, 0
    %1375 = vst.msk [vmem:[#allocation2 + $0x18] sm:$0x1] %vm1350, 0
    %1376 = vst.msk [vmem:[#allocation2 + $0x19] sm:$0x1] %vm1350, 0
    %1377 = vst.msk [vmem:[#allocation2 + $0x1a] sm:$0x1] %vm1350, 0
    %1378 = vst.msk [vmem:[#allocation2 + $0x1b] sm:$0x1] %vm1350, 0
    %1379 = vst.msk [vmem:[#allocation2 + $0x1c] sm:$0x1] %vm1350, 0
    %1380 = vst.msk [vmem:[#allocation2 + $0x1d] sm:$0x1] %vm1350, 0
    %1381 = vst.msk [vmem:[#allocation2 + $0x1e] sm:$0x1] %vm1350, 0
    %1382 = vst.msk [vmem:[#allocation2 + $0x1f] sm:$0x1] %vm1350, 0
    %1383 = vst.msk [vmem:[#allocation2 + $0x20] sm:$0x1] %vm1350, 0
    %1384 = vst.msk [vmem:[#allocation2 + $0x21] sm:$0x1] %vm1350, 0
    %1385 = vst.msk [vmem:[#allocation2 + $0x22] sm:$0x1] %vm1350, 0
    %1386 = vst.msk [vmem:[#allocation2 + $0x23] sm:$0x1] %vm1350, 0
    %v1387 = vpack.c.bf16 %v1304, %v1304
    %v1388 = vpack.c.bf16 %v1307, %v1307
    %v1389 = vpack.c.bf16 %v1310, %v1310
    %v1390 = vpack.c.bf16 %v1313, %v1313
    %v1391 = vpack.c.bf16 %v1316, %v1316
    %v1392 = vpack.c.bf16 %v1319, %v1319
    %v1393 = vpack.c.bf16 %v1322, %v1322
    %v1394 = vpack.c.bf16 %v1325, %v1325
    %v1395 = vpack.c.bf16 %v1328, %v1328
    %v1396 = vpack.c.bf16 %v1331, %v1331
    %v1397 = vpack.c.bf16 %v1334, %v1334
    %v1398 = vpack.c.bf16 %v1337, %v1337
    %v1399 = vpack.c.bf16 %v1340, %v1340
    %v1400 = vpack.c.bf16 %v1343, %v1343
    %v1401 = vpack.c.bf16 %v1346, %v1346
    %v1402 = vpack.c.bf16 %v1349, %v1349
    %s1403 = scalar_lea.vmem [#allocation2], 7
    %1404 = vst.msk [vmem:[%s1403] sm:$0x1] %vm1350, %v1387
    %1405 = vst.msk [vmem:[%s1403 + $0x1] sm:$0x1] %vm1350, %v1388
    %1406 = vst.msk [vmem:[%s1403 + $0x2] sm:$0x1] %vm1350, %v1389
    %1407 = vst.msk [vmem:[%s1403 + $0x3] sm:$0x1] %vm1350, %v1390
    %1408 = vst.msk [vmem:[%s1403 + $0x6] sm:$0x1] %vm1350, %v1391
    %1409 = vst.msk [vmem:[%s1403 + $0x7] sm:$0x1] %vm1350, %v1392
    %1410 = vst.msk [vmem:[%s1403 + $0x8] sm:$0x1] %vm1350, %v1393
    %1411 = vst.msk [vmem:[%s1403 + $0x9] sm:$0x1] %vm1350, %v1394
    %1412 = vst.msk [vmem:[%s1403 + $0xc] sm:$0x1] %vm1350, %v1395
    %1413 = vst.msk [vmem:[%s1403 + $0xd] sm:$0x1] %vm1350, %v1396
    %1414 = vst.msk [vmem:[%s1403 + $0xe] sm:$0x1] %vm1350, %v1397
    %1415 = vst.msk [vmem:[%s1403 + $0xf] sm:$0x1] %vm1350, %v1398
    %1416 = vst.msk [vmem:[%s1403 + $0x12] sm:$0x1] %vm1350, %v1399
    %1417 = vst.msk [vmem:[%s1403 + $0x13] sm:$0x1] %vm1350, %v1400
    %1418 = vst.msk [vmem:[%s1403 + $0x14] sm:$0x1] %vm1350, %v1401
    %1419 = vst.msk [vmem:[%s1403 + $0x15] sm:$0x1] %vm1350, %v1402
    %v1420 = vld [vmem:[#allocation2] sm:$0x1]
    %v1421 = vld [vmem:[#allocation2 + $0x1] sm:$0x1]
    %v1422 = vld [vmem:[#allocation2 + $0x2] sm:$0x1]
    %v1423 = vld [vmem:[#allocation2 + $0x3] sm:$0x1]
    %v1424 = vld [vmem:[#allocation2 + $0x6] sm:$0x1]
    %v1425 = vld [vmem:[#allocation2 + $0x7] sm:$0x1]
    %v1426 = vld [vmem:[#allocation2 + $0x8] sm:$0x1]
    %v1427 = vld [vmem:[#allocation2 + $0x9] sm:$0x1]
    %v1428 = vld [vmem:[#allocation2 + $0xc] sm:$0x1]
    %v1429 = vld [vmem:[#allocation2 + $0xd] sm:$0x1]
    %v1430 = vld [vmem:[#allocation2 + $0xe] sm:$0x1]
    %v1431 = vld [vmem:[#allocation2 + $0xf] sm:$0x1]
    %v1432 = vld [vmem:[#allocation2 + $0x12] sm:$0x1]
    %v1433 = vld [vmem:[#allocation2 + $0x13] sm:$0x1]
    %v1434 = vld [vmem:[#allocation2 + $0x14] sm:$0x1]
    %v1435 = vld [vmem:[#allocation2 + $0x15] sm:$0x1]
    %v1436 = vld [vmem:[#allocation9] sm:$0xf]
    %v1437 = vld [vmem:[#allocation9 + $0x4] sm:$0xf]
    %v1438 = vld [vmem:[#allocation9 + $0x8] sm:$0xf]
    %v1439 = vld [vmem:[#allocation9 + $0xc] sm:$0xf]
    %v1440 = vld [vmem:[#allocation9 + $0x10] sm:$0xf]
    %v1441 = vld [vmem:[#allocation9 + $0x14] sm:$0xf]
    %v1442 = vld [vmem:[#allocation9 + $0x18] sm:$0xf]
    %v1443 = vld [vmem:[#allocation9 + $0x1c] sm:$0xf]
    %s1444 = scalar_lea.vmem [#allocation2], 1
    %v1445 = vld [vmem:[%s1444] sm:$0x1]
    %v1446 = vld [vmem:[%s1444 + $0x1] sm:$0x1]
    %v1447 = vld [vmem:[%s1444 + $0x2] sm:$0x1]
    %v1448 = vld [vmem:[%s1444 + $0x3] sm:$0x1]
    %v1449 = vld [vmem:[%s1444 + $0x6] sm:$0x1]
    %v1450 = vld [vmem:[%s1444 + $0x7] sm:$0x1]
    %v1451 = vld [vmem:[%s1444 + $0x8] sm:$0x1]
    %v1452 = vld [vmem:[%s1444 + $0x9] sm:$0x1]
    %v1453 = vld [vmem:[%s1444 + $0xc] sm:$0x1]
    %v1454 = vld [vmem:[%s1444 + $0xd] sm:$0x1]
    %v1455 = vld [vmem:[%s1444 + $0xe] sm:$0x1]
    %v1456 = vld [vmem:[%s1444 + $0xf] sm:$0x1]
    %v1457 = vld [vmem:[%s1444 + $0x12] sm:$0x1]
    %v1458 = vld [vmem:[%s1444 + $0x13] sm:$0x1]
    %v1459 = vld [vmem:[%s1444 + $0x14] sm:$0x1]
    %v1460 = vld [vmem:[%s1444 + $0x15] sm:$0x1]
    %v1461 = vld [vmem:[#allocation9 + $0x20] sm:$0xf]
    %v1462 = vld [vmem:[#allocation9 + $0x24] sm:$0xf]
    %v1463 = vld [vmem:[#allocation9 + $0x28] sm:$0xf]
    %v1464 = vld [vmem:[#allocation9 + $0x2c] sm:$0xf]
    %v1465 = vld [vmem:[#allocation9 + $0x30] sm:$0xf]
    %v1466 = vld [vmem:[#allocation9 + $0x34] sm:$0xf]
    %v1467 = vld [vmem:[#allocation9 + $0x38] sm:$0xf]
    %v1468 = vld [vmem:[#allocation9 + $0x3c] sm:$0xf]
    %v1485 = vcombine.low %v1445, %v1446
    %v1486 = vcombine.low %v1447, %v1448
    %v1487 = vcombine.low %v1449, %v1450
    %v1488 = vcombine.low %v1451, %v1452
    %v1490 = vunpack.c.l.s4 1966171168
    %v1491 = vunpack.c.0.s8 %v1490
    %v1492 = vlaneseq
    %v1493 = vshrl.u32 %v1492, 7
    %v1494 = vsub.s32 %v1491, %v1493
    %v1495 = vrot.slane %v1485, %v1494
    %v1497 = vunpack.c.l.s4 1966171168
    %v1498 = vunpack.c.0.s8 %v1497
    %v1499 = vlaneseq
    %v1500 = vshrl.u32 %v1499, 7
    %v1501 = vsub.s32 %v1498, %v1500
    %v1502 = vrot.slane %v1486, %v1501
    %v1504 = vunpack.c.l.s4 1966171168
    %v1505 = vunpack.c.0.s8 %v1504
    %v1506 = vlaneseq
    %v1507 = vshrl.u32 %v1506, 7
    %v1508 = vsub.s32 %v1505, %v1507
    %v1509 = vrot.slane %v1487, %v1508
    %v1511 = vunpack.c.l.s4 1966171168
    %v1512 = vunpack.c.0.s8 %v1511
    %v1513 = vlaneseq
    %v1514 = vshrl.u32 %v1513, 7
    %v1515 = vsub.s32 %v1512, %v1514
    %v1516 = vrot.slane %v1488, %v1515
    %v1517 = vcombine.low %v1495, %v1502
    %v1518 = vcombine.low %v1509, %v1516
    %v1520 = vunpack.c.l.s4 1966171168
    %v1521 = vunpack.c.0.s8 %v1520
    %v1522 = vlaneseq
    %v1523 = vshrl.u32 %v1522, 7
    %v1524 = vsub.s32 %v1521, %v1523
    %v1525 = vrot.slane %v1517, %v1524
    %v1527 = vunpack.c.l.s4 1966171168
    %v1528 = vunpack.c.0.s8 %v1527
    %v1529 = vlaneseq
    %v1530 = vshrl.u32 %v1529, 7
    %v1531 = vsub.s32 %v1528, %v1530
    %v1532 = vrot.slane %v1518, %v1531
    %v1533 = vcombine.low %v1525, %v1532
    %v1534 = vcombine.low %v1453, %v1454
    %v1535 = vcombine.low %v1455, %v1456
    %v1536 = vcombine.low %v1457, %v1458
    %v1537 = vcombine.low %v1459, %v1460
    %v1539 = vunpack.c.l.s4 1966171168
    %v1540 = vunpack.c.0.s8 %v1539
    %v1541 = vlaneseq
    %v1542 = vshrl.u32 %v1541, 7
    %v1543 = vsub.s32 %v1540, %v1542
    %v1544 = vrot.slane %v1534, %v1543
    %v1546 = vunpack.c.l.s4 1966171168
    %v1547 = vunpack.c.0.s8 %v1546
    %v1548 = vlaneseq
    %v1549 = vshrl.u32 %v1548, 7
    %v1550 = vsub.s32 %v1547, %v1549
    %v1551 = vrot.slane %v1535, %v1550
    %v1553 = vunpack.c.l.s4 1966171168
    %v1554 = vunpack.c.0.s8 %v1553
    %v1555 = vlaneseq
    %v1556 = vshrl.u32 %v1555, 7
    %v1557 = vsub.s32 %v1554, %v1556
    %v1558 = vrot.slane %v1536, %v1557
    %v1560 = vunpack.c.l.s4 1966171168
    %v1561 = vunpack.c.0.s8 %v1560
    %v1562 = vlaneseq
    %v1563 = vshrl.u32 %v1562, 7
    %v1564 = vsub.s32 %v1561, %v1563
    %v1565 = vrot.slane %v1537, %v1564
    %v1566 = vcombine.low %v1544, %v1551
    %v1567 = vcombine.low %v1558, %v1565
    %v1569 = vunpack.c.l.s4 1966171168
    %v1570 = vunpack.c.0.s8 %v1569
    %v1571 = vlaneseq
    %v1572 = vshrl.u32 %v1571, 7
    %v1573 = vsub.s32 %v1570, %v1572
    %v1574 = vrot.slane %v1566, %v1573
    %v1576 = vunpack.c.l.s4 1966171168
    %v1577 = vunpack.c.0.s8 %v1576
    %v1578 = vlaneseq
    %v1579 = vshrl.u32 %v1578, 7
    %v1580 = vsub.s32 %v1577, %v1579
    %v1581 = vrot.slane %v1567, %v1580
    %v1582 = vcombine.low %v1574, %v1581
    %v1591 = vunpack.c.l.b16 %v1461
    %v1592 = vunpack.c.l.b16 %v1462
    %v1593 = vunpack.c.l.b16 %v1463
    %v1594 = vunpack.c.l.b16 %v1464
    %v1595 = vunpack.c.l.b16 %v1465
    %v1596 = vunpack.c.l.b16 %v1466
    %v1597 = vunpack.c.l.b16 %v1467
    %v1598 = vunpack.c.l.b16 %v1468
    %v1599 = vpack.c.b16 %v1592, %v1591
    %v1600 = vpack.c.b16 %v1594, %v1593
    %v1601 = vpack.c.b16 %v1596, %v1595
    %v1602 = vpack.c.b16 %v1598, %v1597
    %vm1607 = vcmask 523264
    %v1609 = vsel %vm1607, %v1533, 0
    %v1612 = vsel %vm1607, %v1582, 0
    %1614 = vmatprep.subr.bf16.mxu0 0
    %1615 = vmatpush1.bf16.msra.mxu0 %v1599
    %1616 = vmatprep.subr.bf16.mxu0 0
    %1617 = vmatpush1.bf16.msra.mxu0 %v1600
    %1618 = vmatprep.subr.bf16.mxu0 0
    %1619 = vmatpush1.bf16.msra.mxu0 %v1601
    %1620 = vmatprep.subr.bf16.mxu0 0
    %1621 = vmatpush1.bf16.msra.mxu0 %v1602
    %1622 = vmatprep.subr.bf16.mxu0 0
    %1623 = vmatpush1.bf16.msra.mxu0 0
    %1624 = vmatprep.subr.bf16.mxu0 0
    %1625 = vmatpush1.bf16.msra.mxu0 0
    %1626 = vmatprep.subr.bf16.mxu0 0
    %1627 = vmatpush1.bf16.msra.mxu0 0
    %1628 = vmatprep.subr.bf16.mxu0 0
    %1629 = vmatpush1.bf16.msra.mxu0 0
    %1630 = vmatprep.subr.bf16.mxu0 0
    %1631 = vmatpush1.bf16.msra.mxu0 0
    %1632 = vmatprep.subr.bf16.mxu0 0
    %1633 = vmatpush1.bf16.msra.mxu0 0
    %1634 = vmatprep.subr.bf16.mxu0 0
    %1635 = vmatpush1.bf16.msra.mxu0 0
    %1636 = vmatprep.subr.bf16.mxu0 0
    %1637 = vmatpush1.bf16.msra.mxu0 0
    %1638 = vmatprep.subr.bf16.mxu0 0
    %1639 = vmatpush1.bf16.msra.mxu0 0
    %1640 = vmatprep.subr.bf16.mxu0 0
    %1641 = vmatpush1.bf16.msra.mxu0 0
    %1642 = vmatprep.subr.bf16.mxu0 0
    %1643 = vmatpush1.bf16.msra.mxu0 0
    %1644 = vmatprep.subr.bf16.mxu0 0
    %1645 = vmatpush1.bf16.msra.mxu0 0
    %1646 = vmatprep.mubr.bf16.mxu0 0
    %1647 = vmatmul.mubr.bf16.gmra.mrb[0].mxu0 %v1609
    %v1648 = vpop.f32.mrb[0].mxu0
    %v1649 = vadd.f32 0.0, %v1648
    %v1650 = vpop.f32.mrb[0].mxu0
    %v1651 = vpop.f32.mrb[0].mxu0
    %v1652 = vadd.f32 0.0, %v1651
    %v1653 = vpop.f32.mrb[0].mxu0
    %1654 = vmatprep.mubr.bf16.mxu0 0
    %1655 = vmatmul.mubr.bf16.gmra.mrb[0].mxu0 %v1612
    %v1656 = vpop.f32.mrb[0].mxu0
    %v1657 = vadd.f32 0.0, %v1656
    %v1658 = vpop.f32.mrb[0].mxu0
    %v1659 = vpop.f32.mrb[0].mxu0
    %v1660 = vadd.f32 0.0, %v1659
    %v1661 = vpop.f32.mrb[0].mxu0
    %1662 = vdwg.mxu0
    %v1679 = vcombine.low %v1420, %v1421
    %v1680 = vcombine.low %v1422, %v1423
    %v1681 = vcombine.low %v1424, %v1425
    %v1682 = vcombine.low %v1426, %v1427
    %v1684 = vunpack.c.l.s4 1966171168
    %v1685 = vunpack.c.0.s8 %v1684
    %v1686 = vlaneseq
    %v1687 = vshrl.u32 %v1686, 7
    %v1688 = vsub.s32 %v1685, %v1687
    %v1689 = vrot.slane %v1679, %v1688
    %v1691 = vunpack.c.l.s4 1966171168
    %v1692 = vunpack.c.0.s8 %v1691
    %v1693 = vlaneseq
    %v1694 = vshrl.u32 %v1693, 7
    %v1695 = vsub.s32 %v1692, %v1694
    %v1696 = vrot.slane %v1680, %v1695
    %v1698 = vunpack.c.l.s4 1966171168
    %v1699 = vunpack.c.0.s8 %v1698
    %v1700 = vlaneseq
    %v1701 = vshrl.u32 %v1700, 7
    %v1702 = vsub.s32 %v1699, %v1701
    %v1703 = vrot.slane %v1681, %v1702
    %v1705 = vunpack.c.l.s4 1966171168
    %v1706 = vunpack.c.0.s8 %v1705
    %v1707 = vlaneseq
    %v1708 = vshrl.u32 %v1707, 7
    %v1709 = vsub.s32 %v1706, %v1708
    %v1710 = vrot.slane %v1682, %v1709
    %v1711 = vcombine.low %v1689, %v1696
    %v1712 = vcombine.low %v1703, %v1710
    %v1714 = vunpack.c.l.s4 1966171168
    %v1715 = vunpack.c.0.s8 %v1714
    %v1716 = vlaneseq
    %v1717 = vshrl.u32 %v1716, 7
    %v1718 = vsub.s32 %v1715, %v1717
    %v1719 = vrot.slane %v1711, %v1718
    %v1721 = vunpack.c.l.s4 1966171168
    %v1722 = vunpack.c.0.s8 %v1721
    %v1723 = vlaneseq
    %v1724 = vshrl.u32 %v1723, 7
    %v1725 = vsub.s32 %v1722, %v1724
    %v1726 = vrot.slane %v1712, %v1725
    %v1727 = vcombine.low %v1719, %v1726
    %v1728 = vcombine.low %v1428, %v1429
    %v1729 = vcombine.low %v1430, %v1431
    %v1730 = vcombine.low %v1432, %v1433
    %v1731 = vcombine.low %v1434, %v1435
    %v1733 = vunpack.c.l.s4 1966171168
    %v1734 = vunpack.c.0.s8 %v1733
    %v1735 = vlaneseq
    %v1736 = vshrl.u32 %v1735, 7
    %v1737 = vsub.s32 %v1734, %v1736
    %v1738 = vrot.slane %v1728, %v1737
    %v1740 = vunpack.c.l.s4 1966171168
    %v1741 = vunpack.c.0.s8 %v1740
    %v1742 = vlaneseq
    %v1743 = vshrl.u32 %v1742, 7
    %v1744 = vsub.s32 %v1741, %v1743
    %v1745 = vrot.slane %v1729, %v1744
    %v1747 = vunpack.c.l.s4 1966171168
    %v1748 = vunpack.c.0.s8 %v1747
    %v1749 = vlaneseq
    %v1750 = vshrl.u32 %v1749, 7
    %v1751 = vsub.s32 %v1748, %v1750
    %v1752 = vrot.slane %v1730, %v1751
    %v1754 = vunpack.c.l.s4 1966171168
    %v1755 = vunpack.c.0.s8 %v1754
    %v1756 = vlaneseq
    %v1757 = vshrl.u32 %v1756, 7
    %v1758 = vsub.s32 %v1755, %v1757
    %v1759 = vrot.slane %v1731, %v1758
    %v1760 = vcombine.low %v1738, %v1745
    %v1761 = vcombine.low %v1752, %v1759
    %v1763 = vunpack.c.l.s4 1966171168
    %v1764 = vunpack.c.0.s8 %v1763
    %v1765 = vlaneseq
    %v1766 = vshrl.u32 %v1765, 7
    %v1767 = vsub.s32 %v1764, %v1766
    %v1768 = vrot.slane %v1760, %v1767
    %v1770 = vunpack.c.l.s4 1966171168
    %v1771 = vunpack.c.0.s8 %v1770
    %v1772 = vlaneseq
    %v1773 = vshrl.u32 %v1772, 7
    %v1774 = vsub.s32 %v1771, %v1773
    %v1775 = vrot.slane %v1761, %v1774
    %v1776 = vcombine.low %v1768, %v1775
    %v1785 = vunpack.c.l.b16 %v1436
    %v1786 = vunpack.c.l.b16 %v1437
    %v1787 = vunpack.c.l.b16 %v1438
    %v1788 = vunpack.c.l.b16 %v1439
    %v1789 = vunpack.c.l.b16 %v1440
    %v1790 = vunpack.c.l.b16 %v1441
    %v1791 = vunpack.c.l.b16 %v1442
    %v1792 = vunpack.c.l.b16 %v1443
    %v1793 = vpack.c.b16 %v1786, %v1785
    %v1794 = vpack.c.b16 %v1788, %v1787
    %v1795 = vpack.c.b16 %v1790, %v1789
    %v1796 = vpack.c.b16 %v1792, %v1791
    %v1802 = vsel %vm1607, %v1727, 0
    %v1805 = vsel %vm1607, %v1776, 0
    %1807 = vmatprep.subr.bf16.mxu0 0
    %1808 = vmatpush1.bf16.msra.mxu0 %v1793
    %1809 = vmatprep.subr.bf16.mxu0 0
    %1810 = vmatpush1.bf16.msra.mxu0 %v1794
    %1811 = vmatprep.subr.bf16.mxu0 0
    %1812 = vmatpush1.bf16.msra.mxu0 %v1795
    %1813 = vmatprep.subr.bf16.mxu0 0
    %1814 = vmatpush1.bf16.msra.mxu0 %v1796
    %1815 = vmatprep.subr.bf16.mxu0 0
    %1816 = vmatpush1.bf16.msra.mxu0 0
    %1817 = vmatprep.subr.bf16.mxu0 0
    %1818 = vmatpush1.bf16.msra.mxu0 0
    %1819 = vmatprep.subr.bf16.mxu0 0
    %1820 = vmatpush1.bf16.msra.mxu0 0
    %1821 = vmatprep.subr.bf16.mxu0 0
    %1822 = vmatpush1.bf16.msra.mxu0 0
    %1823 = vmatprep.subr.bf16.mxu0 0
    %1824 = vmatpush1.bf16.msra.mxu0 0
    %1825 = vmatprep.subr.bf16.mxu0 0
    %1826 = vmatpush1.bf16.msra.mxu0 0
    %1827 = vmatprep.subr.bf16.mxu0 0
    %1828 = vmatpush1.bf16.msra.mxu0 0
    %1829 = vmatprep.subr.bf16.mxu0 0
    %1830 = vmatpush1.bf16.msra.mxu0 0
    %1831 = vmatprep.subr.bf16.mxu0 0
    %1832 = vmatpush1.bf16.msra.mxu0 0
    %1833 = vmatprep.subr.bf16.mxu0 0
    %1834 = vmatpush1.bf16.msra.mxu0 0
    %1835 = vmatprep.subr.bf16.mxu0 0
    %1836 = vmatpush1.bf16.msra.mxu0 0
    %1837 = vmatprep.subr.bf16.mxu0 0
    %1838 = vmatpush1.bf16.msra.mxu0 0
    %1839 = vmatprep.mubr.bf16.mxu0 0
    %1840 = vmatmul.mubr.bf16.gmra.mrb[0].mxu0 %v1802
    %v1841 = vpop.f32.mrb[0].mxu0
    %v1842 = vadd.f32 %v1649, %v1841
    %v1843 = vpop.f32.mrb[0].mxu0
    %v1844 = vpop.f32.mrb[0].mxu0
    %v1845 = vadd.f32 %v1652, %v1844
    %v1846 = vpop.f32.mrb[0].mxu0
    %1847 = vmatprep.mubr.bf16.mxu0 0
    %1848 = vmatmul.mubr.bf16.gmra.mrb[0].mxu0 %v1805
    %v1849 = vpop.f32.mrb[0].mxu0
    %v1850 = vadd.f32 %v1657, %v1849
    %v1851 = vpop.f32.mrb[0].mxu0
    %v1852 = vpop.f32.mrb[0].mxu0
    %v1853 = vadd.f32 %v1660, %v1852
    %v1854 = vpop.f32.mrb[0].mxu0
    %1855 = vdwg.mxu0
    %s1856 = scalar_lea.vmem [#allocation2], 2
    %v1857 = vld [vmem:[%s1856] sm:$0x1]
    %v1858 = vld [vmem:[%s1856 + $0x1] sm:$0x1]
    %v1859 = vld [vmem:[%s1856 + $0x2] sm:$0x1]
    %v1860 = vld [vmem:[%s1856 + $0x3] sm:$0x1]
    %v1861 = vld [vmem:[%s1856 + $0x6] sm:$0x1]
    %v1862 = vld [vmem:[%s1856 + $0x7] sm:$0x1]
    %v1863 = vld [vmem:[%s1856 + $0x8] sm:$0x1]
    %v1864 = vld [vmem:[%s1856 + $0x9] sm:$0x1]
    %v1865 = vld [vmem:[%s1856 + $0xc] sm:$0x1]
    %v1866 = vld [vmem:[%s1856 + $0xd] sm:$0x1]
    %v1867 = vld [vmem:[%s1856 + $0xe] sm:$0x1]
    %v1868 = vld [vmem:[%s1856 + $0xf] sm:$0x1]
    %v1869 = vld [vmem:[%s1856 + $0x12] sm:$0x1]
    %v1870 = vld [vmem:[%s1856 + $0x13] sm:$0x1]
    %v1871 = vld [vmem:[%s1856 + $0x14] sm:$0x1]
    %v1872 = vld [vmem:[%s1856 + $0x15] sm:$0x1]
    %v1873 = vld [vmem:[#allocation9 + $0x40] sm:$0xf]
    %v1874 = vld [vmem:[#allocation9 + $0x44] sm:$0xf]
    %v1875 = vld [vmem:[#allocation9 + $0x48] sm:$0xf]
    %v1876 = vld [vmem:[#allocation9 + $0x4c] sm:$0xf]
    %v1877 = vld [vmem:[#allocation9 + $0x50] sm:$0xf]
    %v1878 = vld [vmem:[#allocation9 + $0x54] sm:$0xf]
    %v1879 = vld [vmem:[#allocation9 + $0x58] sm:$0xf]
    %v1880 = vld [vmem:[#allocation9 + $0x5c] sm:$0xf]
    %v1897 = vcombine.low %v1857, %v1858
    %v1898 = vcombine.low %v1859, %v1860
    %v1899 = vcombine.low %v1861, %v1862
    %v1900 = vcombine.low %v1863, %v1864
    %v1902 = vunpack.c.l.s4 1966171168
    %v1903 = vunpack.c.0.s8 %v1902
    %v1904 = vlaneseq
    %v1905 = vshrl.u32 %v1904, 7
    %v1906 = vsub.s32 %v1903, %v1905
    %v1907 = vrot.slane %v1897, %v1906
    %v1909 = vunpack.c.l.s4 1966171168
    %v1910 = vunpack.c.0.s8 %v1909
    %v1911 = vlaneseq
    %v1912 = vshrl.u32 %v1911, 7
    %v1913 = vsub.s32 %v1910, %v1912
    %v1914 = vrot.slane %v1898, %v1913
    %v1916 = vunpack.c.l.s4 1966171168
    %v1917 = vunpack.c.0.s8 %v1916
    %v1918 = vlaneseq
    %v1919 = vshrl.u32 %v1918, 7
    %v1920 = vsub.s32 %v1917, %v1919
    %v1921 = vrot.slane %v1899, %v1920
    %v1923 = vunpack.c.l.s4 1966171168
    %v1924 = vunpack.c.0.s8 %v1923
    %v1925 = vlaneseq
    %v1926 = vshrl.u32 %v1925, 7
    %v1927 = vsub.s32 %v1924, %v1926
    %v1928 = vrot.slane %v1900, %v1927
    %v1929 = vcombine.low %v1907, %v1914
    %v1930 = vcombine.low %v1921, %v1928
    %v1932 = vunpack.c.l.s4 1966171168
    %v1933 = vunpack.c.0.s8 %v1932
    %v1934 = vlaneseq
    %v1935 = vshrl.u32 %v1934, 7
    %v1936 = vsub.s32 %v1933, %v1935
    %v1937 = vrot.slane %v1929, %v1936
    %v1939 = vunpack.c.l.s4 1966171168
    %v1940 = vunpack.c.0.s8 %v1939
    %v1941 = vlaneseq
    %v1942 = vshrl.u32 %v1941, 7
    %v1943 = vsub.s32 %v1940, %v1942
    %v1944 = vrot.slane %v1930, %v1943
    %v1945 = vcombine.low %v1937, %v1944
    %v1946 = vcombine.low %v1865, %v1866
    %v1947 = vcombine.low %v1867, %v1868
    %v1948 = vcombine.low %v1869, %v1870
    %v1949 = vcombine.low %v1871, %v1872
    %v1951 = vunpack.c.l.s4 1966171168
    %v1952 = vunpack.c.0.s8 %v1951
    %v1953 = vlaneseq
    %v1954 = vshrl.u32 %v1953, 7
    %v1955 = vsub.s32 %v1952, %v1954
    %v1956 = vrot.slane %v1946, %v1955
    %v1958 = vunpack.c.l.s4 1966171168
    %v1959 = vunpack.c.0.s8 %v1958
    %v1960 = vlaneseq
    %v1961 = vshrl.u32 %v1960, 7
    %v1962 = vsub.s32 %v1959, %v1961
    %v1963 = vrot.slane %v1947, %v1962
    %v1965 = vunpack.c.l.s4 1966171168
    %v1966 = vunpack.c.0.s8 %v1965
    %v1967 = vlaneseq
    %v1968 = vshrl.u32 %v1967, 7
    %v1969 = vsub.s32 %v1966, %v1968
    %v1970 = vrot.slane %v1948, %v1969
    %v1972 = vunpack.c.l.s4 1966171168
    %v1973 = vunpack.c.0.s8 %v1972
    %v1974 = vlaneseq
    %v1975 = vshrl.u32 %v1974, 7
    %v1976 = vsub.s32 %v1973, %v1975
    %v1977 = vrot.slane %v1949, %v1976
    %v1978 = vcombine.low %v1956, %v1963
    %v1979 = vcombine.low %v1970, %v1977
    %v1981 = vunpack.c.l.s4 1966171168
    %v1982 = vunpack.c.0.s8 %v1981
    %v1983 = vlaneseq
    %v1984 = vshrl.u32 %v1983, 7
    %v1985 = vsub.s32 %v1982, %v1984
    %v1986 = vrot.slane %v1978, %v1985
    %v1988 = vunpack.c.l.s4 1966171168
    %v1989 = vunpack.c.0.s8 %v1988
    %v1990 = vlaneseq
    %v1991 = vshrl.u32 %v1990, 7
    %v1992 = vsub.s32 %v1989, %v1991
    %v1993 = vrot.slane %v1979, %v1992
    %v1994 = vcombine.low %v1986, %v1993
    %v2003 = vunpack.c.l.b16 %v1873
    %v2004 = vunpack.c.l.b16 %v1874
    %v2005 = vunpack.c.l.b16 %v1875
    %v2006 = vunpack.c.l.b16 %v1876
    %v2007 = vunpack.c.l.b16 %v1877
    %v2008 = vunpack.c.l.b16 %v1878
    %v2009 = vunpack.c.l.b16 %v1879
    %v2010 = vunpack.c.l.b16 %v1880
    %v2011 = vpack.c.b16 %v2004, %v2003
    %v2012 = vpack.c.b16 %v2006, %v2005
    %v2013 = vpack.c.b16 %v2008, %v2007
    %v2014 = vpack.c.b16 %v2010, %v2009
    %v2020 = vsel %vm1607, %v1945, 0
    %v2023 = vsel %vm1607, %v1994, 0
    %2025 = vmatprep.subr.bf16.mxu0 0
    %2026 = vmatpush1.bf16.msra.mxu0 %v2011
    %2027 = vmatprep.subr.bf16.mxu0 0
    %2028 = vmatpush1.bf16.msra.mxu0 %v2012
    %2029 = vmatprep.subr.bf16.mxu0 0
    %2030 = vmatpush1.bf16.msra.mxu0 %v2013
    %2031 = vmatprep.subr.bf16.mxu0 0
    %2032 = vmatpush1.bf16.msra.mxu0 %v2014
    %2033 = vmatprep.subr.bf16.mxu0 0
    %2034 = vmatpush1.bf16.msra.mxu0 0
    %2035 = vmatprep.subr.bf16.mxu0 0
    %2036 = vmatpush1.bf16.msra.mxu0 0
    %2037 = vmatprep.subr.bf16.mxu0 0
    %2038 = vmatpush1.bf16.msra.mxu0 0
    %2039 = vmatprep.subr.bf16.mxu0 0
    %2040 = vmatpush1.bf16.msra.mxu0 0
    %2041 = vmatprep.subr.bf16.mxu0 0
    %2042 = vmatpush1.bf16.msra.mxu0 0
    %2043 = vmatprep.subr.bf16.mxu0 0
    %2044 = vmatpush1.bf16.msra.mxu0 0
    %2045 = vmatprep.subr.bf16.mxu0 0
    %2046 = vmatpush1.bf16.msra.mxu0 0
    %2047 = vmatprep.subr.bf16.mxu0 0
    %2048 = vmatpush1.bf16.msra.mxu0 0
    %2049 = vmatprep.subr.bf16.mxu0 0
    %2050 = vmatpush1.bf16.msra.mxu0 0
    %2051 = vmatprep.subr.bf16.mxu0 0
    %2052 = vmatpush1.bf16.msra.mxu0 0
    %2053 = vmatprep.subr.bf16.mxu0 0
    %2054 = vmatpush1.bf16.msra.mxu0 0
    %2055 = vmatprep.subr.bf16.mxu0 0
    %2056 = vmatpush1.bf16.msra.mxu0 0
    %2057 = vmatprep.mubr.bf16.mxu0 0
    %2058 = vmatmul.mubr.bf16.gmra.mrb[0].mxu0 %v2020
    %v2059 = vpop.f32.mrb[0].mxu0
    %v2060 = vadd.f32 0.0, %v2059
    %v2061 = vpop.f32.mrb[0].mxu0
    %v2062 = vpop.f32.mrb[0].mxu0
    %v2063 = vadd.f32 0.0, %v2062
    %v2064 = vpop.f32.mrb[0].mxu0
    %2065 = vmatprep.mubr.bf16.mxu0 0
    %2066 = vmatmul.mubr.bf16.gmra.mrb[0].mxu0 %v2023
    %v2067 = vpop.f32.mrb[0].mxu0
    %v2068 = vadd.f32 0.0, %v2067
    %v2069 = vpop.f32.mrb[0].mxu0
    %v2070 = vpop.f32.mrb[0].mxu0
    %v2071 = vadd.f32 0.0, %v2070
    %v2072 = vpop.f32.mrb[0].mxu0
    %2073 = vdwg.mxu0
    %v2074 = vadd.f32 %v1842, %v2060
    %v2075 = vadd.f32 %v1845, %v2063
    %v2076 = vadd.f32 %v1850, %v2068
    %v2077 = vadd.f32 %v1853, %v2071
    %s2078 = scalar_lea.vmem [#allocation2], 6
    %v2079 = vld [vmem:[%s2078] sm:$0x1]
    %v2080 = vld [vmem:[%s2078 + $0x1] sm:$0x1]
    %v2081 = vld [vmem:[%s2078 + $0x2] sm:$0x1]
    %v2082 = vld [vmem:[%s2078 + $0x3] sm:$0x1]
    %v2083 = vld [vmem:[%s2078 + $0x6] sm:$0x1]
    %v2084 = vld [vmem:[%s2078 + $0x7] sm:$0x1]
    %v2085 = vld [vmem:[%s2078 + $0x8] sm:$0x1]
    %v2086 = vld [vmem:[%s2078 + $0x9] sm:$0x1]
    %v2087 = vld [vmem:[%s2078 + $0xc] sm:$0x1]
    %v2088 = vld [vmem:[%s2078 + $0xd] sm:$0x1]
    %v2089 = vld [vmem:[%s2078 + $0xe] sm:$0x1]
    %v2090 = vld [vmem:[%s2078 + $0xf] sm:$0x1]
    %v2091 = vld [vmem:[%s2078 + $0x12] sm:$0x1]
    %v2092 = vld [vmem:[%s2078 + $0x13] sm:$0x1]
    %v2093 = vld [vmem:[%s2078 + $0x14] sm:$0x1]
    %v2094 = vld [vmem:[%s2078 + $0x15] sm:$0x1]
    %v2095 = vld [vmem:[#allocation9 + $0x60] sm:$0xf]
    %v2096 = vld [vmem:[#allocation9 + $0x64] sm:$0xf]
    %v2097 = vld [vmem:[#allocation9 + $0x68] sm:$0xf]
    %v2098 = vld [vmem:[#allocation9 + $0x6c] sm:$0xf]
    %v2099 = vld [vmem:[#allocation9 + $0x70] sm:$0xf]
    %v2100 = vld [vmem:[#allocation9 + $0x74] sm:$0xf]
    %v2101 = vld [vmem:[#allocation9 + $0x78] sm:$0xf]
    %v2102 = vld [vmem:[#allocation9 + $0x7c] sm:$0xf]
    %v2119 = vcombine.low %v2079, %v2080
    %v2120 = vcombine.low %v2081, %v2082
    %v2121 = vcombine.low %v2083, %v2084
    %v2122 = vcombine.low %v2085, %v2086
    %v2124 = vunpack.c.l.s4 1966171168
    %v2125 = vunpack.c.0.s8 %v2124
    %v2126 = vlaneseq
    %v2127 = vshrl.u32 %v2126, 7
    %v2128 = vsub.s32 %v2125, %v2127
    %v2129 = vrot.slane %v2119, %v2128
    %v2131 = vunpack.c.l.s4 1966171168
    %v2132 = vunpack.c.0.s8 %v2131
    %v2133 = vlaneseq
    %v2134 = vshrl.u32 %v2133, 7
    %v2135 = vsub.s32 %v2132, %v2134
    %v2136 = vrot.slane %v2120, %v2135
    %v2138 = vunpack.c.l.s4 1966171168
    %v2139 = vunpack.c.0.s8 %v2138
    %v2140 = vlaneseq
    %v2141 = vshrl.u32 %v2140, 7
    %v2142 = vsub.s32 %v2139, %v2141
    %v2143 = vrot.slane %v2121, %v2142
    %v2145 = vunpack.c.l.s4 1966171168
    %v2146 = vunpack.c.0.s8 %v2145
    %v2147 = vlaneseq
    %v2148 = vshrl.u32 %v2147, 7
    %v2149 = vsub.s32 %v2146, %v2148
    %v2150 = vrot.slane %v2122, %v2149
    %v2151 = vcombine.low %v2129, %v2136
    %v2152 = vcombine.low %v2143, %v2150
    %v2154 = vunpack.c.l.s4 1966171168
    %v2155 = vunpack.c.0.s8 %v2154
    %v2156 = vlaneseq
    %v2157 = vshrl.u32 %v2156, 7
    %v2158 = vsub.s32 %v2155, %v2157
    %v2159 = vrot.slane %v2151, %v2158
    %v2161 = vunpack.c.l.s4 1966171168
    %v2162 = vunpack.c.0.s8 %v2161
    %v2163 = vlaneseq
    %v2164 = vshrl.u32 %v2163, 7
    %v2165 = vsub.s32 %v2162, %v2164
    %v2166 = vrot.slane %v2152, %v2165
    %v2167 = vcombine.low %v2159, %v2166
    %v2168 = vcombine.low %v2087, %v2088
    %v2169 = vcombine.low %v2089, %v2090
    %v2170 = vcombine.low %v2091, %v2092
    %v2171 = vcombine.low %v2093, %v2094
    %v2173 = vunpack.c.l.s4 1966171168
    %v2174 = vunpack.c.0.s8 %v2173
    %v2175 = vlaneseq
    %v2176 = vshrl.u32 %v2175, 7
    %v2177 = vsub.s32 %v2174, %v2176
    %v2178 = vrot.slane %v2168, %v2177
    %v2180 = vunpack.c.l.s4 1966171168
    %v2181 = vunpack.c.0.s8 %v2180
    %v2182 = vlaneseq
    %v2183 = vshrl.u32 %v2182, 7
    %v2184 = vsub.s32 %v2181, %v2183
    %v2185 = vrot.slane %v2169, %v2184
    %v2187 = vunpack.c.l.s4 1966171168
    %v2188 = vunpack.c.0.s8 %v2187
    %v2189 = vlaneseq
    %v2190 = vshrl.u32 %v2189, 7
    %v2191 = vsub.s32 %v2188, %v2190
    %v2192 = vrot.slane %v2170, %v2191
    %v2194 = vunpack.c.l.s4 1966171168
    %v2195 = vunpack.c.0.s8 %v2194
    %v2196 = vlaneseq
    %v2197 = vshrl.u32 %v2196, 7
    %v2198 = vsub.s32 %v2195, %v2197
    %v2199 = vrot.slane %v2171, %v2198
    %v2200 = vcombine.low %v2178, %v2185
    %v2201 = vcombine.low %v2192, %v2199
    %v2203 = vunpack.c.l.s4 1966171168
    %v2204 = vunpack.c.0.s8 %v2203
    %v2205 = vlaneseq
    %v2206 = vshrl.u32 %v2205, 7
    %v2207 = vsub.s32 %v2204, %v2206
    %v2208 = vrot.slane %v2200, %v2207
    %v2210 = vunpack.c.l.s4 1966171168
    %v2211 = vunpack.c.0.s8 %v2210
    %v2212 = vlaneseq
    %v2213 = vshrl.u32 %v2212, 7
    %v2214 = vsub.s32 %v2211, %v2213
    %v2215 = vrot.slane %v2201, %v2214
    %v2216 = vcombine.low %v2208, %v2215
    %v2225 = vunpack.c.l.b16 %v2095
    %v2226 = vunpack.c.l.b16 %v2096
    %v2227 = vunpack.c.l.b16 %v2097
    %v2228 = vunpack.c.l.b16 %v2098
    %v2229 = vunpack.c.l.b16 %v2099
    %v2230 = vunpack.c.l.b16 %v2100
    %v2231 = vunpack.c.l.b16 %v2101
    %v2232 = vunpack.c.l.b16 %v2102
    %v2233 = vpack.c.b16 %v2226, %v2225
    %v2234 = vpack.c.b16 %v2228, %v2227
    %v2235 = vpack.c.b16 %v2230, %v2229
    %v2236 = vpack.c.b16 %v2232, %v2231
    %v2242 = vsel %vm1607, %v2167, 0
    %v2245 = vsel %vm1607, %v2216, 0
    %2247 = vmatprep.subr.bf16.mxu0 0
    %2248 = vmatpush1.bf16.msra.mxu0 %v2233
    %2249 = vmatprep.subr.bf16.mxu0 0
    %2250 = vmatpush1.bf16.msra.mxu0 %v2234
    %2251 = vmatprep.subr.bf16.mxu0 0
    %2252 = vmatpush1.bf16.msra.mxu0 %v2235
    %2253 = vmatprep.subr.bf16.mxu0 0
    %2254 = vmatpush1.bf16.msra.mxu0 %v2236
    %2255 = vmatprep.subr.bf16.mxu0 0
    %2256 = vmatpush1.bf16.msra.mxu0 0
    %2257 = vmatprep.subr.bf16.mxu0 0
    %2258 = vmatpush1.bf16.msra.mxu0 0
    %2259 = vmatprep.subr.bf16.mxu0 0
    %2260 = vmatpush1.bf16.msra.mxu0 0
    %2261 = vmatprep.subr.bf16.mxu0 0
    %2262 = vmatpush1.bf16.msra.mxu0 0
    %2263 = vmatprep.subr.bf16.mxu0 0
    %2264 = vmatpush1.bf16.msra.mxu0 0
    %2265 = vmatprep.subr.bf16.mxu0 0
    %2266 = vmatpush1.bf16.msra.mxu0 0
    %2267 = vmatprep.subr.bf16.mxu0 0
    %2268 = vmatpush1.bf16.msra.mxu0 0
    %2269 = vmatprep.subr.bf16.mxu0 0
    %2270 = vmatpush1.bf16.msra.mxu0 0
    %2271 = vmatprep.subr.bf16.mxu0 0
    %2272 = vmatpush1.bf16.msra.mxu0 0
    %2273 = vmatprep.subr.bf16.mxu0 0
    %2274 = vmatpush1.bf16.msra.mxu0 0
    %2275 = vmatprep.subr.bf16.mxu0 0
    %2276 = vmatpush1.bf16.msra.mxu0 0
    %2277 = vmatprep.subr.bf16.mxu0 0
    %2278 = vmatpush1.bf16.msra.mxu0 0
    %2279 = vmatprep.mubr.bf16.mxu0 0
    %2280 = vmatmul.mubr.bf16.gmra.mrb[0].mxu0 %v2242
    %v2281 = vpop.f32.mrb[0].mxu0
    %v2282 = vadd.f32 0.0, %v2281
    %v2283 = vpop.f32.mrb[0].mxu0
    %v2284 = vpop.f32.mrb[0].mxu0
    %v2285 = vadd.f32 0.0, %v2284
    %v2286 = vpop.f32.mrb[0].mxu0
    %2287 = vmatprep.mubr.bf16.mxu0 0
    %2288 = vmatmul.mubr.bf16.gmra.mrb[0].mxu0 %v2245
    %v2289 = vpop.f32.mrb[0].mxu0
    %v2290 = vadd.f32 0.0, %v2289
    %v2291 = vpop.f32.mrb[0].mxu0
    %v2292 = vpop.f32.mrb[0].mxu0
    %v2293 = vadd.f32 0.0, %v2292
    %v2294 = vpop.f32.mrb[0].mxu0
    %2295 = vdwg.mxu0
    %v2296 = vadd.f32 %v2074, %v2282
    %v2297 = vadd.f32 %v2075, %v2285
    %v2298 = vadd.f32 %v2076, %v2290
    %v2299 = vadd.f32 %v2077, %v2293
    %v2300 = vld [vmem:[%s1403] sm:$0x1]
    %v2301 = vld [vmem:[%s1403 + $0x1] sm:$0x1]
    %v2302 = vld [vmem:[%s1403 + $0x2] sm:$0x1]
    %v2303 = vld [vmem:[%s1403 + $0x3] sm:$0x1]
    %v2304 = vld [vmem:[%s1403 + $0x6] sm:$0x1]
    %v2305 = vld [vmem:[%s1403 + $0x7] sm:$0x1]
    %v2306 = vld [vmem:[%s1403 + $0x8] sm:$0x1]
    %v2307 = vld [vmem:[%s1403 + $0x9] sm:$0x1]
    %v2308 = vld [vmem:[%s1403 + $0xc] sm:$0x1]
    %v2309 = vld [vmem:[%s1403 + $0xd] sm:$0x1]
    %v2310 = vld [vmem:[%s1403 + $0xe] sm:$0x1]
    %v2311 = vld [vmem:[%s1403 + $0xf] sm:$0x1]
    %v2312 = vld [vmem:[%s1403 + $0x12] sm:$0x1]
    %v2313 = vld [vmem:[%s1403 + $0x13] sm:$0x1]
    %v2314 = vld [vmem:[%s1403 + $0x14] sm:$0x1]
    %v2315 = vld [vmem:[%s1403 + $0x15] sm:$0x1]
    %v2316 = vld [vmem:[#allocation9 + $0x80] sm:$0xf]
    %v2317 = vld [vmem:[#allocation9 + $0x84] sm:$0xf]
    %v2318 = vld [vmem:[#allocation9 + $0x88] sm:$0xf]
    %v2319 = vld [vmem:[#allocation9 + $0x8c] sm:$0xf]
    %v2320 = vld [vmem:[#allocation9 + $0x90] sm:$0xf]
    %v2321 = vld [vmem:[#allocation9 + $0x94] sm:$0xf]
    %v2322 = vld [vmem:[#allocation9 + $0x98] sm:$0xf]
    %v2323 = vld [vmem:[#allocation9 + $0x9c] sm:$0xf]
    %v2340 = vcombine.low %v2300, %v2301
    %v2341 = vcombine.low %v2302, %v2303
    %v2342 = vcombine.low %v2304, %v2305
    %v2343 = vcombine.low %v2306, %v2307
    %v2345 = vunpack.c.l.s4 1966171168
    %v2346 = vunpack.c.0.s8 %v2345
    %v2347 = vlaneseq
    %v2348 = vshrl.u32 %v2347, 7
    %v2349 = vsub.s32 %v2346, %v2348
    %v2350 = vrot.slane %v2340, %v2349
    %v2352 = vunpack.c.l.s4 1966171168
    %v2353 = vunpack.c.0.s8 %v2352
    %v2354 = vlaneseq
    %v2355 = vshrl.u32 %v2354, 7
    %v2356 = vsub.s32 %v2353, %v2355
    %v2357 = vrot.slane %v2341, %v2356
    %v2359 = vunpack.c.l.s4 1966171168
    %v2360 = vunpack.c.0.s8 %v2359
    %v2361 = vlaneseq
    %v2362 = vshrl.u32 %v2361, 7
    %v2363 = vsub.s32 %v2360, %v2362
    %v2364 = vrot.slane %v2342, %v2363
    %v2366 = vunpack.c.l.s4 1966171168
    %v2367 = vunpack.c.0.s8 %v2366
    %v2368 = vlaneseq
    %v2369 = vshrl.u32 %v2368, 7
    %v2370 = vsub.s32 %v2367, %v2369
    %v2371 = vrot.slane %v2343, %v2370
    %v2372 = vcombine.low %v2350, %v2357
    %v2373 = vcombine.low %v2364, %v2371
    %v2375 = vunpack.c.l.s4 1966171168
    %v2376 = vunpack.c.0.s8 %v2375
    %v2377 = vlaneseq
    %v2378 = vshrl.u32 %v2377, 7
    %v2379 = vsub.s32 %v2376, %v2378
    %v2380 = vrot.slane %v2372, %v2379
    %v2382 = vunpack.c.l.s4 1966171168
    %v2383 = vunpack.c.0.s8 %v2382
    %v2384 = vlaneseq
    %v2385 = vshrl.u32 %v2384, 7
    %v2386 = vsub.s32 %v2383, %v2385
    %v2387 = vrot.slane %v2373, %v2386
    %v2388 = vcombine.low %v2380, %v2387
    %v2389 = vcombine.low %v2308, %v2309
    %v2390 = vcombine.low %v2310, %v2311
    %v2391 = vcombine.low %v2312, %v2313
    %v2392 = vcombine.low %v2314, %v2315
    %v2394 = vunpack.c.l.s4 1966171168
    %v2395 = vunpack.c.0.s8 %v2394
    %v2396 = vlaneseq
    %v2397 = vshrl.u32 %v2396, 7
    %v2398 = vsub.s32 %v2395, %v2397
    %v2399 = vrot.slane %v2389, %v2398
    %v2401 = vunpack.c.l.s4 1966171168
    %v2402 = vunpack.c.0.s8 %v2401
    %v2403 = vlaneseq
    %v2404 = vshrl.u32 %v2403, 7
    %v2405 = vsub.s32 %v2402, %v2404
    %v2406 = vrot.slane %v2390, %v2405
    %v2408 = vunpack.c.l.s4 1966171168
    %v2409 = vunpack.c.0.s8 %v2408
    %v2410 = vlaneseq
    %v2411 = vshrl.u32 %v2410, 7
    %v2412 = vsub.s32 %v2409, %v2411
    %v2413 = vrot.slane %v2391, %v2412
    %v2415 = vunpack.c.l.s4 1966171168
    %v2416 = vunpack.c.0.s8 %v2415
    %v2417 = vlaneseq
    %v2418 = vshrl.u32 %v2417, 7
    %v2419 = vsub.s32 %v2416, %v2418
    %v2420 = vrot.slane %v2392, %v2419
    %v2421 = vcombine.low %v2399, %v2406
    %v2422 = vcombine.low %v2413, %v2420
    %v2424 = vunpack.c.l.s4 1966171168
    %v2425 = vunpack.c.0.s8 %v2424
    %v2426 = vlaneseq
    %v2427 = vshrl.u32 %v2426, 7
    %v2428 = vsub.s32 %v2425, %v2427
    %v2429 = vrot.slane %v2421, %v2428
    %v2431 = vunpack.c.l.s4 1966171168
    %v2432 = vunpack.c.0.s8 %v2431
    %v2433 = vlaneseq
    %v2434 = vshrl.u32 %v2433, 7
    %v2435 = vsub.s32 %v2432, %v2434
    %v2436 = vrot.slane %v2422, %v2435
    %v2437 = vcombine.low %v2429, %v2436
    %v2446 = vunpack.c.l.b16 %v2316
    %v2447 = vunpack.c.l.b16 %v2317
    %v2448 = vunpack.c.l.b16 %v2318
    %v2449 = vunpack.c.l.b16 %v2319
    %v2450 = vunpack.c.l.b16 %v2320
    %v2451 = vunpack.c.l.b16 %v2321
    %v2452 = vunpack.c.l.b16 %v2322
    %v2453 = vunpack.c.l.b16 %v2323
    %v2454 = vpack.c.b16 %v2447, %v2446
    %v2455 = vpack.c.b16 %v2449, %v2448
    %v2456 = vpack.c.b16 %v2451, %v2450
    %v2457 = vpack.c.b16 %v2453, %v2452
    %v2463 = vsel %vm1607, %v2388, 0
    %v2466 = vsel %vm1607, %v2437, 0
    %2468 = vmatprep.subr.bf16.mxu0 0
    %2469 = vmatpush1.bf16.msra.mxu0 %v2454
    %2470 = vmatprep.subr.bf16.mxu0 0
    %2471 = vmatpush1.bf16.msra.mxu0 %v2455
    %2472 = vmatprep.subr.bf16.mxu0 0
    %2473 = vmatpush1.bf16.msra.mxu0 %v2456
    %2474 = vmatprep.subr.bf16.mxu0 0
    %2475 = vmatpush1.bf16.msra.mxu0 %v2457
    %2476 = vmatprep.subr.bf16.mxu0 0
    %2477 = vmatpush1.bf16.msra.mxu0 0
    %2478 = vmatprep.subr.bf16.mxu0 0
    %2479 = vmatpush1.bf16.msra.mxu0 0
    %2480 = vmatprep.subr.bf16.mxu0 0
    %2481 = vmatpush1.bf16.msra.mxu0 0
    %2482 = vmatprep.subr.bf16.mxu0 0
    %2483 = vmatpush1.bf16.msra.mxu0 0
    %2484 = vmatprep.subr.bf16.mxu0 0
    %2485 = vmatpush1.bf16.msra.mxu0 0
    %2486 = vmatprep.subr.bf16.mxu0 0
    %2487 = vmatpush1.bf16.msra.mxu0 0
    %2488 = vmatprep.subr.bf16.mxu0 0
    %2489 = vmatpush1.bf16.msra.mxu0 0
    %2490 = vmatprep.subr.bf16.mxu0 0
    %2491 = vmatpush1.bf16.msra.mxu0 0
    %2492 = vmatprep.subr.bf16.mxu0 0
    %2493 = vmatpush1.bf16.msra.mxu0 0
    %2494 = vmatprep.subr.bf16.mxu0 0
    %2495 = vmatpush1.bf16.msra.mxu0 0
    %2496 = vmatprep.subr.bf16.mxu0 0
    %2497 = vmatpush1.bf16.msra.mxu0 0
    %2498 = vmatprep.subr.bf16.mxu0 0
    %2499 = vmatpush1.bf16.msra.mxu0 0
    %2500 = vmatprep.mubr.bf16.mxu0 0
    %2501 = vmatmul.mubr.bf16.gmra.mrb[0].mxu0 %v2463
    %v2502 = vpop.f32.mrb[0].mxu0
    %v2503 = vadd.f32 0.0, %v2502
    %v2504 = vpop.f32.mrb[0].mxu0
    %v2505 = vpop.f32.mrb[0].mxu0
    %v2506 = vadd.f32 0.0, %v2505
    %v2507 = vpop.f32.mrb[0].mxu0
    %2508 = vmatprep.mubr.bf16.mxu0 0
    %2509 = vmatmul.mubr.bf16.gmra.mrb[0].mxu0 %v2466
    %v2510 = vpop.f32.mrb[0].mxu0
    %v2511 = vadd.f32 0.0, %v2510
    %v2512 = vpop.f32.mrb[0].mxu0
    %v2513 = vpop.f32.mrb[0].mxu0
    %v2514 = vadd.f32 0.0, %v2513
    %v2515 = vpop.f32.mrb[0].mxu0
    %2516 = vdwg.mxu0
    %v2517 = vadd.f32 %v2296, %v2503
    %v2518 = vadd.f32 %v2297, %v2506
    %v2519 = vadd.f32 %v2298, %v2511
    %v2520 = vadd.f32 %v2299, %v2514
    %s2521 = scalar_lea.vmem [#allocation2], 8
    %v2522 = vld [vmem:[%s2521] sm:$0x1]
    %v2523 = vld [vmem:[%s2521 + $0x1] sm:$0x1]
    %v2524 = vld [vmem:[%s2521 + $0x2] sm:$0x1]
    %v2525 = vld [vmem:[%s2521 + $0x3] sm:$0x1]
    %v2526 = vld [vmem:[%s2521 + $0x6] sm:$0x1]
    %v2527 = vld [vmem:[%s2521 + $0x7] sm:$0x1]
    %v2528 = vld [vmem:[%s2521 + $0x8] sm:$0x1]
    %v2529 = vld [vmem:[%s2521 + $0x9] sm:$0x1]
    %v2530 = vld [vmem:[%s2521 + $0xc] sm:$0x1]
    %v2531 = vld [vmem:[%s2521 + $0xd] sm:$0x1]
    %v2532 = vld [vmem:[%s2521 + $0xe] sm:$0x1]
    %v2533 = vld [vmem:[%s2521 + $0xf] sm:$0x1]
    %v2534 = vld [vmem:[%s2521 + $0x12] sm:$0x1]
    %v2535 = vld [vmem:[%s2521 + $0x13] sm:$0x1]
    %v2536 = vld [vmem:[%s2521 + $0x14] sm:$0x1]
    %v2537 = vld [vmem:[%s2521 + $0x15] sm:$0x1]
    %v2538 = vld [vmem:[#allocation9 + $0xa0] sm:$0xf]
    %v2539 = vld [vmem:[#allocation9 + $0xa4] sm:$0xf]
    %v2540 = vld [vmem:[#allocation9 + $0xa8] sm:$0xf]
    %v2541 = vld [vmem:[#allocation9 + $0xac] sm:$0xf]
    %v2542 = vld [vmem:[#allocation9 + $0xb0] sm:$0xf]
    %v2543 = vld [vmem:[#allocation9 + $0xb4] sm:$0xf]
    %v2544 = vld [vmem:[#allocation9 + $0xb8] sm:$0xf]
    %v2545 = vld [vmem:[#allocation9 + $0xbc] sm:$0xf]
    %v2562 = vcombine.low %v2522, %v2523
    %v2563 = vcombine.low %v2524, %v2525
    %v2564 = vcombine.low %v2526, %v2527
    %v2565 = vcombine.low %v2528, %v2529
    %v2567 = vunpack.c.l.s4 1966171168
    %v2568 = vunpack.c.0.s8 %v2567
    %v2569 = vlaneseq
    %v2570 = vshrl.u32 %v2569, 7
    %v2571 = vsub.s32 %v2568, %v2570
    %v2572 = vrot.slane %v2562, %v2571
    %v2574 = vunpack.c.l.s4 1966171168
    %v2575 = vunpack.c.0.s8 %v2574
    %v2576 = vlaneseq
    %v2577 = vshrl.u32 %v2576, 7
    %v2578 = vsub.s32 %v2575, %v2577
    %v2579 = vrot.slane %v2563, %v2578
    %v2581 = vunpack.c.l.s4 1966171168
    %v2582 = vunpack.c.0.s8 %v2581
    %v2583 = vlaneseq
    %v2584 = vshrl.u32 %v2583, 7
    %v2585 = vsub.s32 %v2582, %v2584
    %v2586 = vrot.slane %v2564, %v2585
    %v2588 = vunpack.c.l.s4 1966171168
    %v2589 = vunpack.c.0.s8 %v2588
    %v2590 = vlaneseq
    %v2591 = vshrl.u32 %v2590, 7
    %v2592 = vsub.s32 %v2589, %v2591
    %v2593 = vrot.slane %v2565, %v2592
    %v2594 = vcombine.low %v2572, %v2579
    %v2595 = vcombine.low %v2586, %v2593
    %v2597 = vunpack.c.l.s4 1966171168
    %v2598 = vunpack.c.0.s8 %v2597
    %v2599 = vlaneseq
    %v2600 = vshrl.u32 %v2599, 7
    %v2601 = vsub.s32 %v2598, %v2600
    %v2602 = vrot.slane %v2594, %v2601
    %v2604 = vunpack.c.l.s4 1966171168
    %v2605 = vunpack.c.0.s8 %v2604
    %v2606 = vlaneseq
    %v2607 = vshrl.u32 %v2606, 7
    %v2608 = vsub.s32 %v2605, %v2607
    %v2609 = vrot.slane %v2595, %v2608
    %v2610 = vcombine.low %v2602, %v2609
    %v2611 = vcombine.low %v2530, %v2531
    %v2612 = vcombine.low %v2532, %v2533
    %v2613 = vcombine.low %v2534, %v2535
    %v2614 = vcombine.low %v2536, %v2537
    %v2616 = vunpack.c.l.s4 1966171168
    %v2617 = vunpack.c.0.s8 %v2616
    %v2618 = vlaneseq
    %v2619 = vshrl.u32 %v2618, 7
    %v2620 = vsub.s32 %v2617, %v2619
    %v2621 = vrot.slane %v2611, %v2620
    %v2623 = vunpack.c.l.s4 1966171168
    %v2624 = vunpack.c.0.s8 %v2623
    %v2625 = vlaneseq
    %v2626 = vshrl.u32 %v2625, 7
    %v2627 = vsub.s32 %v2624, %v2626
    %v2628 = vrot.slane %v2612, %v2627
    %v2630 = vunpack.c.l.s4 1966171168
    %v2631 = vunpack.c.0.s8 %v2630
    %v2632 = vlaneseq
    %v2633 = vshrl.u32 %v2632, 7
    %v2634 = vsub.s32 %v2631, %v2633
    %v2635 = vrot.slane %v2613, %v2634
    %v2637 = vunpack.c.l.s4 1966171168
    %v2638 = vunpack.c.0.s8 %v2637
    %v2639 = vlaneseq
    %v2640 = vshrl.u32 %v2639, 7
    %v2641 = vsub.s32 %v2638, %v2640
    %v2642 = vrot.slane %v2614, %v2641
    %v2643 = vcombine.low %v2621, %v2628
    %v2644 = vcombine.low %v2635, %v2642
    %v2646 = vunpack.c.l.s4 1966171168
    %v2647 = vunpack.c.0.s8 %v2646
    %v2648 = vlaneseq
    %v2649 = vshrl.u32 %v2648, 7
    %v2650 = vsub.s32 %v2647, %v2649
    %v2651 = vrot.slane %v2643, %v2650
    %v2653 = vunpack.c.l.s4 1966171168
    %v2654 = vunpack.c.0.s8 %v2653
    %v2655 = vlaneseq
    %v2656 = vshrl.u32 %v2655, 7
    %v2657 = vsub.s32 %v2654, %v2656
    %v2658 = vrot.slane %v2644, %v2657
    %v2659 = vcombine.low %v2651, %v2658
    %v2668 = vunpack.c.l.b16 %v2538
    %v2669 = vunpack.c.l.b16 %v2539
    %v2670 = vunpack.c.l.b16 %v2540
    %v2671 = vunpack.c.l.b16 %v2541
    %v2672 = vunpack.c.l.b16 %v2542
    %v2673 = vunpack.c.l.b16 %v2543
    %v2674 = vunpack.c.l.b16 %v2544
    %v2675 = vunpack.c.l.b16 %v2545
    %v2676 = vpack.c.b16 %v2669, %v2668
    %v2677 = vpack.c.b16 %v2671, %v2670
    %v2678 = vpack.c.b16 %v2673, %v2672
    %v2679 = vpack.c.b16 %v2675, %v2674
    %v2685 = vsel %vm1607, %v2610, 0
    %v2688 = vsel %vm1607, %v2659, 0
    %2690 = vmatprep.subr.bf16.mxu0 0
    %2691 = vmatpush1.bf16.msra.mxu0 %v2676
    %2692 = vmatprep.subr.bf16.mxu0 0
    %2693 = vmatpush1.bf16.msra.mxu0 %v2677
    %2694 = vmatprep.subr.bf16.mxu0 0
    %2695 = vmatpush1.bf16.msra.mxu0 %v2678
    %2696 = vmatprep.subr.bf16.mxu0 0
    %2697 = vmatpush1.bf16.msra.mxu0 %v2679
    %2698 = vmatprep.subr.bf16.mxu0 0
    %2699 = vmatpush1.bf16.msra.mxu0 0
    %2700 = vmatprep.subr.bf16.mxu0 0
    %2701 = vmatpush1.bf16.msra.mxu0 0
    %2702 = vmatprep.subr.bf16.mxu0 0
    %2703 = vmatpush1.bf16.msra.mxu0 0
    %2704 = vmatprep.subr.bf16.mxu0 0
    %2705 = vmatpush1.bf16.msra.mxu0 0
    %2706 = vmatprep.subr.bf16.mxu0 0
    %2707 = vmatpush1.bf16.msra.mxu0 0
    %2708 = vmatprep.subr.bf16.mxu0 0
    %2709 = vmatpush1.bf16.msra.mxu0 0
    %2710 = vmatprep.subr.bf16.mxu0 0
    %2711 = vmatpush1.bf16.msra.mxu0 0
    %2712 = vmatprep.subr.bf16.mxu0 0
    %2713 = vmatpush1.bf16.msra.mxu0 0
    %2714 = vmatprep.subr.bf16.mxu0 0
    %2715 = vmatpush1.bf16.msra.mxu0 0
    %2716 = vmatprep.subr.bf16.mxu0 0
    %2717 = vmatpush1.bf16.msra.mxu0 0
    %2718 = vmatprep.subr.bf16.mxu0 0
    %2719 = vmatpush1.bf16.msra.mxu0 0
    %2720 = vmatprep.subr.bf16.mxu0 0
    %2721 = vmatpush1.bf16.msra.mxu0 0
    %2722 = vmatprep.mubr.bf16.mxu0 0
    %2723 = vmatmul.mubr.bf16.gmra.mrb[0].mxu0 %v2685
    %v2724 = vpop.f32.mrb[0].mxu0
    %v2725 = vadd.f32 0.0, %v2724
    %v2726 = vpop.f32.mrb[0].mxu0
    %v2727 = vpop.f32.mrb[0].mxu0
    %v2728 = vadd.f32 0.0, %v2727
    %v2729 = vpop.f32.mrb[0].mxu0
    %2730 = vmatprep.mubr.bf16.mxu0 0
    %2731 = vmatmul.mubr.bf16.gmra.mrb[0].mxu0 %v2688
    %v2732 = vpop.f32.mrb[0].mxu0
    %v2733 = vadd.f32 0.0, %v2732
    %v2734 = vpop.f32.mrb[0].mxu0
    %v2735 = vpop.f32.mrb[0].mxu0
    %v2736 = vadd.f32 0.0, %v2735
    %v2737 = vpop.f32.mrb[0].mxu0
    %2738 = vdwg.mxu0
    %v2739 = vadd.f32 %v2517, %v2725
    %v2740 = vadd.f32 %v2518, %v2728
    %v2741 = vadd.f32 %v2519, %v2733
    %v2742 = vadd.f32 %v2520, %v2736
    %s2743 = scalar_lea.vmem [#allocation2], 12
    %v2744 = vld [vmem:[%s2743] sm:$0x1]
    %v2745 = vld [vmem:[%s2743 + $0x1] sm:$0x1]
    %v2746 = vld [vmem:[%s2743 + $0x2] sm:$0x1]
    %v2747 = vld [vmem:[%s2743 + $0x3] sm:$0x1]
    %v2748 = vld [vmem:[%s2743 + $0x6] sm:$0x1]
    %v2749 = vld [vmem:[%s2743 + $0x7] sm:$0x1]
    %v2750 = vld [vmem:[%s2743 + $0x8] sm:$0x1]
    %v2751 = vld [vmem:[%s2743 + $0x9] sm:$0x1]
    %v2752 = vld [vmem:[%s2743 + $0xc] sm:$0x1]
    %v2753 = vld [vmem:[%s2743 + $0xd] sm:$0x1]
    %v2754 = vld [vmem:[%s2743 + $0xe] sm:$0x1]
    %v2755 = vld [vmem:[%s2743 + $0xf] sm:$0x1]
    %v2756 = vld [vmem:[%s2743 + $0x12] sm:$0x1]
    %v2757 = vld [vmem:[%s2743 + $0x13] sm:$0x1]
    %v2758 = vld [vmem:[%s2743 + $0x14] sm:$0x1]
    %v2759 = vld [vmem:[%s2743 + $0x15] sm:$0x1]
    %v2760 = vld [vmem:[#allocation9 + $0xc0] sm:$0xf]
    %v2761 = vld [vmem:[#allocation9 + $0xc4] sm:$0xf]
    %v2762 = vld [vmem:[#allocation9 + $0xc8] sm:$0xf]
    %v2763 = vld [vmem:[#allocation9 + $0xcc] sm:$0xf]
    %v2764 = vld [vmem:[#allocation9 + $0xd0] sm:$0xf]
    %v2765 = vld [vmem:[#allocation9 + $0xd4] sm:$0xf]
    %v2766 = vld [vmem:[#allocation9 + $0xd8] sm:$0xf]
    %v2767 = vld [vmem:[#allocation9 + $0xdc] sm:$0xf]
    %v2784 = vcombine.low %v2744, %v2745
    %v2785 = vcombine.low %v2746, %v2747
    %v2786 = vcombine.low %v2748, %v2749
    %v2787 = vcombine.low %v2750, %v2751
    %v2789 = vunpack.c.l.s4 1966171168
    %v2790 = vunpack.c.0.s8 %v2789
    %v2791 = vlaneseq
    %v2792 = vshrl.u32 %v2791, 7
    %v2793 = vsub.s32 %v2790, %v2792
    %v2794 = vrot.slane %v2784, %v2793
    %v2796 = vunpack.c.l.s4 1966171168
    %v2797 = vunpack.c.0.s8 %v2796
    %v2798 = vlaneseq
    %v2799 = vshrl.u32 %v2798, 7
    %v2800 = vsub.s32 %v2797, %v2799
    %v2801 = vrot.slane %v2785, %v2800
    %v2803 = vunpack.c.l.s4 1966171168
    %v2804 = vunpack.c.0.s8 %v2803
    %v2805 = vlaneseq
    %v2806 = vshrl.u32 %v2805, 7
    %v2807 = vsub.s32 %v2804, %v2806
    %v2808 = vrot.slane %v2786, %v2807
    %v2810 = vunpack.c.l.s4 1966171168
    %v2811 = vunpack.c.0.s8 %v2810
    %v2812 = vlaneseq
    %v2813 = vshrl.u32 %v2812, 7
    %v2814 = vsub.s32 %v2811, %v2813
    %v2815 = vrot.slane %v2787, %v2814
    %v2816 = vcombine.low %v2794, %v2801
    %v2817 = vcombine.low %v2808, %v2815
    %v2819 = vunpack.c.l.s4 1966171168
    %v2820 = vunpack.c.0.s8 %v2819
    %v2821 = vlaneseq
    %v2822 = vshrl.u32 %v2821, 7
    %v2823 = vsub.s32 %v2820, %v2822
    %v2824 = vrot.slane %v2816, %v2823
    %v2826 = vunpack.c.l.s4 1966171168
    %v2827 = vunpack.c.0.s8 %v2826
    %v2828 = vlaneseq
    %v2829 = vshrl.u32 %v2828, 7
    %v2830 = vsub.s32 %v2827, %v2829
    %v2831 = vrot.slane %v2817, %v2830
    %v2832 = vcombine.low %v2824, %v2831
    %v2833 = vcombine.low %v2752, %v2753
    %v2834 = vcombine.low %v2754, %v2755
    %v2835 = vcombine.low %v2756, %v2757
    %v2836 = vcombine.low %v2758, %v2759
    %v2838 = vunpack.c.l.s4 1966171168
    %v2839 = vunpack.c.0.s8 %v2838
    %v2840 = vlaneseq
    %v2841 = vshrl.u32 %v2840, 7
    %v2842 = vsub.s32 %v2839, %v2841
    %v2843 = vrot.slane %v2833, %v2842
    %v2845 = vunpack.c.l.s4 1966171168
    %v2846 = vunpack.c.0.s8 %v2845
    %v2847 = vlaneseq
    %v2848 = vshrl.u32 %v2847, 7
    %v2849 = vsub.s32 %v2846, %v2848
    %v2850 = vrot.slane %v2834, %v2849
    %v2852 = vunpack.c.l.s4 1966171168
    %v2853 = vunpack.c.0.s8 %v2852
    %v2854 = vlaneseq
    %v2855 = vshrl.u32 %v2854, 7
    %v2856 = vsub.s32 %v2853, %v2855
    %v2857 = vrot.slane %v2835, %v2856
    %v2859 = vunpack.c.l.s4 1966171168
    %v2860 = vunpack.c.0.s8 %v2859
    %v2861 = vlaneseq
    %v2862 = vshrl.u32 %v2861, 7
    %v2863 = vsub.s32 %v2860, %v2862
    %v2864 = vrot.slane %v2836, %v2863
    %v2865 = vcombine.low %v2843, %v2850
    %v2866 = vcombine.low %v2857, %v2864
    %v2868 = vunpack.c.l.s4 1966171168
    %v2869 = vunpack.c.0.s8 %v2868
    %v2870 = vlaneseq
    %v2871 = vshrl.u32 %v2870, 7
    %v2872 = vsub.s32 %v2869, %v2871
    %v2873 = vrot.slane %v2865, %v2872
    %v2875 = vunpack.c.l.s4 1966171168
    %v2876 = vunpack.c.0.s8 %v2875
    %v2877 = vlaneseq
    %v2878 = vshrl.u32 %v2877, 7
    %v2879 = vsub.s32 %v2876, %v2878
    %v2880 = vrot.slane %v2866, %v2879
    %v2881 = vcombine.low %v2873, %v2880
    %v2890 = vunpack.c.l.b16 %v2760
    %v2891 = vunpack.c.l.b16 %v2761
    %v2892 = vunpack.c.l.b16 %v2762
    %v2893 = vunpack.c.l.b16 %v2763
    %v2894 = vunpack.c.l.b16 %v2764
    %v2895 = vunpack.c.l.b16 %v2765
    %v2896 = vunpack.c.l.b16 %v2766
    %v2897 = vunpack.c.l.b16 %v2767
    %v2898 = vpack.c.b16 %v2891, %v2890
    %v2899 = vpack.c.b16 %v2893, %v2892
    %v2900 = vpack.c.b16 %v2895, %v2894
    %v2901 = vpack.c.b16 %v2897, %v2896
    %v2907 = vsel %vm1607, %v2832, 0
    %v2910 = vsel %vm1607, %v2881, 0
    %2912 = vmatprep.subr.bf16.mxu0 0
    %2913 = vmatpush1.bf16.msra.mxu0 %v2898
    %2914 = vmatprep.subr.bf16.mxu0 0
    %2915 = vmatpush1.bf16.msra.mxu0 %v2899
    %2916 = vmatprep.subr.bf16.mxu0 0
    %2917 = vmatpush1.bf16.msra.mxu0 %v2900
    %2918 = vmatprep.subr.bf16.mxu0 0
    %2919 = vmatpush1.bf16.msra.mxu0 %v2901
    %2920 = vmatprep.subr.bf16.mxu0 0
    %2921 = vmatpush1.bf16.msra.mxu0 0
    %2922 = vmatprep.subr.bf16.mxu0 0
    %2923 = vmatpush1.bf16.msra.mxu0 0
    %2924 = vmatprep.subr.bf16.mxu0 0
    %2925 = vmatpush1.bf16.msra.mxu0 0
    %2926 = vmatprep.subr.bf16.mxu0 0
    %2927 = vmatpush1.bf16.msra.mxu0 0
    %2928 = vmatprep.subr.bf16.mxu0 0
    %2929 = vmatpush1.bf16.msra.mxu0 0
    %2930 = vmatprep.subr.bf16.mxu0 0
    %2931 = vmatpush1.bf16.msra.mxu0 0
    %2932 = vmatprep.subr.bf16.mxu0 0
    %2933 = vmatpush1.bf16.msra.mxu0 0
    %2934 = vmatprep.subr.bf16.mxu0 0
    %2935 = vmatpush1.bf16.msra.mxu0 0
    %2936 = vmatprep.subr.bf16.mxu0 0
    %2937 = vmatpush1.bf16.msra.mxu0 0
    %2938 = vmatprep.subr.bf16.mxu0 0
    %2939 = vmatpush1.bf16.msra.mxu0 0
    %2940 = vmatprep.subr.bf16.mxu0 0
    %2941 = vmatpush1.bf16.msra.mxu0 0
    %2942 = vmatprep.subr.bf16.mxu0 0
    %2943 = vmatpush1.bf16.msra.mxu0 0
    %2944 = vmatprep.mubr.bf16.mxu0 0
    %2945 = vmatmul.mubr.bf16.gmra.mrb[0].mxu0 %v2907
    %v2946 = vpop.f32.mrb[0].mxu0
    %v2947 = vadd.f32 0.0, %v2946
    %v2948 = vpop.f32.mrb[0].mxu0
    %v2949 = vpop.f32.mrb[0].mxu0
    %v2950 = vadd.f32 0.0, %v2949
    %v2951 = vpop.f32.mrb[0].mxu0
    %2952 = vmatprep.mubr.bf16.mxu0 0
    %2953 = vmatmul.mubr.bf16.gmra.mrb[0].mxu0 %v2910
    %v2954 = vpop.f32.mrb[0].mxu0
    %v2955 = vadd.f32 0.0, %v2954
    %v2956 = vpop.f32.mrb[0].mxu0
    %v2957 = vpop.f32.mrb[0].mxu0
    %v2958 = vadd.f32 0.0, %v2957
    %v2959 = vpop.f32.mrb[0].mxu0
    %2960 = vdwg.mxu0
    %v2961 = vadd.f32 %v2739, %v2947
    %v2962 = vadd.f32 %v2740, %v2950
    %v2963 = vadd.f32 %v2741, %v2955
    %v2964 = vadd.f32 %v2742, %v2958
    %s2965 = scalar_lea.vmem [#allocation2], 13
    %v2966 = vld [vmem:[%s2965] sm:$0x1]
    %v2967 = vld [vmem:[%s2965 + $0x1] sm:$0x1]
    %v2968 = vld [vmem:[%s2965 + $0x2] sm:$0x1]
    %v2969 = vld [vmem:[%s2965 + $0x3] sm:$0x1]
    %v2970 = vld [vmem:[%s2965 + $0x6] sm:$0x1]
    %v2971 = vld [vmem:[%s2965 + $0x7] sm:$0x1]
    %v2972 = vld [vmem:[%s2965 + $0x8] sm:$0x1]
    %v2973 = vld [vmem:[%s2965 + $0x9] sm:$0x1]
    %v2974 = vld [vmem:[%s2965 + $0xc] sm:$0x1]
    %v2975 = vld [vmem:[%s2965 + $0xd] sm:$0x1]
    %v2976 = vld [vmem:[%s2965 + $0xe] sm:$0x1]
    %v2977 = vld [vmem:[%s2965 + $0xf] sm:$0x1]
    %v2978 = vld [vmem:[%s2965 + $0x12] sm:$0x1]
    %v2979 = vld [vmem:[%s2965 + $0x13] sm:$0x1]
    %v2980 = vld [vmem:[%s2965 + $0x14] sm:$0x1]
    %v2981 = vld [vmem:[%s2965 + $0x15] sm:$0x1]
    %v2982 = vld [vmem:[#allocation9 + $0xe0] sm:$0xf]
    %v2983 = vld [vmem:[#allocation9 + $0xe4] sm:$0xf]
    %v2984 = vld [vmem:[#allocation9 + $0xe8] sm:$0xf]
    %v2985 = vld [vmem:[#allocation9 + $0xec] sm:$0xf]
    %v2986 = vld [vmem:[#allocation9 + $0xf0] sm:$0xf]
    %v2987 = vld [vmem:[#allocation9 + $0xf4] sm:$0xf]
    %v2988 = vld [vmem:[#allocation9 + $0xf8] sm:$0xf]
    %v2989 = vld [vmem:[#allocation9 + $0xfc] sm:$0xf]
    %v3006 = vcombine.low %v2966, %v2967
    %v3007 = vcombine.low %v2968, %v2969
    %v3008 = vcombine.low %v2970, %v2971
    %v3009 = vcombine.low %v2972, %v2973
    %v3011 = vunpack.c.l.s4 1966171168
    %v3012 = vunpack.c.0.s8 %v3011
    %v3013 = vlaneseq
    %v3014 = vshrl.u32 %v3013, 7
    %v3015 = vsub.s32 %v3012, %v3014
    %v3016 = vrot.slane %v3006, %v3015
    %v3018 = vunpack.c.l.s4 1966171168
    %v3019 = vunpack.c.0.s8 %v3018
    %v3020 = vlaneseq
    %v3021 = vshrl.u32 %v3020, 7
    %v3022 = vsub.s32 %v3019, %v3021
    %v3023 = vrot.slane %v3007, %v3022
    %v3025 = vunpack.c.l.s4 1966171168
    %v3026 = vunpack.c.0.s8 %v3025
    %v3027 = vlaneseq
    %v3028 = vshrl.u32 %v3027, 7
    %v3029 = vsub.s32 %v3026, %v3028
    %v3030 = vrot.slane %v3008, %v3029
    %v3032 = vunpack.c.l.s4 1966171168
    %v3033 = vunpack.c.0.s8 %v3032
    %v3034 = vlaneseq
    %v3035 = vshrl.u32 %v3034, 7
    %v3036 = vsub.s32 %v3033, %v3035
    %v3037 = vrot.slane %v3009, %v3036
    %v3038 = vcombine.low %v3016, %v3023
    %v3039 = vcombine.low %v3030, %v3037
    %v3041 = vunpack.c.l.s4 1966171168
    %v3042 = vunpack.c.0.s8 %v3041
    %v3043 = vlaneseq
    %v3044 = vshrl.u32 %v3043, 7
    %v3045 = vsub.s32 %v3042, %v3044
    %v3046 = vrot.slane %v3038, %v3045
    %v3048 = vunpack.c.l.s4 1966171168
    %v3049 = vunpack.c.0.s8 %v3048
    %v3050 = vlaneseq
    %v3051 = vshrl.u32 %v3050, 7
    %v3052 = vsub.s32 %v3049, %v3051
    %v3053 = vrot.slane %v3039, %v3052
    %v3054 = vcombine.low %v3046, %v3053
    %v3055 = vcombine.low %v2974, %v2975
    %v3056 = vcombine.low %v2976, %v2977
    %v3057 = vcombine.low %v2978, %v2979
    %v3058 = vcombine.low %v2980, %v2981
    %v3060 = vunpack.c.l.s4 1966171168
    %v3061 = vunpack.c.0.s8 %v3060
    %v3062 = vlaneseq
    %v3063 = vshrl.u32 %v3062, 7
    %v3064 = vsub.s32 %v3061, %v3063
    %v3065 = vrot.slane %v3055, %v3064
    %v3067 = vunpack.c.l.s4 1966171168
    %v3068 = vunpack.c.0.s8 %v3067
    %v3069 = vlaneseq
    %v3070 = vshrl.u32 %v3069, 7
    %v3071 = vsub.s32 %v3068, %v3070
    %v3072 = vrot.slane %v3056, %v3071
    %v3074 = vunpack.c.l.s4 1966171168
    %v3075 = vunpack.c.0.s8 %v3074
    %v3076 = vlaneseq
    %v3077 = vshrl.u32 %v3076, 7
    %v3078 = vsub.s32 %v3075, %v3077
    %v3079 = vrot.slane %v3057, %v3078
    %v3081 = vunpack.c.l.s4 1966171168
    %v3082 = vunpack.c.0.s8 %v3081
    %v3083 = vlaneseq
    %v3084 = vshrl.u32 %v3083, 7
    %v3085 = vsub.s32 %v3082, %v3084
    %v3086 = vrot.slane %v3058, %v3085
    %v3087 = vcombine.low %v3065, %v3072
    %v3088 = vcombine.low %v3079, %v3086
    %v3090 = vunpack.c.l.s4 1966171168
    %v3091 = vunpack.c.0.s8 %v3090
    %v3092 = vlaneseq
    %v3093 = vshrl.u32 %v3092, 7
    %v3094 = vsub.s32 %v3091, %v3093
    %v3095 = vrot.slane %v3087, %v3094
    %v3097 = vunpack.c.l.s4 1966171168
    %v3098 = vunpack.c.0.s8 %v3097
    %v3099 = vlaneseq
    %v3100 = vshrl.u32 %v3099, 7
    %v3101 = vsub.s32 %v3098, %v3100
    %v3102 = vrot.slane %v3088, %v3101
    %v3103 = vcombine.low %v3095, %v3102
    %v3112 = vunpack.c.l.b16 %v2982
    %v3113 = vunpack.c.l.b16 %v2983
    %v3114 = vunpack.c.l.b16 %v2984
    %v3115 = vunpack.c.l.b16 %v2985
    %v3116 = vunpack.c.l.b16 %v2986
    %v3117 = vunpack.c.l.b16 %v2987
    %v3118 = vunpack.c.l.b16 %v2988
    %v3119 = vunpack.c.l.b16 %v2989
    %v3120 = vpack.c.b16 %v3113, %v3112
    %v3121 = vpack.c.b16 %v3115, %v3114
    %v3122 = vpack.c.b16 %v3117, %v3116
    %v3123 = vpack.c.b16 %v3119, %v3118
    %v3129 = vsel %vm1607, %v3054, 0
    %v3132 = vsel %vm1607, %v3103, 0
    %3134 = vmatprep.subr.bf16.mxu0 0
    %3135 = vmatpush1.bf16.msra.mxu0 %v3120
    %3136 = vmatprep.subr.bf16.mxu0 0
    %3137 = vmatpush1.bf16.msra.mxu0 %v3121
    %3138 = vmatprep.subr.bf16.mxu0 0
    %3139 = vmatpush1.bf16.msra.mxu0 %v3122
    %3140 = vmatprep.subr.bf16.mxu0 0
    %3141 = vmatpush1.bf16.msra.mxu0 %v3123
    %3142 = vmatprep.subr.bf16.mxu0 0
    %3143 = vmatpush1.bf16.msra.mxu0 0
    %3144 = vmatprep.subr.bf16.mxu0 0
    %3145 = vmatpush1.bf16.msra.mxu0 0
    %3146 = vmatprep.subr.bf16.mxu0 0
    %3147 = vmatpush1.bf16.msra.mxu0 0
    %3148 = vmatprep.subr.bf16.mxu0 0
    %3149 = vmatpush1.bf16.msra.mxu0 0
    %3150 = vmatprep.subr.bf16.mxu0 0
    %3151 = vmatpush1.bf16.msra.mxu0 0
    %3152 = vmatprep.subr.bf16.mxu0 0
    %3153 = vmatpush1.bf16.msra.mxu0 0
    %3154 = vmatprep.subr.bf16.mxu0 0
    %3155 = vmatpush1.bf16.msra.mxu0 0
    %3156 = vmatprep.subr.bf16.mxu0 0
    %3157 = vmatpush1.bf16.msra.mxu0 0
    %3158 = vmatprep.subr.bf16.mxu0 0
    %3159 = vmatpush1.bf16.msra.mxu0 0
    %3160 = vmatprep.subr.bf16.mxu0 0
    %3161 = vmatpush1.bf16.msra.mxu0 0
    %3162 = vmatprep.subr.bf16.mxu0 0
    %3163 = vmatpush1.bf16.msra.mxu0 0
    %3164 = vmatprep.subr.bf16.mxu0 0
    %3165 = vmatpush1.bf16.msra.mxu0 0
    %3166 = vmatprep.mubr.bf16.mxu0 0
    %3167 = vmatmul.mubr.bf16.gmra.mrb[0].mxu0 %v3129
    %v3168 = vpop.f32.mrb[0].mxu0
    %v3169 = vadd.f32 0.0, %v3168
    %v3170 = vpop.f32.mrb[0].mxu0
    %v3171 = vpop.f32.mrb[0].mxu0
    %v3172 = vadd.f32 0.0, %v3171
    %v3173 = vpop.f32.mrb[0].mxu0
    %3174 = vmatprep.mubr.bf16.mxu0 0
    %3175 = vmatmul.mubr.bf16.gmra.mrb[0].mxu0 %v3132
    %v3176 = vpop.f32.mrb[0].mxu0
    %v3177 = vadd.f32 0.0, %v3176
    %v3178 = vpop.f32.mrb[0].mxu0
    %v3179 = vpop.f32.mrb[0].mxu0
    %v3180 = vadd.f32 0.0, %v3179
    %v3181 = vpop.f32.mrb[0].mxu0
    %3182 = vdwg.mxu0
    %v3183 = vadd.f32 %v2961, %v3169
    %v3184 = vadd.f32 %v2962, %v3172
    %v3185 = vadd.f32 %v2963, %v3177
    %v3186 = vadd.f32 %v2964, %v3180
    %s3187 = scalar_lea.vmem [#allocation2], 14
    %v3188 = vld [vmem:[%s3187] sm:$0x1]
    %v3189 = vld [vmem:[%s3187 + $0x1] sm:$0x1]
    %v3190 = vld [vmem:[%s3187 + $0x2] sm:$0x1]
    %v3191 = vld [vmem:[%s3187 + $0x3] sm:$0x1]
    %v3192 = vld [vmem:[%s3187 + $0x6] sm:$0x1]
    %v3193 = vld [vmem:[%s3187 + $0x7] sm:$0x1]
    %v3194 = vld [vmem:[%s3187 + $0x8] sm:$0x1]
    %v3195 = vld [vmem:[%s3187 + $0x9] sm:$0x1]
    %v3196 = vld [vmem:[%s3187 + $0xc] sm:$0x1]
    %v3197 = vld [vmem:[%s3187 + $0xd] sm:$0x1]
    %v3198 = vld [vmem:[%s3187 + $0xe] sm:$0x1]
    %v3199 = vld [vmem:[%s3187 + $0xf] sm:$0x1]
    %v3200 = vld [vmem:[%s3187 + $0x12] sm:$0x1]
    %v3201 = vld [vmem:[%s3187 + $0x13] sm:$0x1]
    %v3202 = vld [vmem:[%s3187 + $0x14] sm:$0x1]
    %v3203 = vld [vmem:[%s3187 + $0x15] sm:$0x1]
    %v3204 = vld [vmem:[#allocation9 + $0x100] sm:$0xf]
    %v3205 = vld [vmem:[#allocation9 + $0x104] sm:$0xf]
    %v3206 = vld [vmem:[#allocation9 + $0x108] sm:$0xf]
    %v3207 = vld [vmem:[#allocation9 + $0x10c] sm:$0xf]
    %v3208 = vld [vmem:[#allocation9 + $0x110] sm:$0xf]
    %v3209 = vld [vmem:[#allocation9 + $0x114] sm:$0xf]
    %v3210 = vld [vmem:[#allocation9 + $0x118] sm:$0xf]
    %v3211 = vld [vmem:[#allocation9 + $0x11c] sm:$0xf]
    %v3228 = vcombine.low %v3188, %v3189
    %v3229 = vcombine.low %v3190, %v3191
    %v3230 = vcombine.low %v3192, %v3193
    %v3231 = vcombine.low %v3194, %v3195
    %v3233 = vunpack.c.l.s4 1966171168
    %v3234 = vunpack.c.0.s8 %v3233
    %v3235 = vlaneseq
    %v3236 = vshrl.u32 %v3235, 7
    %v3237 = vsub.s32 %v3234, %v3236
    %v3238 = vrot.slane %v3228, %v3237
    %v3240 = vunpack.c.l.s4 1966171168
    %v3241 = vunpack.c.0.s8 %v3240
    %v3242 = vlaneseq
    %v3243 = vshrl.u32 %v3242, 7
    %v3244 = vsub.s32 %v3241, %v3243
    %v3245 = vrot.slane %v3229, %v3244
    %v3247 = vunpack.c.l.s4 1966171168
    %v3248 = vunpack.c.0.s8 %v3247
    %v3249 = vlaneseq
    %v3250 = vshrl.u32 %v3249, 7
    %v3251 = vsub.s32 %v3248, %v3250
    %v3252 = vrot.slane %v3230, %v3251
    %v3254 = vunpack.c.l.s4 1966171168
    %v3255 = vunpack.c.0.s8 %v3254
    %v3256 = vlaneseq
    %v3257 = vshrl.u32 %v3256, 7
    %v3258 = vsub.s32 %v3255, %v3257
    %v3259 = vrot.slane %v3231, %v3258
    %v3260 = vcombine.low %v3238, %v3245
    %v3261 = vcombine.low %v3252, %v3259
    %v3263 = vunpack.c.l.s4 1966171168
    %v3264 = vunpack.c.0.s8 %v3263
    %v3265 = vlaneseq
    %v3266 = vshrl.u32 %v3265, 7
    %v3267 = vsub.s32 %v3264, %v3266
    %v3268 = vrot.slane %v3260, %v3267
    %v3270 = vunpack.c.l.s4 1966171168
    %v3271 = vunpack.c.0.s8 %v3270
    %v3272 = vlaneseq
    %v3273 = vshrl.u32 %v3272, 7
    %v3274 = vsub.s32 %v3271, %v3273
    %v3275 = vrot.slane %v3261, %v3274
    %v3276 = vcombine.low %v3268, %v3275
    %v3277 = vcombine.low %v3196, %v3197
    %v3278 = vcombine.low %v3198, %v3199
    %v3279 = vcombine.low %v3200, %v3201
    %v3280 = vcombine.low %v3202, %v3203
    %v3282 = vunpack.c.l.s4 1966171168
    %v3283 = vunpack.c.0.s8 %v3282
    %v3284 = vlaneseq
    %v3285 = vshrl.u32 %v3284, 7
    %v3286 = vsub.s32 %v3283, %v3285
    %v3287 = vrot.slane %v3277, %v3286
    %v3289 = vunpack.c.l.s4 1966171168
    %v3290 = vunpack.c.0.s8 %v3289
    %v3291 = vlaneseq
    %v3292 = vshrl.u32 %v3291, 7
    %v3293 = vsub.s32 %v3290, %v3292
    %v3294 = vrot.slane %v3278, %v3293
    %v3296 = vunpack.c.l.s4 1966171168
    %v3297 = vunpack.c.0.s8 %v3296
    %v3298 = vlaneseq
    %v3299 = vshrl.u32 %v3298, 7
    %v3300 = vsub.s32 %v3297, %v3299
    %v3301 = vrot.slane %v3279, %v3300
    %v3303 = vunpack.c.l.s4 1966171168
    %v3304 = vunpack.c.0.s8 %v3303
    %v3305 = vlaneseq
    %v3306 = vshrl.u32 %v3305, 7
    %v3307 = vsub.s32 %v3304, %v3306
    %v3308 = vrot.slane %v3280, %v3307
    %v3309 = vcombine.low %v3287, %v3294
    %v3310 = vcombine.low %v3301, %v3308
    %v3312 = vunpack.c.l.s4 1966171168
    %v3313 = vunpack.c.0.s8 %v3312
    %v3314 = vlaneseq
    %v3315 = vshrl.u32 %v3314, 7
    %v3316 = vsub.s32 %v3313, %v3315
    %v3317 = vrot.slane %v3309, %v3316
    %v3319 = vunpack.c.l.s4 1966171168
    %v3320 = vunpack.c.0.s8 %v3319
    %v3321 = vlaneseq
    %v3322 = vshrl.u32 %v3321, 7
    %v3323 = vsub.s32 %v3320, %v3322
    %v3324 = vrot.slane %v3310, %v3323
    %v3325 = vcombine.low %v3317, %v3324
    %v3334 = vunpack.c.l.b16 %v3204
    %v3335 = vunpack.c.l.b16 %v3205
    %v3336 = vunpack.c.l.b16 %v3206
    %v3337 = vunpack.c.l.b16 %v3207
    %v3338 = vunpack.c.l.b16 %v3208
    %v3339 = vunpack.c.l.b16 %v3209
    %v3340 = vunpack.c.l.b16 %v3210
    %v3341 = vunpack.c.l.b16 %v3211
    %v3342 = vpack.c.b16 %v3335, %v3334
    %v3343 = vpack.c.b16 %v3337, %v3336
    %v3344 = vpack.c.b16 %v3339, %v3338
    %v3345 = vpack.c.b16 %v3341, %v3340
    %v3351 = vsel %vm1607, %v3276, 0
    %v3354 = vsel %vm1607, %v3325, 0
    %3356 = vmatprep.subr.bf16.mxu0 0
    %3357 = vmatpush1.bf16.msra.mxu0 %v3342
    %3358 = vmatprep.subr.bf16.mxu0 0
    %3359 = vmatpush1.bf16.msra.mxu0 %v3343
    %3360 = vmatprep.subr.bf16.mxu0 0
    %3361 = vmatpush1.bf16.msra.mxu0 %v3344
    %3362 = vmatprep.subr.bf16.mxu0 0
    %3363 = vmatpush1.bf16.msra.mxu0 %v3345
    %3364 = vmatprep.subr.bf16.mxu0 0
    %3365 = vmatpush1.bf16.msra.mxu0 0
    %3366 = vmatprep.subr.bf16.mxu0 0
    %3367 = vmatpush1.bf16.msra.mxu0 0
    %3368 = vmatprep.subr.bf16.mxu0 0
    %3369 = vmatpush1.bf16.msra.mxu0 0
    %3370 = vmatprep.subr.bf16.mxu0 0
    %3371 = vmatpush1.bf16.msra.mxu0 0
    %3372 = vmatprep.subr.bf16.mxu0 0
    %3373 = vmatpush1.bf16.msra.mxu0 0
    %3374 = vmatprep.subr.bf16.mxu0 0
    %3375 = vmatpush1.bf16.msra.mxu0 0
    %3376 = vmatprep.subr.bf16.mxu0 0
    %3377 = vmatpush1.bf16.msra.mxu0 0
    %3378 = vmatprep.subr.bf16.mxu0 0
    %3379 = vmatpush1.bf16.msra.mxu0 0
    %3380 = vmatprep.subr.bf16.mxu0 0
    %3381 = vmatpush1.bf16.msra.mxu0 0
    %3382 = vmatprep.subr.bf16.mxu0 0
    %3383 = vmatpush1.bf16.msra.mxu0 0
    %3384 = vmatprep.subr.bf16.mxu0 0
    %3385 = vmatpush1.bf16.msra.mxu0 0
    %3386 = vmatprep.subr.bf16.mxu0 0
    %3387 = vmatpush1.bf16.msra.mxu0 0
    %3388 = vmatprep.mubr.bf16.mxu0 0
    %3389 = vmatmul.mubr.bf16.gmra.mrb[0].mxu0 %v3351
    %v3390 = vpop.f32.mrb[0].mxu0
    %v3391 = vadd.f32 0.0, %v3390
    %v3392 = vpop.f32.mrb[0].mxu0
    %v3393 = vpop.f32.mrb[0].mxu0
    %v3394 = vadd.f32 0.0, %v3393
    %v3395 = vpop.f32.mrb[0].mxu0
    %3396 = vmatprep.mubr.bf16.mxu0 0
    %3397 = vmatmul.mubr.bf16.gmra.mrb[0].mxu0 %v3354
    %v3398 = vpop.f32.mrb[0].mxu0
    %v3399 = vadd.f32 0.0, %v3398
    %v3400 = vpop.f32.mrb[0].mxu0
    %v3401 = vpop.f32.mrb[0].mxu0
    %v3402 = vadd.f32 0.0, %v3401
    %v3403 = vpop.f32.mrb[0].mxu0
    %3404 = vdwg.mxu0
    %v3405 = vadd.f32 %v3183, %v3391
    %v3406 = vadd.f32 %v3184, %v3394
    %v3407 = vadd.f32 %v3185, %v3399
    %v3408 = vadd.f32 %v3186, %v3402
    %v3409 = vld [vmem:[#allocation10] sm:$0x1]
    %v3411 = vlaneseq
    %v3412 = vshrl.u32 %v3411, 7
    %v3413 = vsub.s32 0, %v3412
    %v3414 = vrot.slane %v3409, %v3413
    %v3416 = vadd.f32 %v3405, %v3414
    %v3417 = vadd.f32 %v3406, %v3414
    %v3418 = vadd.f32 %v3407, %v3414
    %v3419 = vadd.f32 %v3408, %v3414
    %v3420 = vmax.f32 %v3416, 0.0
    %v3421 = vmax.f32 %v3417, 0.0
    %v3422 = vmax.f32 %v3418, 0.0
    %v3423 = vmax.f32 %v3419, 0.0
    %v3428 = vcombine.high %v3420, %v3420
    %v3430 = vunpack.c.l.s4 1983009808
    %v3431 = vunpack.c.0.s8 %v3430
    %v3432 = vlaneseq
    %v3433 = vshrl.u32 %v3432, 7
    %v3434 = vsub.s32 %v3431, %v3433
    %v3435 = vrot.slane %v3420, %v3434
    %v3437 = vunpack.c.l.s4 1983009808
    %v3438 = vunpack.c.0.s8 %v3437
    %v3439 = vlaneseq
    %v3440 = vshrl.u32 %v3439, 7
    %v3441 = vsub.s32 %v3438, %v3440
    %v3442 = vrot.slane %v3428, %v3441
    %v3443 = vcombine.high %v3435, %v3435
    %v3444 = vcombine.high %v3442, %v3442
    %v3445 = vcombine.high %v3421, %v3421
    %v3447 = vunpack.c.l.s4 1983009808
    %v3448 = vunpack.c.0.s8 %v3447
    %v3449 = vlaneseq
    %v3450 = vshrl.u32 %v3449, 7
    %v3451 = vsub.s32 %v3448, %v3450
    %v3452 = vrot.slane %v3421, %v3451
    %v3454 = vunpack.c.l.s4 1983009808
    %v3455 = vunpack.c.0.s8 %v3454
    %v3456 = vlaneseq
    %v3457 = vshrl.u32 %v3456, 7
    %v3458 = vsub.s32 %v3455, %v3457
    %v3459 = vrot.slane %v3445, %v3458
    %v3460 = vcombine.high %v3452, %v3452
    %v3461 = vcombine.high %v3459, %v3459
    %v3462 = vcombine.high %v3422, %v3422
    %v3464 = vunpack.c.l.s4 1983009808
    %v3465 = vunpack.c.0.s8 %v3464
    %v3466 = vlaneseq
    %v3467 = vshrl.u32 %v3466, 7
    %v3468 = vsub.s32 %v3465, %v3467
    %v3469 = vrot.slane %v3422, %v3468
    %v3471 = vunpack.c.l.s4 1983009808
    %v3472 = vunpack.c.0.s8 %v3471
    %v3473 = vlaneseq
    %v3474 = vshrl.u32 %v3473, 7
    %v3475 = vsub.s32 %v3472, %v3474
    %v3476 = vrot.slane %v3462, %v3475
    %v3477 = vcombine.high %v3469, %v3469
    %v3478 = vcombine.high %v3476, %v3476
    %v3479 = vcombine.high %v3423, %v3423
    %v3481 = vunpack.c.l.s4 1983009808
    %v3482 = vunpack.c.0.s8 %v3481
    %v3483 = vlaneseq
    %v3484 = vshrl.u32 %v3483, 7
    %v3485 = vsub.s32 %v3482, %v3484
    %v3486 = vrot.slane %v3423, %v3485
    %v3488 = vunpack.c.l.s4 1983009808
    %v3489 = vunpack.c.0.s8 %v3488
    %v3490 = vlaneseq
    %v3491 = vshrl.u32 %v3490, 7
    %v3492 = vsub.s32 %v3489, %v3491
    %v3493 = vrot.slane %v3479, %v3492
    %v3494 = vcombine.high %v3486, %v3486
    %v3495 = vcombine.high %v3493, %v3493
    %vm3512 = vcmask 1041408
    %v3513 = vsel %vm3512, %v3435, -inf
    %v3514 = vsel %vm3512, %v3452, -inf
    %v3515 = vmax.f32 %v3513, %v3514
    %v3516 = vsel %vm3512, %v3443, -inf
    %v3517 = vsel %vm3512, %v3460, -inf
    %v3518 = vmax.f32 %v3516, %v3517
    %v3519 = vsel %vm3512, %v3442, -inf
    %v3520 = vsel %vm3512, %v3459, -inf
    %v3521 = vmax.f32 %v3519, %v3520
    %v3522 = vsel %vm3512, %v3444, -inf
    %v3523 = vsel %vm3512, %v3461, -inf
    %v3524 = vmax.f32 %v3522, %v3523
    %v3525 = vsel %vm3512, %v3469, -inf
    %v3526 = vsel %vm3512, %v3486, -inf
    %v3527 = vmax.f32 %v3525, %v3526
    %v3528 = vsel %vm3512, %v3477, -inf
    %v3529 = vsel %vm3512, %v3494, -inf
    %v3530 = vmax.f32 %v3528, %v3529
    %v3531 = vsel %vm3512, %v3476, -inf
    %v3532 = vsel %vm3512, %v3493, -inf
    %v3533 = vmax.f32 %v3531, %v3532
    %v3534 = vsel %vm3512, %v3478, -inf
    %v3535 = vsel %vm3512, %v3495, -inf
    %v3536 = vmax.f32 %v3534, %v3535
    %v3537 = vsel %vm3512, %v3515, -inf
    %v3538 = vsel %vm3512, %v3518, -inf
    %v3539 = vmax.f32 %v3537, %v3538
    %v3540 = vsel %vm3512, %v3521, -inf
    %v3541 = vsel %vm3512, %v3524, -inf
    %v3542 = vmax.f32 %v3540, %v3541
    %v3543 = vsel %vm3512, %v3527, -inf
    %v3544 = vsel %vm3512, %v3530, -inf
    %v3545 = vmax.f32 %v3543, %v3544
    %v3546 = vsel %vm3512, %v3533, -inf
    %v3547 = vsel %vm3512, %v3536, -inf
    %v3548 = vmax.f32 %v3546, %v3547
    %3549 = vst [vmem:[#allocation3] sm:$0x1] 0
    %3550 = vst [vmem:[#allocation3 + $0x1] sm:$0x1] 0
    %3551 = vst [vmem:[#allocation3 + $0x2] sm:$0x1] 0
    %3552 = vst [vmem:[#allocation3 + $0x3] sm:$0x1] 0
    %3553 = vst [vmem:[#allocation3 + $0x4] sm:$0x1] 0
    %3554 = vst [vmem:[#allocation3 + $0x5] sm:$0x1] 0
    %3555 = vst [vmem:[#allocation3 + $0x6] sm:$0x1] 0
    %3556 = vst [vmem:[#allocation3 + $0x7] sm:$0x1] 0
    %3557 = vst [vmem:[#allocation3 + $0x8] sm:$0x1] 0
    %3558 = vst [vmem:[#allocation3 + $0x9] sm:$0x1] 0
    %3559 = vst [vmem:[#allocation3 + $0xa] sm:$0x1] 0
    %3560 = vst [vmem:[#allocation3 + $0xb] sm:$0x1] 0
    %3561 = vst [vmem:[#allocation3 + $0xc] sm:$0x1] 0
    %3562 = vst [vmem:[#allocation3 + $0xd] sm:$0x1] 0
    %3563 = vst [vmem:[#allocation3 + $0xe] sm:$0x1] 0
    %3564 = vst [vmem:[#allocation3 + $0xf] sm:$0x1] 0
    %v3565 = vpack.c.bf16 %v3539, %v3539
    %v3566 = vpack.c.bf16 %v3542, %v3542
    %v3567 = vpack.c.bf16 %v3545, %v3545
    %v3568 = vpack.c.bf16 %v3548, %v3548
    %s3569 = scalar_lea.vmem [#allocation3], 5
    %3570 = vst [vmem:[%s3569] sm:$0x1] %v3565
    %3571 = vst [vmem:[%s3569 + $0x1] sm:$0x1] %v3566
    %3572 = vst [vmem:[%s3569 + $0x4] sm:$0x1] %v3567
    %3573 = vst [vmem:[%s3569 + $0x5] sm:$0x1] %v3568
    %v3574 = vld [vmem:[#allocation3] sm:$0x1]
    %v3575 = vld [vmem:[#allocation3 + $0x1] sm:$0x1]
    %v3576 = vld [vmem:[#allocation3 + $0x4] sm:$0x1]
    %v3577 = vld [vmem:[#allocation3 + $0x5] sm:$0x1]
    %v3578 = vld [vmem:[#allocation12] sm:$0xff]
    %v3579 = vld [vmem:[#allocation12 + $0x8] sm:$0xff]
    %v3580 = vld [vmem:[#allocation12 + $0x10] sm:$0xff]
    %v3581 = vld [vmem:[#allocation12 + $0x18] sm:$0xff]
    %v3582 = vld [vmem:[#allocation12 + $0x20] sm:$0xff]
    %v3583 = vld [vmem:[#allocation12 + $0x28] sm:$0xff]
    %v3584 = vld [vmem:[#allocation12 + $0x30] sm:$0xff]
    %v3585 = vld [vmem:[#allocation12 + $0x38] sm:$0xff]
    %v3586 = vld [vmem:[#allocation12 + $0x40] sm:$0xff]
    %v3587 = vld [vmem:[#allocation12 + $0x48] sm:$0xff]
    %v3588 = vld [vmem:[#allocation12 + $0x50] sm:$0xff]
    %v3589 = vld [vmem:[#allocation12 + $0x58] sm:$0xff]
    %v3590 = vld [vmem:[#allocation12 + $0x60] sm:$0xff]
    %v3591 = vld [vmem:[#allocation12 + $0x68] sm:$0xff]
    %v3592 = vld [vmem:[#allocation12 + $0x70] sm:$0xff]
    %v3593 = vld [vmem:[#allocation12 + $0x78] sm:$0xff]
    %s3594 = scalar_lea.vmem [#allocation3], 1
    %v3595 = vld [vmem:[%s3594] sm:$0x1]
    %v3596 = vld [vmem:[%s3594 + $0x1] sm:$0x1]
    %v3597 = vld [vmem:[%s3594 + $0x4] sm:$0x1]
    %v3598 = vld [vmem:[%s3594 + $0x5] sm:$0x1]
    %v3599 = vld [vmem:[#allocation12 + $0x80] sm:$0xff]
    %v3600 = vld [vmem:[#allocation12 + $0x88] sm:$0xff]
    %v3601 = vld [vmem:[#allocation12 + $0x90] sm:$0xff]
    %v3602 = vld [vmem:[#allocation12 + $0x98] sm:$0xff]
    %v3603 = vld [vmem:[#allocation12 + $0xa0] sm:$0xff]
    %v3604 = vld [vmem:[#allocation12 + $0xa8] sm:$0xff]
    %v3605 = vld [vmem:[#allocation12 + $0xb0] sm:$0xff]
    %v3606 = vld [vmem:[#allocation12 + $0xb8] sm:$0xff]
    %v3607 = vld [vmem:[#allocation12 + $0xc0] sm:$0xff]
    %v3608 = vld [vmem:[#allocation12 + $0xc8] sm:$0xff]
    %v3609 = vld [vmem:[#allocation12 + $0xd0] sm:$0xff]
    %v3610 = vld [vmem:[#allocation12 + $0xd8] sm:$0xff]
    %v3611 = vld [vmem:[#allocation12 + $0xe0] sm:$0xff]
    %v3612 = vld [vmem:[#allocation12 + $0xe8] sm:$0xff]
    %v3613 = vld [vmem:[#allocation12 + $0xf0] sm:$0xff]
    %v3614 = vld [vmem:[#allocation12 + $0xf8] sm:$0xff]
    %v3619 = vcombine.low %v3595, %v3596
    %v3620 = vcombine.low %v3597, %v3598
    %v3622 = vunpack.c.l.s4 1966171168
    %v3623 = vunpack.c.0.s8 %v3622
    %v3624 = vlaneseq
    %v3625 = vshrl.u32 %v3624, 7
    %v3626 = vsub.s32 %v3623, %v3625
    %v3627 = vrot.slane %v3619, %v3626
    %v3629 = vunpack.c.l.s4 1966171168
    %v3630 = vunpack.c.0.s8 %v3629
    %v3631 = vlaneseq
    %v3632 = vshrl.u32 %v3631, 7
    %v3633 = vsub.s32 %v3630, %v3632
    %v3634 = vrot.slane %v3620, %v3633
    %v3635 = vcombine.low %v3627, %v3634
    %v3637 = vunpack.c.l.s4 1966171168
    %v3638 = vunpack.c.0.s8 %v3637
    %v3639 = vlaneseq
    %v3640 = vshrl.u32 %v3639, 7
    %v3641 = vsub.s32 %v3638, %v3640
    %v3642 = vrot.slane %v3635, %v3641
    %v3660 = vunpack.c.l.b16 %v3599
    %v3661 = vunpack.c.h.b16 %v3599
    %v3662 = vunpack.c.l.b16 %v3600
    %v3663 = vunpack.c.h.b16 %v3600
    %v3664 = vunpack.c.l.b16 %v3601
    %v3665 = vunpack.c.h.b16 %v3601
    %v3666 = vunpack.c.l.b16 %v3602
    %v3667 = vunpack.c.h.b16 %v3602
    %v3668 = vunpack.c.l.b16 %v3603
    %v3669 = vunpack.c.h.b16 %v3603
    %v3670 = vunpack.c.l.b16 %v3604
    %v3671 = vunpack.c.h.b16 %v3604
    %v3672 = vunpack.c.l.b16 %v3605
    %v3673 = vunpack.c.h.b16 %v3605
    %v3674 = vunpack.c.l.b16 %v3606
    %v3675 = vunpack.c.h.b16 %v3606
    %v3676 = vunpack.c.l.b16 %v3607
    %v3677 = vunpack.c.h.b16 %v3607
    %v3678 = vunpack.c.l.b16 %v3608
    %v3679 = vunpack.c.h.b16 %v3608
    %v3680 = vunpack.c.l.b16 %v3609
    %v3681 = vunpack.c.h.b16 %v3609
    %v3682 = vunpack.c.l.b16 %v3610
    %v3683 = vunpack.c.h.b16 %v3610
    %v3684 = vunpack.c.l.b16 %v3611
    %v3685 = vunpack.c.h.b16 %v3611
    %v3686 = vunpack.c.l.b16 %v3612
    %v3687 = vunpack.c.h.b16 %v3612
    %v3688 = vunpack.c.l.b16 %v3613
    %v3689 = vunpack.c.h.b16 %v3613
    %v3690 = vunpack.c.l.b16 %v3614
    %v3691 = vunpack.c.h.b16 %v3614
    %v3692 = vpack.c.b16 %v3662, %v3660
    %v3693 = vpack.c.b16 %v3663, %v3661
    %v3694 = vpack.c.b16 %v3666, %v3664
    %v3695 = vpack.c.b16 %v3667, %v3665
    %v3696 = vpack.c.b16 %v3670, %v3668
    %v3697 = vpack.c.b16 %v3671, %v3669
    %v3698 = vpack.c.b16 %v3674, %v3672
    %v3699 = vpack.c.b16 %v3675, %v3673
    %v3700 = vpack.c.b16 %v3678, %v3676
    %v3701 = vpack.c.b16 %v3679, %v3677
    %v3702 = vpack.c.b16 %v3682, %v3680
    %v3703 = vpack.c.b16 %v3683, %v3681
    %v3704 = vpack.c.b16 %v3686, %v3684
    %v3705 = vpack.c.b16 %v3687, %v3685
    %v3706 = vpack.c.b16 %v3690, %v3688
    %v3707 = vpack.c.b16 %v3691, %v3689
    %3724 = vmatprep.subr.bf16.mxu0 %v3693
    %3725 = vmatpush1.bf16.msra.mxu0 %v3692
    %3726 = vmatprep.subr.bf16.mxu0 %v3695
    %3727 = vmatpush1.bf16.msra.mxu0 %v3694
    %3728 = vmatprep.subr.bf16.mxu0 %v3697
    %3729 = vmatpush1.bf16.msra.mxu0 %v3696
    %3730 = vmatprep.subr.bf16.mxu0 %v3699
    %3731 = vmatpush1.bf16.msra.mxu0 %v3698
    %3732 = vmatprep.subr.bf16.mxu0 %v3701
    %3733 = vmatpush1.bf16.msra.mxu0 %v3700
    %3734 = vmatprep.subr.bf16.mxu0 %v3703
    %3735 = vmatpush1.bf16.msra.mxu0 %v3702
    %3736 = vmatprep.subr.bf16.mxu0 %v3705
    %3737 = vmatpush1.bf16.msra.mxu0 %v3704
    %3738 = vmatprep.subr.bf16.mxu0 %v3707
    %3739 = vmatpush1.bf16.msra.mxu0 %v3706
    %3740 = vmatprep.subr.bf16.mxu0 0
    %3741 = vmatpush1.bf16.msra.mxu0 0
    %3742 = vmatprep.subr.bf16.mxu0 0
    %3743 = vmatpush1.bf16.msra.mxu0 0
    %3744 = vmatprep.subr.bf16.mxu0 0
    %3745 = vmatpush1.bf16.msra.mxu0 0
    %3746 = vmatprep.subr.bf16.mxu0 0
    %3747 = vmatpush1.bf16.msra.mxu0 0
    %3748 = vmatprep.subr.bf16.mxu0 0
    %3749 = vmatpush1.bf16.msra.mxu0 0
    %3750 = vmatprep.subr.bf16.mxu0 0
    %3751 = vmatpush1.bf16.msra.mxu0 0
    %3752 = vmatprep.subr.bf16.mxu0 0
    %3753 = vmatpush1.bf16.msra.mxu0 0
    %3754 = vmatprep.subr.bf16.mxu0 0
    %3755 = vmatpush1.bf16.msra.mxu0 0
    %3756 = vmatprep.mubr.bf16.mxu0 0
    %3757 = vmatmul.mubr.bf16.gmra.mrb[0].mxu0 %v3642
    %v3758 = vpop.f32.mrb[0].mxu0
    %v3759 = vadd.f32 0.0, %v3758
    %v3760 = vpop.f32.mrb[0].mxu0
    %v3761 = vadd.f32 0.0, %v3760
    %v3762 = vpop.f32.mrb[0].mxu0
    %v3763 = vpop.f32.mrb[0].mxu0
    %3764 = vdwg.mxu0
    %v3769 = vcombine.low %v3574, %v3575
    %v3770 = vcombine.low %v3576, %v3577
    %v3772 = vunpack.c.l.s4 1966171168
    %v3773 = vunpack.c.0.s8 %v3772
    %v3774 = vlaneseq
    %v3775 = vshrl.u32 %v3774, 7
    %v3776 = vsub.s32 %v3773, %v3775
    %v3777 = vrot.slane %v3769, %v3776
    %v3779 = vunpack.c.l.s4 1966171168
    %v3780 = vunpack.c.0.s8 %v3779
    %v3781 = vlaneseq
    %v3782 = vshrl.u32 %v3781, 7
    %v3783 = vsub.s32 %v3780, %v3782
    %v3784 = vrot.slane %v3770, %v3783
    %v3785 = vcombine.low %v3777, %v3784
    %v3787 = vunpack.c.l.s4 1966171168
    %v3788 = vunpack.c.0.s8 %v3787
    %v3789 = vlaneseq
    %v3790 = vshrl.u32 %v3789, 7
    %v3791 = vsub.s32 %v3788, %v3790
    %v3792 = vrot.slane %v3785, %v3791
    %v3810 = vunpack.c.l.b16 %v3578
    %v3811 = vunpack.c.h.b16 %v3578
    %v3812 = vunpack.c.l.b16 %v3579
    %v3813 = vunpack.c.h.b16 %v3579
    %v3814 = vunpack.c.l.b16 %v3580
    %v3815 = vunpack.c.h.b16 %v3580
    %v3816 = vunpack.c.l.b16 %v3581
    %v3817 = vunpack.c.h.b16 %v3581
    %v3818 = vunpack.c.l.b16 %v3582
    %v3819 = vunpack.c.h.b16 %v3582
    %v3820 = vunpack.c.l.b16 %v3583
    %v3821 = vunpack.c.h.b16 %v3583
    %v3822 = vunpack.c.l.b16 %v3584
    %v3823 = vunpack.c.h.b16 %v3584
    %v3824 = vunpack.c.l.b16 %v3585
    %v3825 = vunpack.c.h.b16 %v3585
    %v3826 = vunpack.c.l.b16 %v3586
    %v3827 = vunpack.c.h.b16 %v3586
    %v3828 = vunpack.c.l.b16 %v3587
    %v3829 = vunpack.c.h.b16 %v3587
    %v3830 = vunpack.c.l.b16 %v3588
    %v3831 = vunpack.c.h.b16 %v3588
    %v3832 = vunpack.c.l.b16 %v3589
    %v3833 = vunpack.c.h.b16 %v3589
    %v3834 = vunpack.c.l.b16 %v3590
    %v3835 = vunpack.c.h.b16 %v3590
    %v3836 = vunpack.c.l.b16 %v3591
    %v3837 = vunpack.c.h.b16 %v3591
    %v3838 = vunpack.c.l.b16 %v3592
    %v3839 = vunpack.c.h.b16 %v3592
    %v3840 = vunpack.c.l.b16 %v3593
    %v3841 = vunpack.c.h.b16 %v3593
    %v3842 = vpack.c.b16 %v3812, %v3810
    %v3843 = vpack.c.b16 %v3813, %v3811
    %v3844 = vpack.c.b16 %v3816, %v3814
    %v3845 = vpack.c.b16 %v3817, %v3815
    %v3846 = vpack.c.b16 %v3820, %v3818
    %v3847 = vpack.c.b16 %v3821, %v3819
    %v3848 = vpack.c.b16 %v3824, %v3822
    %v3849 = vpack.c.b16 %v3825, %v3823
    %v3850 = vpack.c.b16 %v3828, %v3826
    %v3851 = vpack.c.b16 %v3829, %v3827
    %v3852 = vpack.c.b16 %v3832, %v3830
    %v3853 = vpack.c.b16 %v3833, %v3831
    %v3854 = vpack.c.b16 %v3836, %v3834
    %v3855 = vpack.c.b16 %v3837, %v3835
    %v3856 = vpack.c.b16 %v3840, %v3838
    %v3857 = vpack.c.b16 %v3841, %v3839
    %3874 = vmatprep.subr.bf16.mxu0 %v3843
    %3875 = vmatpush1.bf16.msra.mxu0 %v3842
    %3876 = vmatprep.subr.bf16.mxu0 %v3845
    %3877 = vmatpush1.bf16.msra.mxu0 %v3844
    %3878 = vmatprep.subr.bf16.mxu0 %v3847
    %3879 = vmatpush1.bf16.msra.mxu0 %v3846
    %3880 = vmatprep.subr.bf16.mxu0 %v3849
    %3881 = vmatpush1.bf16.msra.mxu0 %v3848
    %3882 = vmatprep.subr.bf16.mxu0 %v3851
    %3883 = vmatpush1.bf16.msra.mxu0 %v3850
    %3884 = vmatprep.subr.bf16.mxu0 %v3853
    %3885 = vmatpush1.bf16.msra.mxu0 %v3852
    %3886 = vmatprep.subr.bf16.mxu0 %v3855
    %3887 = vmatpush1.bf16.msra.mxu0 %v3854
    %3888 = vmatprep.subr.bf16.mxu0 %v3857
    %3889 = vmatpush1.bf16.msra.mxu0 %v3856
    %3890 = vmatprep.subr.bf16.mxu0 0
    %3891 = vmatpush1.bf16.msra.mxu0 0
    %3892 = vmatprep.subr.bf16.mxu0 0
    %3893 = vmatpush1.bf16.msra.mxu0 0
    %3894 = vmatprep.subr.bf16.mxu0 0
    %3895 = vmatpush1.bf16.msra.mxu0 0
    %3896 = vmatprep.subr.bf16.mxu0 0
    %3897 = vmatpush1.bf16.msra.mxu0 0
    %3898 = vmatprep.subr.bf16.mxu0 0
    %3899 = vmatpush1.bf16.msra.mxu0 0
    %3900 = vmatprep.subr.bf16.mxu0 0
    %3901 = vmatpush1.bf16.msra.mxu0 0
    %3902 = vmatprep.subr.bf16.mxu0 0
    %3903 = vmatpush1.bf16.msra.mxu0 0
    %3904 = vmatprep.subr.bf16.mxu0 0
    %3905 = vmatpush1.bf16.msra.mxu0 0
    %3906 = vmatprep.mubr.bf16.mxu0 0
    %3907 = vmatmul.mubr.bf16.gmra.mrb[0].mxu0 %v3792
    %v3908 = vpop.f32.mrb[0].mxu0
    %v3909 = vadd.f32 %v3759, %v3908
    %v3910 = vpop.f32.mrb[0].mxu0
    %v3911 = vadd.f32 %v3761, %v3910
    %v3912 = vpop.f32.mrb[0].mxu0
    %v3913 = vpop.f32.mrb[0].mxu0
    %3914 = vdwg.mxu0
    %s3915 = scalar_lea.vmem [#allocation3], 2
    %v3916 = vld [vmem:[%s3915] sm:$0x1]
    %v3917 = vld [vmem:[%s3915 + $0x1] sm:$0x1]
    %v3918 = vld [vmem:[%s3915 + $0x4] sm:$0x1]
    %v3919 = vld [vmem:[%s3915 + $0x5] sm:$0x1]
    %v3920 = vld [vmem:[#allocation12 + $0x100] sm:$0xff]
    %v3921 = vld [vmem:[#allocation12 + $0x108] sm:$0xff]
    %v3922 = vld [vmem:[#allocation12 + $0x110] sm:$0xff]
    %v3923 = vld [vmem:[#allocation12 + $0x118] sm:$0xff]
    %v3924 = vld [vmem:[#allocation12 + $0x120] sm:$0xff]
    %v3925 = vld [vmem:[#allocation12 + $0x128] sm:$0xff]
    %v3926 = vld [vmem:[#allocation12 + $0x130] sm:$0xff]
    %v3927 = vld [vmem:[#allocation12 + $0x138] sm:$0xff]
    %v3928 = vld [vmem:[#allocation12 + $0x140] sm:$0xff]
    %v3929 = vld [vmem:[#allocation12 + $0x148] sm:$0xff]
    %v3930 = vld [vmem:[#allocation12 + $0x150] sm:$0xff]
    %v3931 = vld [vmem:[#allocation12 + $0x158] sm:$0xff]
    %v3932 = vld [vmem:[#allocation12 + $0x160] sm:$0xff]
    %v3933 = vld [vmem:[#allocation12 + $0x168] sm:$0xff]
    %v3934 = vld [vmem:[#allocation12 + $0x170] sm:$0xff]
    %v3935 = vld [vmem:[#allocation12 + $0x178] sm:$0xff]
    %v3940 = vcombine.low %v3916, %v3917
    %v3941 = vcombine.low %v3918, %v3919
    %v3943 = vunpack.c.l.s4 1966171168
    %v3944 = vunpack.c.0.s8 %v3943
    %v3945 = vlaneseq
    %v3946 = vshrl.u32 %v3945, 7
    %v3947 = vsub.s32 %v3944, %v3946
    %v3948 = vrot.slane %v3940, %v3947
    %v3950 = vunpack.c.l.s4 1966171168
    %v3951 = vunpack.c.0.s8 %v3950
    %v3952 = vlaneseq
    %v3953 = vshrl.u32 %v3952, 7
    %v3954 = vsub.s32 %v3951, %v3953
    %v3955 = vrot.slane %v3941, %v3954
    %v3956 = vcombine.low %v3948, %v3955
    %v3958 = vunpack.c.l.s4 1966171168
    %v3959 = vunpack.c.0.s8 %v3958
    %v3960 = vlaneseq
    %v3961 = vshrl.u32 %v3960, 7
    %v3962 = vsub.s32 %v3959, %v3961
    %v3963 = vrot.slane %v3956, %v3962
    %v3981 = vunpack.c.l.b16 %v3920
    %v3982 = vunpack.c.h.b16 %v3920
    %v3983 = vunpack.c.l.b16 %v3921
    %v3984 = vunpack.c.h.b16 %v3921
    %v3985 = vunpack.c.l.b16 %v3922
    %v3986 = vunpack.c.h.b16 %v3922
    %v3987 = vunpack.c.l.b16 %v3923
    %v3988 = vunpack.c.h.b16 %v3923
    %v3989 = vunpack.c.l.b16 %v3924
    %v3990 = vunpack.c.h.b16 %v3924
    %v3991 = vunpack.c.l.b16 %v3925
    %v3992 = vunpack.c.h.b16 %v3925
    %v3993 = vunpack.c.l.b16 %v3926
    %v3994 = vunpack.c.h.b16 %v3926
    %v3995 = vunpack.c.l.b16 %v3927
    %v3996 = vunpack.c.h.b16 %v3927
    %v3997 = vunpack.c.l.b16 %v3928
    %v3998 = vunpack.c.h.b16 %v3928
    %v3999 = vunpack.c.l.b16 %v3929
    %v4000 = vunpack.c.h.b16 %v3929
    %v4001 = vunpack.c.l.b16 %v3930
    %v4002 = vunpack.c.h.b16 %v3930
    %v4003 = vunpack.c.l.b16 %v3931
    %v4004 = vunpack.c.h.b16 %v3931
    %v4005 = vunpack.c.l.b16 %v3932
    %v4006 = vunpack.c.h.b16 %v3932
    %v4007 = vunpack.c.l.b16 %v3933
    %v4008 = vunpack.c.h.b16 %v3933
    %v4009 = vunpack.c.l.b16 %v3934
    %v4010 = vunpack.c.h.b16 %v3934
    %v4011 = vunpack.c.l.b16 %v3935
    %v4012 = vunpack.c.h.b16 %v3935
    %v4013 = vpack.c.b16 %v3983, %v3981
    %v4014 = vpack.c.b16 %v3984, %v3982
    %v4015 = vpack.c.b16 %v3987, %v3985
    %v4016 = vpack.c.b16 %v3988, %v3986
    %v4017 = vpack.c.b16 %v3991, %v3989
    %v4018 = vpack.c.b16 %v3992, %v3990
    %v4019 = vpack.c.b16 %v3995, %v3993
    %v4020 = vpack.c.b16 %v3996, %v3994
    %v4021 = vpack.c.b16 %v3999, %v3997
    %v4022 = vpack.c.b16 %v4000, %v3998
    %v4023 = vpack.c.b16 %v4003, %v4001
    %v4024 = vpack.c.b16 %v4004, %v4002
    %v4025 = vpack.c.b16 %v4007, %v4005
    %v4026 = vpack.c.b16 %v4008, %v4006
    %v4027 = vpack.c.b16 %v4011, %v4009
    %v4028 = vpack.c.b16 %v4012, %v4010
    %4045 = vmatprep.subr.bf16.mxu0 %v4014
    %4046 = vmatpush1.bf16.msra.mxu0 %v4013
    %4047 = vmatprep.subr.bf16.mxu0 %v4016
    %4048 = vmatpush1.bf16.msra.mxu0 %v4015
    %4049 = vmatprep.subr.bf16.mxu0 %v4018
    %4050 = vmatpush1.bf16.msra.mxu0 %v4017
    %4051 = vmatprep.subr.bf16.mxu0 %v4020
    %4052 = vmatpush1.bf16.msra.mxu0 %v4019
    %4053 = vmatprep.subr.bf16.mxu0 %v4022
    %4054 = vmatpush1.bf16.msra.mxu0 %v4021
    %4055 = vmatprep.subr.bf16.mxu0 %v4024
    %4056 = vmatpush1.bf16.msra.mxu0 %v4023
    %4057 = vmatprep.subr.bf16.mxu0 %v4026
    %4058 = vmatpush1.bf16.msra.mxu0 %v4025
    %4059 = vmatprep.subr.bf16.mxu0 %v4028
    %4060 = vmatpush1.bf16.msra.mxu0 %v4027
    %4061 = vmatprep.subr.bf16.mxu0 0
    %4062 = vmatpush1.bf16.msra.mxu0 0
    %4063 = vmatprep.subr.bf16.mxu0 0
    %4064 = vmatpush1.bf16.msra.mxu0 0
    %4065 = vmatprep.subr.bf16.mxu0 0
    %4066 = vmatpush1.bf16.msra.mxu0 0
    %4067 = vmatprep.subr.bf16.mxu0 0
    %4068 = vmatpush1.bf16.msra.mxu0 0
    %4069 = vmatprep.subr.bf16.mxu0 0
    %4070 = vmatpush1.bf16.msra.mxu0 0
    %4071 = vmatprep.subr.bf16.mxu0 0
    %4072 = vmatpush1.bf16.msra.mxu0 0
    %4073 = vmatprep.subr.bf16.mxu0 0
    %4074 = vmatpush1.bf16.msra.mxu0 0
    %4075 = vmatprep.subr.bf16.mxu0 0
    %4076 = vmatpush1.bf16.msra.mxu0 0
    %4077 = vmatprep.mubr.bf16.mxu0 0
    %4078 = vmatmul.mubr.bf16.gmra.mrb[0].mxu0 %v3963
    %v4079 = vpop.f32.mrb[0].mxu0
    %v4080 = vadd.f32 0.0, %v4079
    %v4081 = vpop.f32.mrb[0].mxu0
    %v4082 = vadd.f32 0.0, %v4081
    %v4083 = vpop.f32.mrb[0].mxu0
    %v4084 = vpop.f32.mrb[0].mxu0
    %4085 = vdwg.mxu0
    %v4086 = vadd.f32 %v3909, %v4080
    %v4087 = vadd.f32 %v3911, %v4082
    %s4088 = scalar_lea.vmem [#allocation3], 4
    %v4089 = vld [vmem:[%s4088] sm:$0x1]
    %v4090 = vld [vmem:[%s4088 + $0x1] sm:$0x1]
    %v4091 = vld [vmem:[%s4088 + $0x4] sm:$0x1]
    %v4092 = vld [vmem:[%s4088 + $0x5] sm:$0x1]
    %v4093 = vld [vmem:[#allocation12 + $0x180] sm:$0xff]
    %v4094 = vld [vmem:[#allocation12 + $0x188] sm:$0xff]
    %v4095 = vld [vmem:[#allocation12 + $0x190] sm:$0xff]
    %v4096 = vld [vmem:[#allocation12 + $0x198] sm:$0xff]
    %v4097 = vld [vmem:[#allocation12 + $0x1a0] sm:$0xff]
    %v4098 = vld [vmem:[#allocation12 + $0x1a8] sm:$0xff]
    %v4099 = vld [vmem:[#allocation12 + $0x1b0] sm:$0xff]
    %v4100 = vld [vmem:[#allocation12 + $0x1b8] sm:$0xff]
    %v4101 = vld [vmem:[#allocation12 + $0x1c0] sm:$0xff]
    %v4102 = vld [vmem:[#allocation12 + $0x1c8] sm:$0xff]
    %v4103 = vld [vmem:[#allocation12 + $0x1d0] sm:$0xff]
    %v4104 = vld [vmem:[#allocation12 + $0x1d8] sm:$0xff]
    %v4105 = vld [vmem:[#allocation12 + $0x1e0] sm:$0xff]
    %v4106 = vld [vmem:[#allocation12 + $0x1e8] sm:$0xff]
    %v4107 = vld [vmem:[#allocation12 + $0x1f0] sm:$0xff]
    %v4108 = vld [vmem:[#allocation12 + $0x1f8] sm:$0xff]
    %v4113 = vcombine.low %v4089, %v4090
    %v4114 = vcombine.low %v4091, %v4092
    %v4116 = vunpack.c.l.s4 1966171168
    %v4117 = vunpack.c.0.s8 %v4116
    %v4118 = vlaneseq
    %v4119 = vshrl.u32 %v4118, 7
    %v4120 = vsub.s32 %v4117, %v4119
    %v4121 = vrot.slane %v4113, %v4120
    %v4123 = vunpack.c.l.s4 1966171168
    %v4124 = vunpack.c.0.s8 %v4123
    %v4125 = vlaneseq
    %v4126 = vshrl.u32 %v4125, 7
    %v4127 = vsub.s32 %v4124, %v4126
    %v4128 = vrot.slane %v4114, %v4127
    %v4129 = vcombine.low %v4121, %v4128
    %v4131 = vunpack.c.l.s4 1966171168
    %v4132 = vunpack.c.0.s8 %v4131
    %v4133 = vlaneseq
    %v4134 = vshrl.u32 %v4133, 7
    %v4135 = vsub.s32 %v4132, %v4134
    %v4136 = vrot.slane %v4129, %v4135
    %v4154 = vunpack.c.l.b16 %v4093
    %v4155 = vunpack.c.h.b16 %v4093
    %v4156 = vunpack.c.l.b16 %v4094
    %v4157 = vunpack.c.h.b16 %v4094
    %v4158 = vunpack.c.l.b16 %v4095
    %v4159 = vunpack.c.h.b16 %v4095
    %v4160 = vunpack.c.l.b16 %v4096
    %v4161 = vunpack.c.h.b16 %v4096
    %v4162 = vunpack.c.l.b16 %v4097
    %v4163 = vunpack.c.h.b16 %v4097
    %v4164 = vunpack.c.l.b16 %v4098
    %v4165 = vunpack.c.h.b16 %v4098
    %v4166 = vunpack.c.l.b16 %v4099
    %v4167 = vunpack.c.h.b16 %v4099
    %v4168 = vunpack.c.l.b16 %v4100
    %v4169 = vunpack.c.h.b16 %v4100
    %v4170 = vunpack.c.l.b16 %v4101
    %v4171 = vunpack.c.h.b16 %v4101
    %v4172 = vunpack.c.l.b16 %v4102
    %v4173 = vunpack.c.h.b16 %v4102
    %v4174 = vunpack.c.l.b16 %v4103
    %v4175 = vunpack.c.h.b16 %v4103
    %v4176 = vunpack.c.l.b16 %v4104
    %v4177 = vunpack.c.h.b16 %v4104
    %v4178 = vunpack.c.l.b16 %v4105
    %v4179 = vunpack.c.h.b16 %v4105
    %v4180 = vunpack.c.l.b16 %v4106
    %v4181 = vunpack.c.h.b16 %v4106
    %v4182 = vunpack.c.l.b16 %v4107
    %v4183 = vunpack.c.h.b16 %v4107
    %v4184 = vunpack.c.l.b16 %v4108
    %v4185 = vunpack.c.h.b16 %v4108
    %v4186 = vpack.c.b16 %v4156, %v4154
    %v4187 = vpack.c.b16 %v4157, %v4155
    %v4188 = vpack.c.b16 %v4160, %v4158
    %v4189 = vpack.c.b16 %v4161, %v4159
    %v4190 = vpack.c.b16 %v4164, %v4162
    %v4191 = vpack.c.b16 %v4165, %v4163
    %v4192 = vpack.c.b16 %v4168, %v4166
    %v4193 = vpack.c.b16 %v4169, %v4167
    %v4194 = vpack.c.b16 %v4172, %v4170
    %v4195 = vpack.c.b16 %v4173, %v4171
    %v4196 = vpack.c.b16 %v4176, %v4174
    %v4197 = vpack.c.b16 %v4177, %v4175
    %v4198 = vpack.c.b16 %v4180, %v4178
    %v4199 = vpack.c.b16 %v4181, %v4179
    %v4200 = vpack.c.b16 %v4184, %v4182
    %v4201 = vpack.c.b16 %v4185, %v4183
    %4218 = vmatprep.subr.bf16.mxu0 %v4187
    %4219 = vmatpush1.bf16.msra.mxu0 %v4186
    %4220 = vmatprep.subr.bf16.mxu0 %v4189
    %4221 = vmatpush1.bf16.msra.mxu0 %v4188
    %4222 = vmatprep.subr.bf16.mxu0 %v4191
    %4223 = vmatpush1.bf16.msra.mxu0 %v4190
    %4224 = vmatprep.subr.bf16.mxu0 %v4193
    %4225 = vmatpush1.bf16.msra.mxu0 %v4192
    %4226 = vmatprep.subr.bf16.mxu0 %v4195
    %4227 = vmatpush1.bf16.msra.mxu0 %v4194
    %4228 = vmatprep.subr.bf16.mxu0 %v4197
    %4229 = vmatpush1.bf16.msra.mxu0 %v4196
    %4230 = vmatprep.subr.bf16.mxu0 %v4199
    %4231 = vmatpush1.bf16.msra.mxu0 %v4198
    %4232 = vmatprep.subr.bf16.mxu0 %v4201
    %4233 = vmatpush1.bf16.msra.mxu0 %v4200
    %4234 = vmatprep.subr.bf16.mxu0 0
    %4235 = vmatpush1.bf16.msra.mxu0 0
    %4236 = vmatprep.subr.bf16.mxu0 0
    %4237 = vmatpush1.bf16.msra.mxu0 0
    %4238 = vmatprep.subr.bf16.mxu0 0
    %4239 = vmatpush1.bf16.msra.mxu0 0
    %4240 = vmatprep.subr.bf16.mxu0 0
    %4241 = vmatpush1.bf16.msra.mxu0 0
    %4242 = vmatprep.subr.bf16.mxu0 0
    %4243 = vmatpush1.bf16.msra.mxu0 0
    %4244 = vmatprep.subr.bf16.mxu0 0
    %4245 = vmatpush1.bf16.msra.mxu0 0
    %4246 = vmatprep.subr.bf16.mxu0 0
    %4247 = vmatpush1.bf16.msra.mxu0 0
    %4248 = vmatprep.subr.bf16.mxu0 0
    %4249 = vmatpush1.bf16.msra.mxu0 0
    %4250 = vmatprep.mubr.bf16.mxu0 0
    %4251 = vmatmul.mubr.bf16.gmra.mrb[0].mxu0 %v4136
    %v4252 = vpop.f32.mrb[0].mxu0
    %v4253 = vadd.f32 0.0, %v4252
    %v4254 = vpop.f32.mrb[0].mxu0
    %v4255 = vadd.f32 0.0, %v4254
    %v4256 = vpop.f32.mrb[0].mxu0
    %v4257 = vpop.f32.mrb[0].mxu0
    %4258 = vdwg.mxu0
    %v4259 = vadd.f32 %v4086, %v4253
    %v4260 = vadd.f32 %v4087, %v4255
    %v4261 = vld [vmem:[%s3569] sm:$0x1]
    %v4262 = vld [vmem:[%s3569 + $0x1] sm:$0x1]
    %v4263 = vld [vmem:[%s3569 + $0x4] sm:$0x1]
    %v4264 = vld [vmem:[%s3569 + $0x5] sm:$0x1]
    %v4265 = vld [vmem:[#allocation12 + $0x200] sm:$0xff]
    %v4266 = vld [vmem:[#allocation12 + $0x208] sm:$0xff]
    %v4267 = vld [vmem:[#allocation12 + $0x210] sm:$0xff]
    %v4268 = vld [vmem:[#allocation12 + $0x218] sm:$0xff]
    %v4269 = vld [vmem:[#allocation12 + $0x220] sm:$0xff]
    %v4270 = vld [vmem:[#allocation12 + $0x228] sm:$0xff]
    %v4271 = vld [vmem:[#allocation12 + $0x230] sm:$0xff]
    %v4272 = vld [vmem:[#allocation12 + $0x238] sm:$0xff]
    %v4273 = vld [vmem:[#allocation12 + $0x240] sm:$0xff]
    %v4274 = vld [vmem:[#allocation12 + $0x248] sm:$0xff]
    %v4275 = vld [vmem:[#allocation12 + $0x250] sm:$0xff]
    %v4276 = vld [vmem:[#allocation12 + $0x258] sm:$0xff]
    %v4277 = vld [vmem:[#allocation12 + $0x260] sm:$0xff]
    %v4278 = vld [vmem:[#allocation12 + $0x268] sm:$0xff]
    %v4279 = vld [vmem:[#allocation12 + $0x270] sm:$0xff]
    %v4280 = vld [vmem:[#allocation12 + $0x278] sm:$0xff]
    %v4285 = vcombine.low %v4261, %v4262
    %v4286 = vcombine.low %v4263, %v4264
    %v4288 = vunpack.c.l.s4 1966171168
    %v4289 = vunpack.c.0.s8 %v4288
    %v4290 = vlaneseq
    %v4291 = vshrl.u32 %v4290, 7
    %v4292 = vsub.s32 %v4289, %v4291
    %v4293 = vrot.slane %v4285, %v4292
    %v4295 = vunpack.c.l.s4 1966171168
    %v4296 = vunpack.c.0.s8 %v4295
    %v4297 = vlaneseq
    %v4298 = vshrl.u32 %v4297, 7
    %v4299 = vsub.s32 %v4296, %v4298
    %v4300 = vrot.slane %v4286, %v4299
    %v4301 = vcombine.low %v4293, %v4300
    %v4303 = vunpack.c.l.s4 1966171168
    %v4304 = vunpack.c.0.s8 %v4303
    %v4305 = vlaneseq
    %v4306 = vshrl.u32 %v4305, 7
    %v4307 = vsub.s32 %v4304, %v4306
    %v4308 = vrot.slane %v4301, %v4307
    %v4326 = vunpack.c.l.b16 %v4265
    %v4327 = vunpack.c.h.b16 %v4265
    %v4328 = vunpack.c.l.b16 %v4266
    %v4329 = vunpack.c.h.b16 %v4266
    %v4330 = vunpack.c.l.b16 %v4267
    %v4331 = vunpack.c.h.b16 %v4267
    %v4332 = vunpack.c.l.b16 %v4268
    %v4333 = vunpack.c.h.b16 %v4268
    %v4334 = vunpack.c.l.b16 %v4269
    %v4335 = vunpack.c.h.b16 %v4269
    %v4336 = vunpack.c.l.b16 %v4270
    %v4337 = vunpack.c.h.b16 %v4270
    %v4338 = vunpack.c.l.b16 %v4271
    %v4339 = vunpack.c.h.b16 %v4271
    %v4340 = vunpack.c.l.b16 %v4272
    %v4341 = vunpack.c.h.b16 %v4272
    %v4342 = vunpack.c.l.b16 %v4273
    %v4343 = vunpack.c.h.b16 %v4273
    %v4344 = vunpack.c.l.b16 %v4274
    %v4345 = vunpack.c.h.b16 %v4274
    %v4346 = vunpack.c.l.b16 %v4275
    %v4347 = vunpack.c.h.b16 %v4275
    %v4348 = vunpack.c.l.b16 %v4276
    %v4349 = vunpack.c.h.b16 %v4276
    %v4350 = vunpack.c.l.b16 %v4277
    %v4351 = vunpack.c.h.b16 %v4277
    %v4352 = vunpack.c.l.b16 %v4278
    %v4353 = vunpack.c.h.b16 %v4278
    %v4354 = vunpack.c.l.b16 %v4279
    %v4355 = vunpack.c.h.b16 %v4279
    %v4356 = vunpack.c.l.b16 %v4280
    %v4357 = vunpack.c.h.b16 %v4280
    %v4358 = vpack.c.b16 %v4328, %v4326
    %v4359 = vpack.c.b16 %v4329, %v4327
    %v4360 = vpack.c.b16 %v4332, %v4330
    %v4361 = vpack.c.b16 %v4333, %v4331
    %v4362 = vpack.c.b16 %v4336, %v4334
    %v4363 = vpack.c.b16 %v4337, %v4335
    %v4364 = vpack.c.b16 %v4340, %v4338
    %v4365 = vpack.c.b16 %v4341, %v4339
    %v4366 = vpack.c.b16 %v4344, %v4342
    %v4367 = vpack.c.b16 %v4345, %v4343
    %v4368 = vpack.c.b16 %v4348, %v4346
    %v4369 = vpack.c.b16 %v4349, %v4347
    %v4370 = vpack.c.b16 %v4352, %v4350
    %v4371 = vpack.c.b16 %v4353, %v4351
    %v4372 = vpack.c.b16 %v4356, %v4354
    %v4373 = vpack.c.b16 %v4357, %v4355
    %4390 = vmatprep.subr.bf16.mxu0 %v4359
    %4391 = vmatpush1.bf16.msra.mxu0 %v4358
    %4392 = vmatprep.subr.bf16.mxu0 %v4361
    %4393 = vmatpush1.bf16.msra.mxu0 %v4360
    %4394 = vmatprep.subr.bf16.mxu0 %v4363
    %4395 = vmatpush1.bf16.msra.mxu0 %v4362
    %4396 = vmatprep.subr.bf16.mxu0 %v4365
    %4397 = vmatpush1.bf16.msra.mxu0 %v4364
    %4398 = vmatprep.subr.bf16.mxu0 %v4367
    %4399 = vmatpush1.bf16.msra.mxu0 %v4366
    %4400 = vmatprep.subr.bf16.mxu0 %v4369
    %4401 = vmatpush1.bf16.msra.mxu0 %v4368
    %4402 = vmatprep.subr.bf16.mxu0 %v4371
    %4403 = vmatpush1.bf16.msra.mxu0 %v4370
    %4404 = vmatprep.subr.bf16.mxu0 %v4373
    %4405 = vmatpush1.bf16.msra.mxu0 %v4372
    %4406 = vmatprep.subr.bf16.mxu0 0
    %4407 = vmatpush1.bf16.msra.mxu0 0
    %4408 = vmatprep.subr.bf16.mxu0 0
    %4409 = vmatpush1.bf16.msra.mxu0 0
    %4410 = vmatprep.subr.bf16.mxu0 0
    %4411 = vmatpush1.bf16.msra.mxu0 0
    %4412 = vmatprep.subr.bf16.mxu0 0
    %4413 = vmatpush1.bf16.msra.mxu0 0
    %4414 = vmatprep.subr.bf16.mxu0 0
    %4415 = vmatpush1.bf16.msra.mxu0 0
    %4416 = vmatprep.subr.bf16.mxu0 0
    %4417 = vmatpush1.bf16.msra.mxu0 0
    %4418 = vmatprep.subr.bf16.mxu0 0
    %4419 = vmatpush1.bf16.msra.mxu0 0
    %4420 = vmatprep.subr.bf16.mxu0 0
    %4421 = vmatpush1.bf16.msra.mxu0 0
    %4422 = vmatprep.mubr.bf16.mxu0 0
    %4423 = vmatmul.mubr.bf16.gmra.mrb[0].mxu0 %v4308
    %v4424 = vpop.f32.mrb[0].mxu0
    %v4425 = vadd.f32 0.0, %v4424
    %v4426 = vpop.f32.mrb[0].mxu0
    %v4427 = vadd.f32 0.0, %v4426
    %v4428 = vpop.f32.mrb[0].mxu0
    %v4429 = vpop.f32.mrb[0].mxu0
    %4430 = vdwg.mxu0
    %v4431 = vadd.f32 %v4259, %v4425
    %v4432 = vadd.f32 %v4260, %v4427
    %s4433 = scalar_lea.vmem [#allocation3], 6
    %v4434 = vld [vmem:[%s4433] sm:$0x1]
    %v4435 = vld [vmem:[%s4433 + $0x1] sm:$0x1]
    %v4436 = vld [vmem:[%s4433 + $0x4] sm:$0x1]
    %v4437 = vld [vmem:[%s4433 + $0x5] sm:$0x1]
    %v4438 = vld [vmem:[#allocation12 + $0x280] sm:$0xff]
    %v4439 = vld [vmem:[#allocation12 + $0x288] sm:$0xff]
    %v4440 = vld [vmem:[#allocation12 + $0x290] sm:$0xff]
    %v4441 = vld [vmem:[#allocation12 + $0x298] sm:$0xff]
    %v4442 = vld [vmem:[#allocation12 + $0x2a0] sm:$0xff]
    %v4443 = vld [vmem:[#allocation12 + $0x2a8] sm:$0xff]
    %v4444 = vld [vmem:[#allocation12 + $0x2b0] sm:$0xff]
    %v4445 = vld [vmem:[#allocation12 + $0x2b8] sm:$0xff]
    %v4446 = vld [vmem:[#allocation12 + $0x2c0] sm:$0xff]
    %v4447 = vld [vmem:[#allocation12 + $0x2c8] sm:$0xff]
    %v4448 = vld [vmem:[#allocation12 + $0x2d0] sm:$0xff]
    %v4449 = vld [vmem:[#allocation12 + $0x2d8] sm:$0xff]
    %v4450 = vld [vmem:[#allocation12 + $0x2e0] sm:$0xff]
    %v4451 = vld [vmem:[#allocation12 + $0x2e8] sm:$0xff]
    %v4452 = vld [vmem:[#allocation12 + $0x2f0] sm:$0xff]
    %v4453 = vld [vmem:[#allocation12 + $0x2f8] sm:$0xff]
    %v4458 = vcombine.low %v4434, %v4435
    %v4459 = vcombine.low %v4436, %v4437
    %v4461 = vunpack.c.l.s4 1966171168
    %v4462 = vunpack.c.0.s8 %v4461
    %v4463 = vlaneseq
    %v4464 = vshrl.u32 %v4463, 7
    %v4465 = vsub.s32 %v4462, %v4464
    %v4466 = vrot.slane %v4458, %v4465
    %v4468 = vunpack.c.l.s4 1966171168
    %v4469 = vunpack.c.0.s8 %v4468
    %v4470 = vlaneseq
    %v4471 = vshrl.u32 %v4470, 7
    %v4472 = vsub.s32 %v4469, %v4471
    %v4473 = vrot.slane %v4459, %v4472
    %v4474 = vcombine.low %v4466, %v4473
    %v4476 = vunpack.c.l.s4 1966171168
    %v4477 = vunpack.c.0.s8 %v4476
    %v4478 = vlaneseq
    %v4479 = vshrl.u32 %v4478, 7
    %v4480 = vsub.s32 %v4477, %v4479
    %v4481 = vrot.slane %v4474, %v4480
    %v4499 = vunpack.c.l.b16 %v4438
    %v4500 = vunpack.c.h.b16 %v4438
    %v4501 = vunpack.c.l.b16 %v4439
    %v4502 = vunpack.c.h.b16 %v4439
    %v4503 = vunpack.c.l.b16 %v4440
    %v4504 = vunpack.c.h.b16 %v4440
    %v4505 = vunpack.c.l.b16 %v4441
    %v4506 = vunpack.c.h.b16 %v4441
    %v4507 = vunpack.c.l.b16 %v4442
    %v4508 = vunpack.c.h.b16 %v4442
    %v4509 = vunpack.c.l.b16 %v4443
    %v4510 = vunpack.c.h.b16 %v4443
    %v4511 = vunpack.c.l.b16 %v4444
    %v4512 = vunpack.c.h.b16 %v4444
    %v4513 = vunpack.c.l.b16 %v4445
    %v4514 = vunpack.c.h.b16 %v4445
    %v4515 = vunpack.c.l.b16 %v4446
    %v4516 = vunpack.c.h.b16 %v4446
    %v4517 = vunpack.c.l.b16 %v4447
    %v4518 = vunpack.c.h.b16 %v4447
    %v4519 = vunpack.c.l.b16 %v4448
    %v4520 = vunpack.c.h.b16 %v4448
    %v4521 = vunpack.c.l.b16 %v4449
    %v4522 = vunpack.c.h.b16 %v4449
    %v4523 = vunpack.c.l.b16 %v4450
    %v4524 = vunpack.c.h.b16 %v4450
    %v4525 = vunpack.c.l.b16 %v4451
    %v4526 = vunpack.c.h.b16 %v4451
    %v4527 = vunpack.c.l.b16 %v4452
    %v4528 = vunpack.c.h.b16 %v4452
    %v4529 = vunpack.c.l.b16 %v4453
    %v4530 = vunpack.c.h.b16 %v4453
    %v4531 = vpack.c.b16 %v4501, %v4499
    %v4532 = vpack.c.b16 %v4502, %v4500
    %v4533 = vpack.c.b16 %v4505, %v4503
    %v4534 = vpack.c.b16 %v4506, %v4504
    %v4535 = vpack.c.b16 %v4509, %v4507
    %v4536 = vpack.c.b16 %v4510, %v4508
    %v4537 = vpack.c.b16 %v4513, %v4511
    %v4538 = vpack.c.b16 %v4514, %v4512
    %v4539 = vpack.c.b16 %v4517, %v4515
    %v4540 = vpack.c.b16 %v4518, %v4516
    %v4541 = vpack.c.b16 %v4521, %v4519
    %v4542 = vpack.c.b16 %v4522, %v4520
    %v4543 = vpack.c.b16 %v4525, %v4523
    %v4544 = vpack.c.b16 %v4526, %v4524
    %v4545 = vpack.c.b16 %v4529, %v4527
    %v4546 = vpack.c.b16 %v4530, %v4528
    %4563 = vmatprep.subr.bf16.mxu0 %v4532
    %4564 = vmatpush1.bf16.msra.mxu0 %v4531
    %4565 = vmatprep.subr.bf16.mxu0 %v4534
    %4566 = vmatpush1.bf16.msra.mxu0 %v4533
    %4567 = vmatprep.subr.bf16.mxu0 %v4536
    %4568 = vmatpush1.bf16.msra.mxu0 %v4535
    %4569 = vmatprep.subr.bf16.mxu0 %v4538
    %4570 = vmatpush1.bf16.msra.mxu0 %v4537
    %4571 = vmatprep.subr.bf16.mxu0 %v4540
    %4572 = vmatpush1.bf16.msra.mxu0 %v4539
    %4573 = vmatprep.subr.bf16.mxu0 %v4542
    %4574 = vmatpush1.bf16.msra.mxu0 %v4541
    %4575 = vmatprep.subr.bf16.mxu0 %v4544
    %4576 = vmatpush1.bf16.msra.mxu0 %v4543
    %4577 = vmatprep.subr.bf16.mxu0 %v4546
    %4578 = vmatpush1.bf16.msra.mxu0 %v4545
    %4579 = vmatprep.subr.bf16.mxu0 0
    %4580 = vmatpush1.bf16.msra.mxu0 0
    %4581 = vmatprep.subr.bf16.mxu0 0
    %4582 = vmatpush1.bf16.msra.mxu0 0
    %4583 = vmatprep.subr.bf16.mxu0 0
    %4584 = vmatpush1.bf16.msra.mxu0 0
    %4585 = vmatprep.subr.bf16.mxu0 0
    %4586 = vmatpush1.bf16.msra.mxu0 0
    %4587 = vmatprep.subr.bf16.mxu0 0
    %4588 = vmatpush1.bf16.msra.mxu0 0
    %4589 = vmatprep.subr.bf16.mxu0 0
    %4590 = vmatpush1.bf16.msra.mxu0 0
    %4591 = vmatprep.subr.bf16.mxu0 0
    %4592 = vmatpush1.bf16.msra.mxu0 0
    %4593 = vmatprep.subr.bf16.mxu0 0
    %4594 = vmatpush1.bf16.msra.mxu0 0
    %4595 = vmatprep.mubr.bf16.mxu0 0
    %4596 = vmatmul.mubr.bf16.gmra.mrb[0].mxu0 %v4481
    %v4597 = vpop.f32.mrb[0].mxu0
    %v4598 = vadd.f32 0.0, %v4597
    %v4599 = vpop.f32.mrb[0].mxu0
    %v4600 = vadd.f32 0.0, %v4599
    %v4601 = vpop.f32.mrb[0].mxu0
    %v4602 = vpop.f32.mrb[0].mxu0
    %4603 = vdwg.mxu0
    %v4604 = vadd.f32 %v4431, %v4598
    %v4605 = vadd.f32 %v4432, %v4600
    %s4606 = scalar_lea.vmem [#allocation3], 8
    %v4607 = vld [vmem:[%s4606] sm:$0x1]
    %v4608 = vld [vmem:[%s4606 + $0x1] sm:$0x1]
    %v4609 = vld [vmem:[%s4606 + $0x4] sm:$0x1]
    %v4610 = vld [vmem:[%s4606 + $0x5] sm:$0x1]
    %v4611 = vld [vmem:[#allocation12 + $0x300] sm:$0xff]
    %v4612 = vld [vmem:[#allocation12 + $0x308] sm:$0xff]
    %v4613 = vld [vmem:[#allocation12 + $0x310] sm:$0xff]
    %v4614 = vld [vmem:[#allocation12 + $0x318] sm:$0xff]
    %v4615 = vld [vmem:[#allocation12 + $0x320] sm:$0xff]
    %v4616 = vld [vmem:[#allocation12 + $0x328] sm:$0xff]
    %v4617 = vld [vmem:[#allocation12 + $0x330] sm:$0xff]
    %v4618 = vld [vmem:[#allocation12 + $0x338] sm:$0xff]
    %v4619 = vld [vmem:[#allocation12 + $0x340] sm:$0xff]
    %v4620 = vld [vmem:[#allocation12 + $0x348] sm:$0xff]
    %v4621 = vld [vmem:[#allocation12 + $0x350] sm:$0xff]
    %v4622 = vld [vmem:[#allocation12 + $0x358] sm:$0xff]
    %v4623 = vld [vmem:[#allocation12 + $0x360] sm:$0xff]
    %v4624 = vld [vmem:[#allocation12 + $0x368] sm:$0xff]
    %v4625 = vld [vmem:[#allocation12 + $0x370] sm:$0xff]
    %v4626 = vld [vmem:[#allocation12 + $0x378] sm:$0xff]
    %v4631 = vcombine.low %v4607, %v4608
    %v4632 = vcombine.low %v4609, %v4610
    %v4634 = vunpack.c.l.s4 1966171168
    %v4635 = vunpack.c.0.s8 %v4634
    %v4636 = vlaneseq
    %v4637 = vshrl.u32 %v4636, 7
    %v4638 = vsub.s32 %v4635, %v4637
    %v4639 = vrot.slane %v4631, %v4638
    %v4641 = vunpack.c.l.s4 1966171168
    %v4642 = vunpack.c.0.s8 %v4641
    %v4643 = vlaneseq
    %v4644 = vshrl.u32 %v4643, 7
    %v4645 = vsub.s32 %v4642, %v4644
    %v4646 = vrot.slane %v4632, %v4645
    %v4647 = vcombine.low %v4639, %v4646
    %v4649 = vunpack.c.l.s4 1966171168
    %v4650 = vunpack.c.0.s8 %v4649
    %v4651 = vlaneseq
    %v4652 = vshrl.u32 %v4651, 7
    %v4653 = vsub.s32 %v4650, %v4652
    %v4654 = vrot.slane %v4647, %v4653
    %v4672 = vunpack.c.l.b16 %v4611
    %v4673 = vunpack.c.h.b16 %v4611
    %v4674 = vunpack.c.l.b16 %v4612
    %v4675 = vunpack.c.h.b16 %v4612
    %v4676 = vunpack.c.l.b16 %v4613
    %v4677 = vunpack.c.h.b16 %v4613
    %v4678 = vunpack.c.l.b16 %v4614
    %v4679 = vunpack.c.h.b16 %v4614
    %v4680 = vunpack.c.l.b16 %v4615
    %v4681 = vunpack.c.h.b16 %v4615
    %v4682 = vunpack.c.l.b16 %v4616
    %v4683 = vunpack.c.h.b16 %v4616
    %v4684 = vunpack.c.l.b16 %v4617
    %v4685 = vunpack.c.h.b16 %v4617
    %v4686 = vunpack.c.l.b16 %v4618
    %v4687 = vunpack.c.h.b16 %v4618
    %v4688 = vunpack.c.l.b16 %v4619
    %v4689 = vunpack.c.h.b16 %v4619
    %v4690 = vunpack.c.l.b16 %v4620
    %v4691 = vunpack.c.h.b16 %v4620
    %v4692 = vunpack.c.l.b16 %v4621
    %v4693 = vunpack.c.h.b16 %v4621
    %v4694 = vunpack.c.l.b16 %v4622
    %v4695 = vunpack.c.h.b16 %v4622
    %v4696 = vunpack.c.l.b16 %v4623
    %v4697 = vunpack.c.h.b16 %v4623
    %v4698 = vunpack.c.l.b16 %v4624
    %v4699 = vunpack.c.h.b16 %v4624
    %v4700 = vunpack.c.l.b16 %v4625
    %v4701 = vunpack.c.h.b16 %v4625
    %v4702 = vunpack.c.l.b16 %v4626
    %v4703 = vunpack.c.h.b16 %v4626
    %v4704 = vpack.c.b16 %v4674, %v4672
    %v4705 = vpack.c.b16 %v4675, %v4673
    %v4706 = vpack.c.b16 %v4678, %v4676
    %v4707 = vpack.c.b16 %v4679, %v4677
    %v4708 = vpack.c.b16 %v4682, %v4680
    %v4709 = vpack.c.b16 %v4683, %v4681
    %v4710 = vpack.c.b16 %v4686, %v4684
    %v4711 = vpack.c.b16 %v4687, %v4685
    %v4712 = vpack.c.b16 %v4690, %v4688
    %v4713 = vpack.c.b16 %v4691, %v4689
    %v4714 = vpack.c.b16 %v4694, %v4692
    %v4715 = vpack.c.b16 %v4695, %v4693
    %v4716 = vpack.c.b16 %v4698, %v4696
    %v4717 = vpack.c.b16 %v4699, %v4697
    %v4718 = vpack.c.b16 %v4702, %v4700
    %v4719 = vpack.c.b16 %v4703, %v4701
    %4736 = vmatprep.subr.bf16.mxu0 %v4705
    %4737 = vmatpush1.bf16.msra.mxu0 %v4704
    %4738 = vmatprep.subr.bf16.mxu0 %v4707
    %4739 = vmatpush1.bf16.msra.mxu0 %v4706
    %4740 = vmatprep.subr.bf16.mxu0 %v4709
    %4741 = vmatpush1.bf16.msra.mxu0 %v4708
    %4742 = vmatprep.subr.bf16.mxu0 %v4711
    %4743 = vmatpush1.bf16.msra.mxu0 %v4710
    %4744 = vmatprep.subr.bf16.mxu0 %v4713
    %4745 = vmatpush1.bf16.msra.mxu0 %v4712
    %4746 = vmatprep.subr.bf16.mxu0 %v4715
    %4747 = vmatpush1.bf16.msra.mxu0 %v4714
    %4748 = vmatprep.subr.bf16.mxu0 %v4717
    %4749 = vmatpush1.bf16.msra.mxu0 %v4716
    %4750 = vmatprep.subr.bf16.mxu0 %v4719
    %4751 = vmatpush1.bf16.msra.mxu0 %v4718
    %4752 = vmatprep.subr.bf16.mxu0 0
    %4753 = vmatpush1.bf16.msra.mxu0 0
    %4754 = vmatprep.subr.bf16.mxu0 0
    %4755 = vmatpush1.bf16.msra.mxu0 0
    %4756 = vmatprep.subr.bf16.mxu0 0
    %4757 = vmatpush1.bf16.msra.mxu0 0
    %4758 = vmatprep.subr.bf16.mxu0 0
    %4759 = vmatpush1.bf16.msra.mxu0 0
    %4760 = vmatprep.subr.bf16.mxu0 0
    %4761 = vmatpush1.bf16.msra.mxu0 0
    %4762 = vmatprep.subr.bf16.mxu0 0
    %4763 = vmatpush1.bf16.msra.mxu0 0
    %4764 = vmatprep.subr.bf16.mxu0 0
    %4765 = vmatpush1.bf16.msra.mxu0 0
    %4766 = vmatprep.subr.bf16.mxu0 0
    %4767 = vmatpush1.bf16.msra.mxu0 0
    %4768 = vmatprep.mubr.bf16.mxu0 0
    %4769 = vmatmul.mubr.bf16.gmra.mrb[0].mxu0 %v4654
    %v4770 = vpop.f32.mrb[0].mxu0
    %v4771 = vadd.f32 0.0, %v4770
    %v4772 = vpop.f32.mrb[0].mxu0
    %v4773 = vadd.f32 0.0, %v4772
    %v4774 = vpop.f32.mrb[0].mxu0
    %v4775 = vpop.f32.mrb[0].mxu0
    %4776 = vdwg.mxu0
    %v4777 = vadd.f32 %v4604, %v4771
    %v4778 = vadd.f32 %v4605, %v4773
    %s4779 = scalar_lea.vmem [#allocation3], 9
    %v4780 = vld [vmem:[%s4779] sm:$0x1]
    %v4781 = vld [vmem:[%s4779 + $0x1] sm:$0x1]
    %v4782 = vld [vmem:[%s4779 + $0x4] sm:$0x1]
    %v4783 = vld [vmem:[%s4779 + $0x5] sm:$0x1]
    %v4784 = vld [vmem:[#allocation12 + $0x380] sm:$0xff]
    %v4785 = vld [vmem:[#allocation12 + $0x388] sm:$0xff]
    %v4786 = vld [vmem:[#allocation12 + $0x390] sm:$0xff]
    %v4787 = vld [vmem:[#allocation12 + $0x398] sm:$0xff]
    %v4788 = vld [vmem:[#allocation12 + $0x3a0] sm:$0xff]
    %v4789 = vld [vmem:[#allocation12 + $0x3a8] sm:$0xff]
    %v4790 = vld [vmem:[#allocation12 + $0x3b0] sm:$0xff]
    %v4791 = vld [vmem:[#allocation12 + $0x3b8] sm:$0xff]
    %v4792 = vld [vmem:[#allocation12 + $0x3c0] sm:$0xff]
    %v4793 = vld [vmem:[#allocation12 + $0x3c8] sm:$0xff]
    %v4794 = vld [vmem:[#allocation12 + $0x3d0] sm:$0xff]
    %v4795 = vld [vmem:[#allocation12 + $0x3d8] sm:$0xff]
    %v4796 = vld [vmem:[#allocation12 + $0x3e0] sm:$0xff]
    %v4797 = vld [vmem:[#allocation12 + $0x3e8] sm:$0xff]
    %v4798 = vld [vmem:[#allocation12 + $0x3f0] sm:$0xff]
    %v4799 = vld [vmem:[#allocation12 + $0x3f8] sm:$0xff]
    %v4804 = vcombine.low %v4780, %v4781
    %v4805 = vcombine.low %v4782, %v4783
    %v4807 = vunpack.c.l.s4 1966171168
    %v4808 = vunpack.c.0.s8 %v4807
    %v4809 = vlaneseq
    %v4810 = vshrl.u32 %v4809, 7
    %v4811 = vsub.s32 %v4808, %v4810
    %v4812 = vrot.slane %v4804, %v4811
    %v4814 = vunpack.c.l.s4 1966171168
    %v4815 = vunpack.c.0.s8 %v4814
    %v4816 = vlaneseq
    %v4817 = vshrl.u32 %v4816, 7
    %v4818 = vsub.s32 %v4815, %v4817
    %v4819 = vrot.slane %v4805, %v4818
    %v4820 = vcombine.low %v4812, %v4819
    %v4822 = vunpack.c.l.s4 1966171168
    %v4823 = vunpack.c.0.s8 %v4822
    %v4824 = vlaneseq
    %v4825 = vshrl.u32 %v4824, 7
    %v4826 = vsub.s32 %v4823, %v4825
    %v4827 = vrot.slane %v4820, %v4826
    %v4845 = vunpack.c.l.b16 %v4784
    %v4846 = vunpack.c.h.b16 %v4784
    %v4847 = vunpack.c.l.b16 %v4785
    %v4848 = vunpack.c.h.b16 %v4785
    %v4849 = vunpack.c.l.b16 %v4786
    %v4850 = vunpack.c.h.b16 %v4786
    %v4851 = vunpack.c.l.b16 %v4787
    %v4852 = vunpack.c.h.b16 %v4787
    %v4853 = vunpack.c.l.b16 %v4788
    %v4854 = vunpack.c.h.b16 %v4788
    %v4855 = vunpack.c.l.b16 %v4789
    %v4856 = vunpack.c.h.b16 %v4789
    %v4857 = vunpack.c.l.b16 %v4790
    %v4858 = vunpack.c.h.b16 %v4790
    %v4859 = vunpack.c.l.b16 %v4791
    %v4860 = vunpack.c.h.b16 %v4791
    %v4861 = vunpack.c.l.b16 %v4792
    %v4862 = vunpack.c.h.b16 %v4792
    %v4863 = vunpack.c.l.b16 %v4793
    %v4864 = vunpack.c.h.b16 %v4793
    %v4865 = vunpack.c.l.b16 %v4794
    %v4866 = vunpack.c.h.b16 %v4794
    %v4867 = vunpack.c.l.b16 %v4795
    %v4868 = vunpack.c.h.b16 %v4795
    %v4869 = vunpack.c.l.b16 %v4796
    %v4870 = vunpack.c.h.b16 %v4796
    %v4871 = vunpack.c.l.b16 %v4797
    %v4872 = vunpack.c.h.b16 %v4797
    %v4873 = vunpack.c.l.b16 %v4798
    %v4874 = vunpack.c.h.b16 %v4798
    %v4875 = vunpack.c.l.b16 %v4799
    %v4876 = vunpack.c.h.b16 %v4799
    %v4877 = vpack.c.b16 %v4847, %v4845
    %v4878 = vpack.c.b16 %v4848, %v4846
    %v4879 = vpack.c.b16 %v4851, %v4849
    %v4880 = vpack.c.b16 %v4852, %v4850
    %v4881 = vpack.c.b16 %v4855, %v4853
    %v4882 = vpack.c.b16 %v4856, %v4854
    %v4883 = vpack.c.b16 %v4859, %v4857
    %v4884 = vpack.c.b16 %v4860, %v4858
    %v4885 = vpack.c.b16 %v4863, %v4861
    %v4886 = vpack.c.b16 %v4864, %v4862
    %v4887 = vpack.c.b16 %v4867, %v4865
    %v4888 = vpack.c.b16 %v4868, %v4866
    %v4889 = vpack.c.b16 %v4871, %v4869
    %v4890 = vpack.c.b16 %v4872, %v4870
    %v4891 = vpack.c.b16 %v4875, %v4873
    %v4892 = vpack.c.b16 %v4876, %v4874
    %4909 = vmatprep.subr.bf16.mxu0 %v4878
    %4910 = vmatpush1.bf16.msra.mxu0 %v4877
    %4911 = vmatprep.subr.bf16.mxu0 %v4880
    %4912 = vmatpush1.bf16.msra.mxu0 %v4879
    %4913 = vmatprep.subr.bf16.mxu0 %v4882
    %4914 = vmatpush1.bf16.msra.mxu0 %v4881
    %4915 = vmatprep.subr.bf16.mxu0 %v4884
    %4916 = vmatpush1.bf16.msra.mxu0 %v4883
    %4917 = vmatprep.subr.bf16.mxu0 %v4886
    %4918 = vmatpush1.bf16.msra.mxu0 %v4885
    %4919 = vmatprep.subr.bf16.mxu0 %v4888
    %4920 = vmatpush1.bf16.msra.mxu0 %v4887
    %4921 = vmatprep.subr.bf16.mxu0 %v4890
    %4922 = vmatpush1.bf16.msra.mxu0 %v4889
    %4923 = vmatprep.subr.bf16.mxu0 %v4892
    %4924 = vmatpush1.bf16.msra.mxu0 %v4891
    %4925 = vmatprep.subr.bf16.mxu0 0
    %4926 = vmatpush1.bf16.msra.mxu0 0
    %4927 = vmatprep.subr.bf16.mxu0 0
    %4928 = vmatpush1.bf16.msra.mxu0 0
    %4929 = vmatprep.subr.bf16.mxu0 0
    %4930 = vmatpush1.bf16.msra.mxu0 0
    %4931 = vmatprep.subr.bf16.mxu0 0
    %4932 = vmatpush1.bf16.msra.mxu0 0
    %4933 = vmatprep.subr.bf16.mxu0 0
    %4934 = vmatpush1.bf16.msra.mxu0 0
    %4935 = vmatprep.subr.bf16.mxu0 0
    %4936 = vmatpush1.bf16.msra.mxu0 0
    %4937 = vmatprep.subr.bf16.mxu0 0
    %4938 = vmatpush1.bf16.msra.mxu0 0
    %4939 = vmatprep.subr.bf16.mxu0 0
    %4940 = vmatpush1.bf16.msra.mxu0 0
    %4941 = vmatprep.mubr.bf16.mxu0 0
    %4942 = vmatmul.mubr.bf16.gmra.mrb[0].mxu0 %v4827
    %v4943 = vpop.f32.mrb[0].mxu0
    %v4944 = vadd.f32 0.0, %v4943
    %v4945 = vpop.f32.mrb[0].mxu0
    %v4946 = vadd.f32 0.0, %v4945
    %v4947 = vpop.f32.mrb[0].mxu0
    %v4948 = vpop.f32.mrb[0].mxu0
    %4949 = vdwg.mxu0
    %v4950 = vadd.f32 %v4777, %v4944
    %v4951 = vadd.f32 %v4778, %v4946
    %s4952 = scalar_lea.vmem [#allocation3], 10
    %v4953 = vld [vmem:[%s4952] sm:$0x1]
    %v4954 = vld [vmem:[%s4952 + $0x1] sm:$0x1]
    %v4955 = vld [vmem:[%s4952 + $0x4] sm:$0x1]
    %v4956 = vld [vmem:[%s4952 + $0x5] sm:$0x1]
    %v4957 = vld [vmem:[#allocation12 + $0x400] sm:$0xff]
    %v4958 = vld [vmem:[#allocation12 + $0x408] sm:$0xff]
    %v4959 = vld [vmem:[#allocation12 + $0x410] sm:$0xff]
    %v4960 = vld [vmem:[#allocation12 + $0x418] sm:$0xff]
    %v4961 = vld [vmem:[#allocation12 + $0x420] sm:$0xff]
    %v4962 = vld [vmem:[#allocation12 + $0x428] sm:$0xff]
    %v4963 = vld [vmem:[#allocation12 + $0x430] sm:$0xff]
    %v4964 = vld [vmem:[#allocation12 + $0x438] sm:$0xff]
    %v4965 = vld [vmem:[#allocation12 + $0x440] sm:$0xff]
    %v4966 = vld [vmem:[#allocation12 + $0x448] sm:$0xff]
    %v4967 = vld [vmem:[#allocation12 + $0x450] sm:$0xff]
    %v4968 = vld [vmem:[#allocation12 + $0x458] sm:$0xff]
    %v4969 = vld [vmem:[#allocation12 + $0x460] sm:$0xff]
    %v4970 = vld [vmem:[#allocation12 + $0x468] sm:$0xff]
    %v4971 = vld [vmem:[#allocation12 + $0x470] sm:$0xff]
    %v4972 = vld [vmem:[#allocation12 + $0x478] sm:$0xff]
    %v4977 = vcombine.low %v4953, %v4954
    %v4978 = vcombine.low %v4955, %v4956
    %v4980 = vunpack.c.l.s4 1966171168
    %v4981 = vunpack.c.0.s8 %v4980
    %v4982 = vlaneseq
    %v4983 = vshrl.u32 %v4982, 7
    %v4984 = vsub.s32 %v4981, %v4983
    %v4985 = vrot.slane %v4977, %v4984
    %v4987 = vunpack.c.l.s4 1966171168
    %v4988 = vunpack.c.0.s8 %v4987
    %v4989 = vlaneseq
    %v4990 = vshrl.u32 %v4989, 7
    %v4991 = vsub.s32 %v4988, %v4990
    %v4992 = vrot.slane %v4978, %v4991
    %v4993 = vcombine.low %v4985, %v4992
    %v4995 = vunpack.c.l.s4 1966171168
    %v4996 = vunpack.c.0.s8 %v4995
    %v4997 = vlaneseq
    %v4998 = vshrl.u32 %v4997, 7
    %v4999 = vsub.s32 %v4996, %v4998
    %v5000 = vrot.slane %v4993, %v4999
    %v5018 = vunpack.c.l.b16 %v4957
    %v5019 = vunpack.c.h.b16 %v4957
    %v5020 = vunpack.c.l.b16 %v4958
    %v5021 = vunpack.c.h.b16 %v4958
    %v5022 = vunpack.c.l.b16 %v4959
    %v5023 = vunpack.c.h.b16 %v4959
    %v5024 = vunpack.c.l.b16 %v4960
    %v5025 = vunpack.c.h.b16 %v4960
    %v5026 = vunpack.c.l.b16 %v4961
    %v5027 = vunpack.c.h.b16 %v4961
    %v5028 = vunpack.c.l.b16 %v4962
    %v5029 = vunpack.c.h.b16 %v4962
    %v5030 = vunpack.c.l.b16 %v4963
    %v5031 = vunpack.c.h.b16 %v4963
    %v5032 = vunpack.c.l.b16 %v4964
    %v5033 = vunpack.c.h.b16 %v4964
    %v5034 = vunpack.c.l.b16 %v4965
    %v5035 = vunpack.c.h.b16 %v4965
    %v5036 = vunpack.c.l.b16 %v4966
    %v5037 = vunpack.c.h.b16 %v4966
    %v5038 = vunpack.c.l.b16 %v4967
    %v5039 = vunpack.c.h.b16 %v4967
    %v5040 = vunpack.c.l.b16 %v4968
    %v5041 = vunpack.c.h.b16 %v4968
    %v5042 = vunpack.c.l.b16 %v4969
    %v5043 = vunpack.c.h.b16 %v4969
    %v5044 = vunpack.c.l.b16 %v4970
    %v5045 = vunpack.c.h.b16 %v4970
    %v5046 = vunpack.c.l.b16 %v4971
    %v5047 = vunpack.c.h.b16 %v4971
    %v5048 = vunpack.c.l.b16 %v4972
    %v5049 = vunpack.c.h.b16 %v4972
    %v5050 = vpack.c.b16 %v5020, %v5018
    %v5051 = vpack.c.b16 %v5021, %v5019
    %v5052 = vpack.c.b16 %v5024, %v5022
    %v5053 = vpack.c.b16 %v5025, %v5023
    %v5054 = vpack.c.b16 %v5028, %v5026
    %v5055 = vpack.c.b16 %v5029, %v5027
    %v5056 = vpack.c.b16 %v5032, %v5030
    %v5057 = vpack.c.b16 %v5033, %v5031
    %v5058 = vpack.c.b16 %v5036, %v5034
    %v5059 = vpack.c.b16 %v5037, %v5035
    %v5060 = vpack.c.b16 %v5040, %v5038
    %v5061 = vpack.c.b16 %v5041, %v5039
    %v5062 = vpack.c.b16 %v5044, %v5042
    %v5063 = vpack.c.b16 %v5045, %v5043
    %v5064 = vpack.c.b16 %v5048, %v5046
    %v5065 = vpack.c.b16 %v5049, %v5047
    %5082 = vmatprep.subr.bf16.mxu0 %v5051
    %5083 = vmatpush1.bf16.msra.mxu0 %v5050
    %5084 = vmatprep.subr.bf16.mxu0 %v5053
    %5085 = vmatpush1.bf16.msra.mxu0 %v5052
    %5086 = vmatprep.subr.bf16.mxu0 %v5055
    %5087 = vmatpush1.bf16.msra.mxu0 %v5054
    %5088 = vmatprep.subr.bf16.mxu0 %v5057
    %5089 = vmatpush1.bf16.msra.mxu0 %v5056
    %5090 = vmatprep.subr.bf16.mxu0 %v5059
    %5091 = vmatpush1.bf16.msra.mxu0 %v5058
    %5092 = vmatprep.subr.bf16.mxu0 %v5061
    %5093 = vmatpush1.bf16.msra.mxu0 %v5060
    %5094 = vmatprep.subr.bf16.mxu0 %v5063
    %5095 = vmatpush1.bf16.msra.mxu0 %v5062
    %5096 = vmatprep.subr.bf16.mxu0 %v5065
    %5097 = vmatpush1.bf16.msra.mxu0 %v5064
    %5098 = vmatprep.subr.bf16.mxu0 0
    %5099 = vmatpush1.bf16.msra.mxu0 0
    %5100 = vmatprep.subr.bf16.mxu0 0
    %5101 = vmatpush1.bf16.msra.mxu0 0
    %5102 = vmatprep.subr.bf16.mxu0 0
    %5103 = vmatpush1.bf16.msra.mxu0 0
    %5104 = vmatprep.subr.bf16.mxu0 0
    %5105 = vmatpush1.bf16.msra.mxu0 0
    %5106 = vmatprep.subr.bf16.mxu0 0
    %5107 = vmatpush1.bf16.msra.mxu0 0
    %5108 = vmatprep.subr.bf16.mxu0 0
    %5109 = vmatpush1.bf16.msra.mxu0 0
    %5110 = vmatprep.subr.bf16.mxu0 0
    %5111 = vmatpush1.bf16.msra.mxu0 0
    %5112 = vmatprep.subr.bf16.mxu0 0
    %5113 = vmatpush1.bf16.msra.mxu0 0
    %5114 = vmatprep.mubr.bf16.mxu0 0
    %5115 = vmatmul.mubr.bf16.gmra.mrb[0].mxu0 %v5000
    %v5116 = vpop.f32.mrb[0].mxu0
    %v5117 = vadd.f32 0.0, %v5116
    %v5118 = vpop.f32.mrb[0].mxu0
    %v5119 = vadd.f32 0.0, %v5118
    %v5120 = vpop.f32.mrb[0].mxu0
    %v5121 = vpop.f32.mrb[0].mxu0
    %5122 = vdwg.mxu0
    %v5123 = vadd.f32 %v4950, %v5117
    %v5124 = vadd.f32 %v4951, %v5119
    %v5125 = vld [vmem:[#allocation13] sm:$0x3]
    %v5127 = vlaneseq
    %v5128 = vshrl.u32 %v5127, 7
    %v5129 = vsub.s32 0, %v5128
    %v5130 = vrot.slane %v5125, %v5129
    %v5131 = vlaneseq
    %v5132 = vshrl.u32 %v5131, 7
    %v5133 = vsub.s32 1, %v5132
    %v5134 = vrot.slane %v5125, %v5133
    %v5137 = vadd.f32 %v5123, %v5130
    %v5138 = vadd.f32 %v5124, %v5134
    %v5139 = vmax.f32 %v5137, 0.0
    %v5140 = vmax.f32 %v5138, 0.0
    %v5143 = vcombine.low %v5139, %v5140
    %v5144 = vcombine.high %v5139, %v5140
    %v5146 = vunpack.c.l.s4 1983009808
    %v5147 = vunpack.c.0.s8 %v5146
    %v5148 = vlaneseq
    %v5149 = vshrl.u32 %v5148, 7
    %v5150 = vsub.s32 %v5147, %v5149
    %v5151 = vrot.slane %v5143, %v5150
    %v5153 = vunpack.c.l.s4 1983009808
    %v5154 = vunpack.c.0.s8 %v5153
    %v5155 = vlaneseq
    %v5156 = vshrl.u32 %v5155, 7
    %v5157 = vsub.s32 %v5154, %v5156
    %v5158 = vrot.slane %v5144, %v5157
    %v5159 = vcombine.high %v5151, %v5151
    %v5160 = vcombine.high %v5158, %v5158
    %vm5165 = vcmask 1043458
    %vm5166 = vmor %vm5165, %vm3512
    %v5167 = vsel %vm5166, %v5151, -inf
    %v5168 = vsel %vm5166, %v5158, -inf
    %v5169 = vmax.f32 %v5167, %v5168
    %v5170 = vsel %vm5166, %v5159, -inf
    %v5171 = vsel %vm5166, %v5160, -inf
    %v5172 = vmax.f32 %v5170, %v5171
    %v5173 = vsel %vm5166, %v5169, -inf
    %v5174 = vsel %vm5166, %v5172, -inf
    %v5175 = vmax.f32 %v5173, %v5174
    %v5178 = vunpack.c.l.s4 1983009808
    %v5179 = vunpack.c.0.s8 %v5178
    %v5180 = vlaneseq
    %v5181 = vshrl.u32 %v5180, 7
    %v5182 = vsub.s32 %v5179, %v5181
    %v5183 = vrot.slane %v5175, %v5182
    %v5184 = vcombine.high %v5183, %v5183
    %v5187 = vpack.c.bf16 %v5183, %v5183
    %v5188 = vpack.c.bf16 %v5184, %v5184
    %v5189 = vld [vmem:[#allocation15 + $0x800] sm:$0xff]
    %v5190 = vld [vmem:[#allocation15 + $0x808] sm:$0xff]
    %v5191 = vld [vmem:[#allocation15 + $0x810] sm:$0xff]
    %v5192 = vld [vmem:[#allocation15 + $0x818] sm:$0xff]
    %v5193 = vld [vmem:[#allocation15 + $0x820] sm:$0xff]
    %v5194 = vld [vmem:[#allocation15 + $0x828] sm:$0xff]
    %v5195 = vld [vmem:[#allocation15 + $0x830] sm:$0xff]
    %v5196 = vld [vmem:[#allocation15 + $0x838] sm:$0xff]
    %v5197 = vld [vmem:[#allocation15 + $0x840] sm:$0xff]
    %v5198 = vld [vmem:[#allocation15 + $0x848] sm:$0xff]
    %v5199 = vld [vmem:[#allocation15 + $0x850] sm:$0xff]
    %v5200 = vld [vmem:[#allocation15 + $0x858] sm:$0xff]
    %v5201 = vld [vmem:[#allocation15 + $0x860] sm:$0xff]
    %v5202 = vld [vmem:[#allocation15 + $0x868] sm:$0xff]
    %v5203 = vld [vmem:[#allocation15 + $0x870] sm:$0xff]
    %v5204 = vld [vmem:[#allocation15 + $0x878] sm:$0xff]
    %v5205 = vld [vmem:[#allocation15 + $0x880] sm:$0xff]
    %v5206 = vld [vmem:[#allocation15 + $0x888] sm:$0xff]
    %v5207 = vld [vmem:[#allocation15 + $0x890] sm:$0xff]
    %v5208 = vld [vmem:[#allocation15 + $0x898] sm:$0xff]
    %v5209 = vld [vmem:[#allocation15 + $0x8a0] sm:$0xff]
    %v5210 = vld [vmem:[#allocation15 + $0x8a8] sm:$0xff]
    %v5211 = vld [vmem:[#allocation15 + $0x8b0] sm:$0xff]
    %v5212 = vld [vmem:[#allocation15 + $0x8b8] sm:$0xff]
    %v5213 = vld [vmem:[#allocation15 + $0x8c0] sm:$0xff]
    %v5214 = vld [vmem:[#allocation15 + $0x8c8] sm:$0xff]
    %v5215 = vld [vmem:[#allocation15 + $0x8d0] sm:$0xff]
    %v5216 = vld [vmem:[#allocation15 + $0x8d8] sm:$0xff]
    %v5217 = vld [vmem:[#allocation15 + $0x8e0] sm:$0xff]
    %v5218 = vld [vmem:[#allocation15 + $0x8e8] sm:$0xff]
    %v5219 = vld [vmem:[#allocation15 + $0x8f0] sm:$0xff]
    %v5220 = vld [vmem:[#allocation15 + $0x8f8] sm:$0xff]
    %v5221 = vld [vmem:[#allocation15 + $0x900] sm:$0xff]
    %v5222 = vld [vmem:[#allocation15 + $0x908] sm:$0xff]
    %v5223 = vld [vmem:[#allocation15 + $0x910] sm:$0xff]
    %v5224 = vld [vmem:[#allocation15 + $0x918] sm:$0xff]
    %v5225 = vld [vmem:[#allocation15 + $0x920] sm:$0xff]
    %v5226 = vld [vmem:[#allocation15 + $0x928] sm:$0xff]
    %v5227 = vld [vmem:[#allocation15 + $0x930] sm:$0xff]
    %v5228 = vld [vmem:[#allocation15 + $0x938] sm:$0xff]
    %v5229 = vld [vmem:[#allocation15 + $0x940] sm:$0xff]
    %v5230 = vld [vmem:[#allocation15 + $0x948] sm:$0xff]
    %v5231 = vld [vmem:[#allocation15 + $0x950] sm:$0xff]
    %v5232 = vld [vmem:[#allocation15 + $0x958] sm:$0xff]
    %v5233 = vld [vmem:[#allocation15 + $0x960] sm:$0xff]
    %v5234 = vld [vmem:[#allocation15 + $0x968] sm:$0xff]
    %v5235 = vld [vmem:[#allocation15 + $0x970] sm:$0xff]
    %v5236 = vld [vmem:[#allocation15 + $0x978] sm:$0xff]
    %v5237 = vld [vmem:[#allocation15 + $0x980] sm:$0xff]
    %v5238 = vld [vmem:[#allocation15 + $0x988] sm:$0xff]
    %v5239 = vld [vmem:[#allocation15 + $0x990] sm:$0xff]
    %v5240 = vld [vmem:[#allocation15 + $0x998] sm:$0xff]
    %v5241 = vld [vmem:[#allocation15 + $0x9a0] sm:$0xff]
    %v5242 = vld [vmem:[#allocation15 + $0x9a8] sm:$0xff]
    %v5243 = vld [vmem:[#allocation15 + $0x9b0] sm:$0xff]
    %v5244 = vld [vmem:[#allocation15 + $0x9b8] sm:$0xff]
    %v5245 = vld [vmem:[#allocation15 + $0x9c0] sm:$0xff]
    %v5246 = vld [vmem:[#allocation15 + $0x9c8] sm:$0xff]
    %v5247 = vld [vmem:[#allocation15 + $0x9d0] sm:$0xff]
    %v5248 = vld [vmem:[#allocation15 + $0x9d8] sm:$0xff]
    %v5249 = vld [vmem:[#allocation15 + $0x9e0] sm:$0xff]
    %v5250 = vld [vmem:[#allocation15 + $0x9e8] sm:$0xff]
    %v5251 = vld [vmem:[#allocation15 + $0x9f0] sm:$0xff]
    %v5252 = vld [vmem:[#allocation15 + $0x9f8] sm:$0xff]
    %v5253 = vld [vmem:[#allocation16] sm:$0xf]
    %v5255 = vlaneseq
    %v5256 = vshrl.u32 %v5255, 7
    %v5257 = vsub.s32 0, %v5256
    %v5258 = vrot.slane %v5253, %v5257
    %v5259 = vlaneseq
    %v5260 = vshrl.u32 %v5259, 7
    %v5261 = vsub.s32 1, %v5260
    %v5262 = vrot.slane %v5253, %v5261
    %v5263 = vlaneseq
    %v5264 = vshrl.u32 %v5263, 7
    %v5265 = vsub.s32 2, %v5264
    %v5266 = vrot.slane %v5253, %v5265
    %v5267 = vlaneseq
    %v5268 = vshrl.u32 %v5267, 7
    %v5269 = vsub.s32 3, %v5268
    %v5270 = vrot.slane %v5253, %v5269
    %v5339 = vunpack.c.l.b16 %v5189
    %v5340 = vunpack.c.h.b16 %v5189
    %v5341 = vunpack.c.l.b16 %v5190
    %v5342 = vunpack.c.h.b16 %v5190
    %v5343 = vunpack.c.l.b16 %v5191
    %v5344 = vunpack.c.h.b16 %v5191
    %v5345 = vunpack.c.l.b16 %v5192
    %v5346 = vunpack.c.h.b16 %v5192
    %v5347 = vunpack.c.l.b16 %v5193
    %v5348 = vunpack.c.h.b16 %v5193
    %v5349 = vunpack.c.l.b16 %v5194
    %v5350 = vunpack.c.h.b16 %v5194
    %v5351 = vunpack.c.l.b16 %v5195
    %v5352 = vunpack.c.h.b16 %v5195
    %v5353 = vunpack.c.l.b16 %v5196
    %v5354 = vunpack.c.h.b16 %v5196
    %v5355 = vunpack.c.l.b16 %v5197
    %v5356 = vunpack.c.h.b16 %v5197
    %v5357 = vunpack.c.l.b16 %v5198
    %v5358 = vunpack.c.h.b16 %v5198
    %v5359 = vunpack.c.l.b16 %v5199
    %v5360 = vunpack.c.h.b16 %v5199
    %v5361 = vunpack.c.l.b16 %v5200
    %v5362 = vunpack.c.h.b16 %v5200
    %v5363 = vunpack.c.l.b16 %v5201
    %v5364 = vunpack.c.h.b16 %v5201
    %v5365 = vunpack.c.l.b16 %v5202
    %v5366 = vunpack.c.h.b16 %v5202
    %v5367 = vunpack.c.l.b16 %v5203
    %v5368 = vunpack.c.h.b16 %v5203
    %v5369 = vunpack.c.l.b16 %v5204
    %v5370 = vunpack.c.h.b16 %v5204
    %v5371 = vunpack.c.l.b16 %v5205
    %v5372 = vunpack.c.h.b16 %v5205
    %v5373 = vunpack.c.l.b16 %v5206
    %v5374 = vunpack.c.h.b16 %v5206
    %v5375 = vunpack.c.l.b16 %v5207
    %v5376 = vunpack.c.h.b16 %v5207
    %v5377 = vunpack.c.l.b16 %v5208
    %v5378 = vunpack.c.h.b16 %v5208
    %v5379 = vunpack.c.l.b16 %v5209
    %v5380 = vunpack.c.h.b16 %v5209
    %v5381 = vunpack.c.l.b16 %v5210
    %v5382 = vunpack.c.h.b16 %v5210
    %v5383 = vunpack.c.l.b16 %v5211
    %v5384 = vunpack.c.h.b16 %v5211
    %v5385 = vunpack.c.l.b16 %v5212
    %v5386 = vunpack.c.h.b16 %v5212
    %v5387 = vunpack.c.l.b16 %v5213
    %v5388 = vunpack.c.h.b16 %v5213
    %v5389 = vunpack.c.l.b16 %v5214
    %v5390 = vunpack.c.h.b16 %v5214
    %v5391 = vunpack.c.l.b16 %v5215
    %v5392 = vunpack.c.h.b16 %v5215
    %v5393 = vunpack.c.l.b16 %v5216
    %v5394 = vunpack.c.h.b16 %v5216
    %v5395 = vunpack.c.l.b16 %v5217
    %v5396 = vunpack.c.h.b16 %v5217
    %v5397 = vunpack.c.l.b16 %v5218
    %v5398 = vunpack.c.h.b16 %v5218
    %v5399 = vunpack.c.l.b16 %v5219
    %v5400 = vunpack.c.h.b16 %v5219
    %v5401 = vunpack.c.l.b16 %v5220
    %v5402 = vunpack.c.h.b16 %v5220
    %v5403 = vunpack.c.l.b16 %v5221
    %v5404 = vunpack.c.h.b16 %v5221
    %v5405 = vunpack.c.l.b16 %v5222
    %v5406 = vunpack.c.h.b16 %v5222
    %v5407 = vunpack.c.l.b16 %v5223
    %v5408 = vunpack.c.h.b16 %v5223
    %v5409 = vunpack.c.l.b16 %v5224
    %v5410 = vunpack.c.h.b16 %v5224
    %v5411 = vunpack.c.l.b16 %v5225
    %v5412 = vunpack.c.h.b16 %v5225
    %v5413 = vunpack.c.l.b16 %v5226
    %v5414 = vunpack.c.h.b16 %v5226
    %v5415 = vunpack.c.l.b16 %v5227
    %v5416 = vunpack.c.h.b16 %v5227
    %v5417 = vunpack.c.l.b16 %v5228
    %v5418 = vunpack.c.h.b16 %v5228
    %v5419 = vunpack.c.l.b16 %v5229
    %v5420 = vunpack.c.h.b16 %v5229
    %v5421 = vunpack.c.l.b16 %v5230
    %v5422 = vunpack.c.h.b16 %v5230
    %v5423 = vunpack.c.l.b16 %v5231
    %v5424 = vunpack.c.h.b16 %v5231
    %v5425 = vunpack.c.l.b16 %v5232
    %v5426 = vunpack.c.h.b16 %v5232
    %v5427 = vunpack.c.l.b16 %v5233
    %v5428 = vunpack.c.h.b16 %v5233
    %v5429 = vunpack.c.l.b16 %v5234
    %v5430 = vunpack.c.h.b16 %v5234
    %v5431 = vunpack.c.l.b16 %v5235
    %v5432 = vunpack.c.h.b16 %v5235
    %v5433 = vunpack.c.l.b16 %v5236
    %v5434 = vunpack.c.h.b16 %v5236
    %v5435 = vunpack.c.l.b16 %v5237
    %v5436 = vunpack.c.h.b16 %v5237
    %v5437 = vunpack.c.l.b16 %v5238
    %v5438 = vunpack.c.h.b16 %v5238
    %v5439 = vunpack.c.l.b16 %v5239
    %v5440 = vunpack.c.h.b16 %v5239
    %v5441 = vunpack.c.l.b16 %v5240
    %v5442 = vunpack.c.h.b16 %v5240
    %v5443 = vunpack.c.l.b16 %v5241
    %v5444 = vunpack.c.h.b16 %v5241
    %v5445 = vunpack.c.l.b16 %v5242
    %v5446 = vunpack.c.h.b16 %v5242
    %v5447 = vunpack.c.l.b16 %v5243
    %v5448 = vunpack.c.h.b16 %v5243
    %v5449 = vunpack.c.l.b16 %v5244
    %v5450 = vunpack.c.h.b16 %v5244
    %v5451 = vunpack.c.l.b16 %v5245
    %v5452 = vunpack.c.h.b16 %v5245
    %v5453 = vunpack.c.l.b16 %v5246
    %v5454 = vunpack.c.h.b16 %v5246
    %v5455 = vunpack.c.l.b16 %v5247
    %v5456 = vunpack.c.h.b16 %v5247
    %v5457 = vunpack.c.l.b16 %v5248
    %v5458 = vunpack.c.h.b16 %v5248
    %v5459 = vunpack.c.l.b16 %v5249
    %v5460 = vunpack.c.h.b16 %v5249
    %v5461 = vunpack.c.l.b16 %v5250
    %v5462 = vunpack.c.h.b16 %v5250
    %v5463 = vunpack.c.l.b16 %v5251
    %v5464 = vunpack.c.h.b16 %v5251
    %v5465 = vunpack.c.l.b16 %v5252
    %v5466 = vunpack.c.h.b16 %v5252
    %v5467 = vpack.c.b16 %v5343, %v5339
    %v5468 = vpack.c.b16 %v5344, %v5340
    %v5469 = vpack.c.b16 %v5345, %v5341
    %v5470 = vpack.c.b16 %v5346, %v5342
    %v5471 = vpack.c.b16 %v5351, %v5347
    %v5472 = vpack.c.b16 %v5352, %v5348
    %v5473 = vpack.c.b16 %v5353, %v5349
    %v5474 = vpack.c.b16 %v5354, %v5350
    %v5475 = vpack.c.b16 %v5359, %v5355
    %v5476 = vpack.c.b16 %v5360, %v5356
    %v5477 = vpack.c.b16 %v5361, %v5357
    %v5478 = vpack.c.b16 %v5362, %v5358
    %v5479 = vpack.c.b16 %v5367, %v5363
    %v5480 = vpack.c.b16 %v5368, %v5364
    %v5481 = vpack.c.b16 %v5369, %v5365
    %v5482 = vpack.c.b16 %v5370, %v5366
    %v5483 = vpack.c.b16 %v5375, %v5371
    %v5484 = vpack.c.b16 %v5376, %v5372
    %v5485 = vpack.c.b16 %v5377, %v5373
    %v5486 = vpack.c.b16 %v5378, %v5374
    %v5487 = vpack.c.b16 %v5383, %v5379
    %v5488 = vpack.c.b16 %v5384, %v5380
    %v5489 = vpack.c.b16 %v5385, %v5381
    %v5490 = vpack.c.b16 %v5386, %v5382
    %v5491 = vpack.c.b16 %v5391, %v5387
    %v5492 = vpack.c.b16 %v5392, %v5388
    %v5493 = vpack.c.b16 %v5393, %v5389
    %v5494 = vpack.c.b16 %v5394, %v5390
    %v5495 = vpack.c.b16 %v5399, %v5395
    %v5496 = vpack.c.b16 %v5400, %v5396
    %v5497 = vpack.c.b16 %v5401, %v5397
    %v5498 = vpack.c.b16 %v5402, %v5398
    %v5499 = vpack.c.b16 %v5407, %v5403
    %v5500 = vpack.c.b16 %v5408, %v5404
    %v5501 = vpack.c.b16 %v5409, %v5405
    %v5502 = vpack.c.b16 %v5410, %v5406
    %v5503 = vpack.c.b16 %v5415, %v5411
    %v5504 = vpack.c.b16 %v5416, %v5412
    %v5505 = vpack.c.b16 %v5417, %v5413
    %v5506 = vpack.c.b16 %v5418, %v5414
    %v5507 = vpack.c.b16 %v5423, %v5419
    %v5508 = vpack.c.b16 %v5424, %v5420
    %v5509 = vpack.c.b16 %v5425, %v5421
    %v5510 = vpack.c.b16 %v5426, %v5422
    %v5511 = vpack.c.b16 %v5431, %v5427
    %v5512 = vpack.c.b16 %v5432, %v5428
    %v5513 = vpack.c.b16 %v5433, %v5429
    %v5514 = vpack.c.b16 %v5434, %v5430
    %v5515 = vpack.c.b16 %v5439, %v5435
    %v5516 = vpack.c.b16 %v5440, %v5436
    %v5517 = vpack.c.b16 %v5441, %v5437
    %v5518 = vpack.c.b16 %v5442, %v5438
    %v5519 = vpack.c.b16 %v5447, %v5443
    %v5520 = vpack.c.b16 %v5448, %v5444
    %v5521 = vpack.c.b16 %v5449, %v5445
    %v5522 = vpack.c.b16 %v5450, %v5446
    %v5523 = vpack.c.b16 %v5455, %v5451
    %v5524 = vpack.c.b16 %v5456, %v5452
    %v5525 = vpack.c.b16 %v5457, %v5453
    %v5526 = vpack.c.b16 %v5458, %v5454
    %v5527 = vpack.c.b16 %v5463, %v5459
    %v5528 = vpack.c.b16 %v5464, %v5460
    %v5529 = vpack.c.b16 %v5465, %v5461
    %v5530 = vpack.c.b16 %v5466, %v5462
    %5595 = vmatprep.subr.bf16.mxu0 %v5468
    %5596 = vmatpush1.bf16.msra.mxu0 %v5467
    %5597 = vmatprep.subr.bf16.mxu0 %v5472
    %5598 = vmatpush1.bf16.msra.mxu0 %v5471
    %5599 = vmatprep.subr.bf16.mxu0 %v5476
    %5600 = vmatpush1.bf16.msra.mxu0 %v5475
    %5601 = vmatprep.subr.bf16.mxu0 %v5480
    %5602 = vmatpush1.bf16.msra.mxu0 %v5479
    %5603 = vmatprep.subr.bf16.mxu0 %v5484
    %5604 = vmatpush1.bf16.msra.mxu0 %v5483
    %5605 = vmatprep.subr.bf16.mxu0 %v5488
    %5606 = vmatpush1.bf16.msra.mxu0 %v5487
    %5607 = vmatprep.subr.bf16.mxu0 %v5492
    %5608 = vmatpush1.bf16.msra.mxu0 %v5491
    %5609 = vmatprep.subr.bf16.mxu0 %v5496
    %5610 = vmatpush1.bf16.msra.mxu0 %v5495
    %5611 = vmatprep.subr.bf16.mxu0 %v5500
    %5612 = vmatpush1.bf16.msra.mxu0 %v5499
    %5613 = vmatprep.subr.bf16.mxu0 %v5504
    %5614 = vmatpush1.bf16.msra.mxu0 %v5503
    %5615 = vmatprep.subr.bf16.mxu0 %v5508
    %5616 = vmatpush1.bf16.msra.mxu0 %v5507
    %5617 = vmatprep.subr.bf16.mxu0 %v5512
    %5618 = vmatpush1.bf16.msra.mxu0 %v5511
    %5619 = vmatprep.subr.bf16.mxu0 %v5516
    %5620 = vmatpush1.bf16.msra.mxu0 %v5515
    %5621 = vmatprep.subr.bf16.mxu0 %v5520
    %5622 = vmatpush1.bf16.msra.mxu0 %v5519
    %5623 = vmatprep.subr.bf16.mxu0 %v5524
    %5624 = vmatpush1.bf16.msra.mxu0 %v5523
    %5625 = vmatprep.subr.bf16.mxu0 %v5528
    %5626 = vmatpush1.bf16.msra.mxu0 %v5527
    %5627 = vmatprep.mubr.bf16.mxu0 %v5188
    %5628 = vmatmul.mubr.bf16.gmra.mrb[0].mxu0 %v5187
    %v5629 = vpop.f32.mrb[0].mxu0
    %v5630 = vadd.f32 %v5258, %v5629
    %v5631 = vpop.f32.mrb[0].mxu0
    %v5632 = vadd.f32 %v5262, %v5631
    %v5633 = vpop.f32.mrb[0].mxu0
    %v5634 = vpop.f32.mrb[0].mxu0
    %5635 = vdwg.mxu0
    %5636 = vmatprep.subr.bf16.mxu0 %v5470
    %5637 = vmatpush1.bf16.msra.mxu0 %v5469
    %5638 = vmatprep.subr.bf16.mxu0 %v5474
    %5639 = vmatpush1.bf16.msra.mxu0 %v5473
    %5640 = vmatprep.subr.bf16.mxu0 %v5478
    %5641 = vmatpush1.bf16.msra.mxu0 %v5477
    %5642 = vmatprep.subr.bf16.mxu0 %v5482
    %5643 = vmatpush1.bf16.msra.mxu0 %v5481
    %5644 = vmatprep.subr.bf16.mxu0 %v5486
    %5645 = vmatpush1.bf16.msra.mxu0 %v5485
    %5646 = vmatprep.subr.bf16.mxu0 %v5490
    %5647 = vmatpush1.bf16.msra.mxu0 %v5489
    %5648 = vmatprep.subr.bf16.mxu0 %v5494
    %5649 = vmatpush1.bf16.msra.mxu0 %v5493
    %5650 = vmatprep.subr.bf16.mxu0 %v5498
    %5651 = vmatpush1.bf16.msra.mxu0 %v5497
    %5652 = vmatprep.subr.bf16.mxu0 %v5502
    %5653 = vmatpush1.bf16.msra.mxu0 %v5501
    %5654 = vmatprep.subr.bf16.mxu0 %v5506
    %5655 = vmatpush1.bf16.msra.mxu0 %v5505
    %5656 = vmatprep.subr.bf16.mxu0 %v5510
    %5657 = vmatpush1.bf16.msra.mxu0 %v5509
    %5658 = vmatprep.subr.bf16.mxu0 %v5514
    %5659 = vmatpush1.bf16.msra.mxu0 %v5513
    %5660 = vmatprep.subr.bf16.mxu0 %v5518
    %5661 = vmatpush1.bf16.msra.mxu0 %v5517
    %5662 = vmatprep.subr.bf16.mxu0 %v5522
    %5663 = vmatpush1.bf16.msra.mxu0 %v5521
    %5664 = vmatprep.subr.bf16.mxu0 %v5526
    %5665 = vmatpush1.bf16.msra.mxu0 %v5525
    %5666 = vmatprep.subr.bf16.mxu0 %v5530
    %5667 = vmatpush1.bf16.msra.mxu0 %v5529
    %5668 = vmatprep.mubr.bf16.mxu0 %v5188
    %5669 = vmatmul.mubr.bf16.gmra.mrb[0].mxu0 %v5187
    %v5670 = vpop.f32.mrb[0].mxu0
    %v5671 = vadd.f32 %v5266, %v5670
    %v5672 = vpop.f32.mrb[0].mxu0
    %v5673 = vadd.f32 %v5270, %v5672
    %v5674 = vpop.f32.mrb[0].mxu0
    %v5675 = vpop.f32.mrb[0].mxu0
    %5676 = vdwg.mxu0
    %v5677 = vmax.f32 %v5630, 0.0
    %v5678 = vmax.f32 %v5632, 0.0
    %v5679 = vmax.f32 %v5671, 0.0
    %v5680 = vmax.f32 %v5673, 0.0
    %v5681 = vpack.c.bf16 %v5677, %v5677
    %v5682 = vpack.c.bf16 %v5678, %v5678
    %v5683 = vpack.c.bf16 %v5679, %v5679
    %v5684 = vpack.c.bf16 %v5680, %v5680
    %v5685 = vld [vmem:[#allocation18] sm:$0xf]
    %v5686 = vld [vmem:[#allocation18 + $0x4] sm:$0xf]
    %v5687 = vld [vmem:[#allocation18 + $0x8] sm:$0xf]
    %v5688 = vld [vmem:[#allocation18 + $0xc] sm:$0xf]
    %v5689 = vld [vmem:[#allocation18 + $0x10] sm:$0xf]
    %v5690 = vld [vmem:[#allocation18 + $0x14] sm:$0xf]
    %v5691 = vld [vmem:[#allocation18 + $0x18] sm:$0xf]
    %v5692 = vld [vmem:[#allocation18 + $0x1c] sm:$0xf]
    %v5693 = vld [vmem:[#allocation18 + $0x20] sm:$0xf]
    %v5694 = vld [vmem:[#allocation18 + $0x24] sm:$0xf]
    %v5695 = vld [vmem:[#allocation18 + $0x28] sm:$0xf]
    %v5696 = vld [vmem:[#allocation18 + $0x2c] sm:$0xf]
    %v5697 = vld [vmem:[#allocation18 + $0x30] sm:$0xf]
    %v5698 = vld [vmem:[#allocation18 + $0x34] sm:$0xf]
    %v5699 = vld [vmem:[#allocation18 + $0x38] sm:$0xf]
    %v5700 = vld [vmem:[#allocation18 + $0x3c] sm:$0xf]
    %v5701 = vld [vmem:[#allocation18 + $0x40] sm:$0xf]
    %v5702 = vld [vmem:[#allocation18 + $0x44] sm:$0xf]
    %v5703 = vld [vmem:[#allocation18 + $0x48] sm:$0xf]
    %v5704 = vld [vmem:[#allocation18 + $0x4c] sm:$0xf]
    %v5705 = vld [vmem:[#allocation18 + $0x50] sm:$0xf]
    %v5706 = vld [vmem:[#allocation18 + $0x54] sm:$0xf]
    %v5707 = vld [vmem:[#allocation18 + $0x58] sm:$0xf]
    %v5708 = vld [vmem:[#allocation18 + $0x5c] sm:$0xf]
    %v5709 = vld [vmem:[#allocation18 + $0x60] sm:$0xf]
    %v5710 = vld [vmem:[#allocation18 + $0x64] sm:$0xf]
    %v5711 = vld [vmem:[#allocation18 + $0x68] sm:$0xf]
    %v5712 = vld [vmem:[#allocation18 + $0x6c] sm:$0xf]
    %v5713 = vld [vmem:[#allocation18 + $0x70] sm:$0xf]
    %v5714 = vld [vmem:[#allocation18 + $0x74] sm:$0xf]
    %v5715 = vld [vmem:[#allocation18 + $0x78] sm:$0xf]
    %v5716 = vld [vmem:[#allocation18 + $0x7c] sm:$0xf]
    %v5717 = vld [vmem:[#allocation18 + $0x80] sm:$0xf]
    %v5718 = vld [vmem:[#allocation18 + $0x84] sm:$0xf]
    %v5719 = vld [vmem:[#allocation18 + $0x88] sm:$0xf]
    %v5720 = vld [vmem:[#allocation18 + $0x8c] sm:$0xf]
    %v5721 = vld [vmem:[#allocation18 + $0x90] sm:$0xf]
    %v5722 = vld [vmem:[#allocation18 + $0x94] sm:$0xf]
    %v5723 = vld [vmem:[#allocation18 + $0x98] sm:$0xf]
    %v5724 = vld [vmem:[#allocation18 + $0x9c] sm:$0xf]
    %v5725 = vld [vmem:[#allocation18 + $0xa0] sm:$0xf]
    %v5726 = vld [vmem:[#allocation18 + $0xa4] sm:$0xf]
    %v5727 = vld [vmem:[#allocation18 + $0xa8] sm:$0xf]
    %v5728 = vld [vmem:[#allocation18 + $0xac] sm:$0xf]
    %v5729 = vld [vmem:[#allocation18 + $0xb0] sm:$0xf]
    %v5730 = vld [vmem:[#allocation18 + $0xb4] sm:$0xf]
    %v5731 = vld [vmem:[#allocation18 + $0xb8] sm:$0xf]
    %v5732 = vld [vmem:[#allocation18 + $0xbc] sm:$0xf]
    %v5733 = vld [vmem:[#allocation18 + $0xc0] sm:$0xf]
    %v5734 = vld [vmem:[#allocation18 + $0xc4] sm:$0xf]
    %v5735 = vld [vmem:[#allocation18 + $0xc8] sm:$0xf]
    %v5736 = vld [vmem:[#allocation18 + $0xcc] sm:$0xf]
    %v5737 = vld [vmem:[#allocation18 + $0xd0] sm:$0xf]
    %v5738 = vld [vmem:[#allocation18 + $0xd4] sm:$0xf]
    %v5739 = vld [vmem:[#allocation18 + $0xd8] sm:$0xf]
    %v5740 = vld [vmem:[#allocation18 + $0xdc] sm:$0xf]
    %v5741 = vld [vmem:[#allocation18 + $0xe0] sm:$0xf]
    %v5742 = vld [vmem:[#allocation18 + $0xe4] sm:$0xf]
    %v5743 = vld [vmem:[#allocation18 + $0xe8] sm:$0xf]
    %v5744 = vld [vmem:[#allocation18 + $0xec] sm:$0xf]
    %v5745 = vld [vmem:[#allocation18 + $0xf0] sm:$0xf]
    %v5746 = vld [vmem:[#allocation18 + $0xf4] sm:$0xf]
    %v5747 = vld [vmem:[#allocation18 + $0xf8] sm:$0xf]
    %v5748 = vld [vmem:[#allocation18 + $0xfc] sm:$0xf]
    %v5749 = vld [vmem:[#allocation19] sm:$0x1]
    %v5751 = vlaneseq
    %v5752 = vshrl.u32 %v5751, 7
    %v5753 = vsub.s32 0, %v5752
    %v5754 = vrot.slane %v5749, %v5753
    %v5820 = vunpack.c.l.b16 %v5685
    %v5821 = vunpack.c.l.b16 %v5686
    %v5822 = vunpack.c.l.b16 %v5687
    %v5823 = vunpack.c.l.b16 %v5688
    %v5824 = vunpack.c.l.b16 %v5689
    %v5825 = vunpack.c.l.b16 %v5690
    %v5826 = vunpack.c.l.b16 %v5691
    %v5827 = vunpack.c.l.b16 %v5692
    %v5828 = vunpack.c.l.b16 %v5693
    %v5829 = vunpack.c.l.b16 %v5694
    %v5830 = vunpack.c.l.b16 %v5695
    %v5831 = vunpack.c.l.b16 %v5696
    %v5832 = vunpack.c.l.b16 %v5697
    %v5833 = vunpack.c.l.b16 %v5698
    %v5834 = vunpack.c.l.b16 %v5699
    %v5835 = vunpack.c.l.b16 %v5700
    %v5836 = vunpack.c.l.b16 %v5701
    %v5837 = vunpack.c.l.b16 %v5702
    %v5838 = vunpack.c.l.b16 %v5703
    %v5839 = vunpack.c.l.b16 %v5704
    %v5840 = vunpack.c.l.b16 %v5705
    %v5841 = vunpack.c.l.b16 %v5706
    %v5842 = vunpack.c.l.b16 %v5707
    %v5843 = vunpack.c.l.b16 %v5708
    %v5844 = vunpack.c.l.b16 %v5709
    %v5845 = vunpack.c.l.b16 %v5710
    %v5846 = vunpack.c.l.b16 %v5711
    %v5847 = vunpack.c.l.b16 %v5712
    %v5848 = vunpack.c.l.b16 %v5713
    %v5849 = vunpack.c.l.b16 %v5714
    %v5850 = vunpack.c.l.b16 %v5715
    %v5851 = vunpack.c.l.b16 %v5716
    %v5852 = vunpack.c.l.b16 %v5717
    %v5853 = vunpack.c.l.b16 %v5718
    %v5854 = vunpack.c.l.b16 %v5719
    %v5855 = vunpack.c.l.b16 %v5720
    %v5856 = vunpack.c.l.b16 %v5721
    %v5857 = vunpack.c.l.b16 %v5722
    %v5858 = vunpack.c.l.b16 %v5723
    %v5859 = vunpack.c.l.b16 %v5724
    %v5860 = vunpack.c.l.b16 %v5725
    %v5861 = vunpack.c.l.b16 %v5726
    %v5862 = vunpack.c.l.b16 %v5727
    %v5863 = vunpack.c.l.b16 %v5728
    %v5864 = vunpack.c.l.b16 %v5729
    %v5865 = vunpack.c.l.b16 %v5730
    %v5866 = vunpack.c.l.b16 %v5731
    %v5867 = vunpack.c.l.b16 %v5732
    %v5868 = vunpack.c.l.b16 %v5733
    %v5869 = vunpack.c.l.b16 %v5734
    %v5870 = vunpack.c.l.b16 %v5735
    %v5871 = vunpack.c.l.b16 %v5736
    %v5872 = vunpack.c.l.b16 %v5737
    %v5873 = vunpack.c.l.b16 %v5738
    %v5874 = vunpack.c.l.b16 %v5739
    %v5875 = vunpack.c.l.b16 %v5740
    %v5876 = vunpack.c.l.b16 %v5741
    %v5877 = vunpack.c.l.b16 %v5742
    %v5878 = vunpack.c.l.b16 %v5743
    %v5879 = vunpack.c.l.b16 %v5744
    %v5880 = vunpack.c.l.b16 %v5745
    %v5881 = vunpack.c.l.b16 %v5746
    %v5882 = vunpack.c.l.b16 %v5747
    %v5883 = vunpack.c.l.b16 %v5748
    %v5884 = vpack.c.b16 %v5821, %v5820
    %v5885 = vpack.c.b16 %v5823, %v5822
    %v5886 = vpack.c.b16 %v5825, %v5824
    %v5887 = vpack.c.b16 %v5827, %v5826
    %v5888 = vpack.c.b16 %v5829, %v5828
    %v5889 = vpack.c.b16 %v5831, %v5830
    %v5890 = vpack.c.b16 %v5833, %v5832
    %v5891 = vpack.c.b16 %v5835, %v5834
    %v5892 = vpack.c.b16 %v5837, %v5836
    %v5893 = vpack.c.b16 %v5839, %v5838
    %v5894 = vpack.c.b16 %v5841, %v5840
    %v5895 = vpack.c.b16 %v5843, %v5842
    %v5896 = vpack.c.b16 %v5845, %v5844
    %v5897 = vpack.c.b16 %v5847, %v5846
    %v5898 = vpack.c.b16 %v5849, %v5848
    %v5899 = vpack.c.b16 %v5851, %v5850
    %v5900 = vpack.c.b16 %v5853, %v5852
    %v5901 = vpack.c.b16 %v5855, %v5854
    %v5902 = vpack.c.b16 %v5857, %v5856
    %v5903 = vpack.c.b16 %v5859, %v5858
    %v5904 = vpack.c.b16 %v5861, %v5860
    %v5905 = vpack.c.b16 %v5863, %v5862
    %v5906 = vpack.c.b16 %v5865, %v5864
    %v5907 = vpack.c.b16 %v5867, %v5866
    %v5908 = vpack.c.b16 %v5869, %v5868
    %v5909 = vpack.c.b16 %v5871, %v5870
    %v5910 = vpack.c.b16 %v5873, %v5872
    %v5911 = vpack.c.b16 %v5875, %v5874
    %v5912 = vpack.c.b16 %v5877, %v5876
    %v5913 = vpack.c.b16 %v5879, %v5878
    %v5914 = vpack.c.b16 %v5881, %v5880
    %v5915 = vpack.c.b16 %v5883, %v5882
    %5948 = vmatprep.subr.bf16.mxu0 0
    %5949 = vmatpush1.bf16.msra.mxu0 %v5884
    %5950 = vmatprep.subr.bf16.mxu0 0
    %5951 = vmatpush1.bf16.msra.mxu0 %v5885
    %5952 = vmatprep.subr.bf16.mxu0 0
    %5953 = vmatpush1.bf16.msra.mxu0 %v5886
    %5954 = vmatprep.subr.bf16.mxu0 0
    %5955 = vmatpush1.bf16.msra.mxu0 %v5887
    %5956 = vmatprep.subr.bf16.mxu0 0
    %5957 = vmatpush1.bf16.msra.mxu0 %v5888
    %5958 = vmatprep.subr.bf16.mxu0 0
    %5959 = vmatpush1.bf16.msra.mxu0 %v5889
    %5960 = vmatprep.subr.bf16.mxu0 0
    %5961 = vmatpush1.bf16.msra.mxu0 %v5890
    %5962 = vmatprep.subr.bf16.mxu0 0
    %5963 = vmatpush1.bf16.msra.mxu0 %v5891
    %5964 = vmatprep.subr.bf16.mxu0 0
    %5965 = vmatpush1.bf16.msra.mxu0 %v5892
    %5966 = vmatprep.subr.bf16.mxu0 0
    %5967 = vmatpush1.bf16.msra.mxu0 %v5893
    %5968 = vmatprep.subr.bf16.mxu0 0
    %5969 = vmatpush1.bf16.msra.mxu0 %v5894
    %5970 = vmatprep.subr.bf16.mxu0 0
    %5971 = vmatpush1.bf16.msra.mxu0 %v5895
    %5972 = vmatprep.subr.bf16.mxu0 0
    %5973 = vmatpush1.bf16.msra.mxu0 %v5896
    %5974 = vmatprep.subr.bf16.mxu0 0
    %5975 = vmatpush1.bf16.msra.mxu0 %v5897
    %5976 = vmatprep.subr.bf16.mxu0 0
    %5977 = vmatpush1.bf16.msra.mxu0 %v5898
    %5978 = vmatprep.subr.bf16.mxu0 0
    %5979 = vmatpush1.bf16.msra.mxu0 %v5899
    %5980 = vmatprep.mubr.bf16.mxu0 %v5682
    %5981 = vmatmul.mubr.bf16.gmra.mrb[0].mxu0 %v5681
    %v5982 = vpop.f32.mrb[0].mxu0
    %v5983 = vadd.f32 %v5754, %v5982
    %v5984 = vpop.f32.mrb[0].mxu0
    %v5985 = vpop.f32.mrb[0].mxu0
    %v5986 = vpop.f32.mrb[0].mxu0
    %5987 = vdwg.mxu0
    %5988 = vmatprep.subr.bf16.mxu0 0
    %5989 = vmatpush1.bf16.msra.mxu0 %v5900
    %5990 = vmatprep.subr.bf16.mxu0 0
    %5991 = vmatpush1.bf16.msra.mxu0 %v5901
    %5992 = vmatprep.subr.bf16.mxu0 0
    %5993 = vmatpush1.bf16.msra.mxu0 %v5902
    %5994 = vmatprep.subr.bf16.mxu0 0
    %5995 = vmatpush1.bf16.msra.mxu0 %v5903
    %5996 = vmatprep.subr.bf16.mxu0 0
    %5997 = vmatpush1.bf16.msra.mxu0 %v5904
    %5998 = vmatprep.subr.bf16.mxu0 0
    %5999 = vmatpush1.bf16.msra.mxu0 %v5905
    %6000 = vmatprep.subr.bf16.mxu0 0
    %6001 = vmatpush1.bf16.msra.mxu0 %v5906
    %6002 = vmatprep.subr.bf16.mxu0 0
    %6003 = vmatpush1.bf16.msra.mxu0 %v5907
    %6004 = vmatprep.subr.bf16.mxu0 0
    %6005 = vmatpush1.bf16.msra.mxu0 %v5908
    %6006 = vmatprep.subr.bf16.mxu0 0
    %6007 = vmatpush1.bf16.msra.mxu0 %v5909
    %6008 = vmatprep.subr.bf16.mxu0 0
    %6009 = vmatpush1.bf16.msra.mxu0 %v5910
    %6010 = vmatprep.subr.bf16.mxu0 0
    %6011 = vmatpush1.bf16.msra.mxu0 %v5911
    %6012 = vmatprep.subr.bf16.mxu0 0
    %6013 = vmatpush1.bf16.msra.mxu0 %v5912
    %6014 = vmatprep.subr.bf16.mxu0 0
    %6015 = vmatpush1.bf16.msra.mxu0 %v5913
    %6016 = vmatprep.subr.bf16.mxu0 0
    %6017 = vmatpush1.bf16.msra.mxu0 %v5914
    %6018 = vmatprep.subr.bf16.mxu0 0
    %6019 = vmatpush1.bf16.msra.mxu0 %v5915
    %6020 = vmatprep.mubr.bf16.mxu0 %v5684
    %6021 = vmatmul.mubr.bf16.gmra.mrb[0].mxu0 %v5683
    %v6022 = vpop.f32.mrb[0].mxu0
    %v6023 = vadd.f32 %v5983, %v6022
    %v6024 = vpop.f32.mrb[0].mxu0
    %v6025 = vpop.f32.mrb[0].mxu0
    %v6026 = vpop.f32.mrb[0].mxu0
    %6027 = vdwg.mxu0
    %6028 = vst [vmem:[#allocation21] sm:$0x3] %v6023
    // Predicated region
    $region86: #{vgg_forward.1} parent=1 // pred_check
      _
    $region87: #{vgg_forward.1} parent=1 // pred_check_branch
      %6030 = sbr.rel (0) target = $region89
    $region88: #{vgg_forward.1} parent=1 // pred_region
      %s6032 = ssub.s32 32, 32
      %6033 = vsyncadd [#allocation6], %s6032
      %s6035 = sshll.u32 [#allocation21], 4
      %s6036 = int_to_ptr.vmem [resolvable:$true] %s6035
      %6038 = dma.vmem_to_hbm [thread:$0]  %s6036, 32, %s11, [#allocation6]
    $region89: #{vgg_forward.1} parent=1 // pred_fallthru
      _
    // Predicated region
    $region90: #{vgg_forward.1} parent=1 // pred_check
      _
    $region91: #{vgg_forward.1} parent=1 // pred_check_branch
      %6040 = sbr.rel (0) target = $region93
    $region92: #{vgg_forward.1} parent=1 // pred_region
      %6041 = dma.done [#allocation6], 32
    $region93: #{vgg_forward.1} parent=1 // pred_fallthru
      _
    %6042 = vsyncpa [#allocation5], 1
    %6043 = vsyncpa [#allocation8], 1
    %6044 = vsyncpa [#allocation11], 1
    %6045 = vsyncpa [#allocation14], 1
    %6046 = vsyncpa [#allocation17], 1
    %6047 = vsyncpa [#allocation20], 1
    %6048 = vsyncpa [#allocation6], 1

</llo_original>
